<compile_context>
chip_gen: v6e
topology: v6e:2x2x1
jax: 0.10.0
libtpu: 0.0.40
codegen_flags: <defaults>
</compile_context>

<pallas_src>
import functools

import jax
import jax.numpy as jnp
import numpy as np
from jax.experimental import pallas as pl
from jax.experimental.pallas import tpu as pltpu


def _round_up(x, m):
    return (x + m - 1) // m * m


# --------------------------------------------------------------------------
# Pallas kernel: multi-tap (dilated) conv as a sum of per-tap MXU matmuls.
# Taps are built in-kernel from shifted lane slices of the flattened image
# (no im2col patch tensor in HBM).  Several "groups" (the 4 polyphase
# sub-filters of the ConvTranspose2d) share one input read and write disjoint
# Cout-row blocks of the lane-dense (G*Cout, P) output.
# --------------------------------------------------------------------------
def _tap_conv_kernel(x_ref, w_ref, b_ref, o_ref, *, groups, p_out, relu):
    # x_ref: (1, Cin, Pin)  bf16   flattened image, fixed row stride
    # w_ref: (T, Cout, Cin) bf16   per-tap weight matrices
    # b_ref: (Cout, 1)      f32
    # o_ref: (1, G*Cout, p_out)
    cout = w_ref.shape[1]
    x = x_ref[0]                      # single full-block load, (Cin, Pin)
    bias = b_ref[...]                 # (Cout, 1)
    for g, taps in enumerate(groups):
        acc = None
        for t, off in taps:           # static Python unroll (9 or 25 taps)
            contrib = jnp.dot(w_ref[t], x[:, off:off + p_out],
                              preferred_element_type=jnp.float32)
            acc = contrib if acc is None else acc + contrib
        acc = acc + bias
        if relu:
            acc = jnp.maximum(acc, 0.0)
        o_ref[0, g * cout:(g + 1) * cout, :] = acc.astype(o_ref.dtype)


def _tap_conv(x_flat, w_taps, bias, *, groups, p_out, pin_needed, relu,
              out_dtype):
    """out[n, g*Cout+co, p] = act(sum_{(t,off) in groups[g]} w[t,co,:] @ x[n,:,p+off] + b[co])."""
    N, cin, pin_cur = (int(s) for s in x_flat.shape)
    T, cout, _ = (int(s) for s in w_taps.shape)
    G = len(groups)

    x_flat = x_flat.astype(jnp.bfloat16)
    w_taps = w_taps.astype(jnp.bfloat16)

    # Pad the (tiny) flattened input so every in-kernel tap slice stays in
    # bounds, and round the channel (sublane) dim to a multiple of 8.
    pin_alloc = _round_up(max(pin_needed, pin_cur), 128)
    cin_alloc = _round_up(cin, 8)
    if pin_alloc != pin_cur or cin_alloc != cin:
        x_flat = jnp.pad(x_flat, ((0, 0), (0, cin_alloc - cin),
                                  (0, pin_alloc - pin_cur)))
    if cin_alloc != cin:
        w_taps = jnp.pad(w_taps, ((0, 0), (0, 0), (0, cin_alloc - cin)))

    kern = functools.partial(_tap_conv_kernel, groups=groups, p_out=p_out,
                             relu=relu)
    return pl.pallas_call(
        kern,
        out_shape=jax.ShapeDtypeStruct((N, G * cout, p_out), out_dtype),
        grid=(N,),
        in_specs=[
            pl.BlockSpec((1, cin_alloc, pin_alloc), lambda n: (n, 0, 0)),
            pl.BlockSpec((T, cout, cin_alloc), lambda n: (0, 0, 0)),
            pl.BlockSpec((cout, 1), lambda n: (0, 0)),
        ],
        out_specs=pl.BlockSpec((1, G * cout, p_out), lambda n: (n, 0, 0)),
        compiler_params=pltpu.CompilerParams(
            dimension_semantics=("parallel",),
            vmem_limit_bytes=32 * 1024 * 1024),
    )(x_flat, w_taps, bias.reshape(cout, 1).astype(jnp.float32))


# --------------------------------------------------------------------------
# Forward pass (all heavy math inside the Pallas kernels; wrapper = tiny glue)
# --------------------------------------------------------------------------
def decoder_block_forward(x, p):
    N, cin, H, W = (int(s) for s in x.shape)
    mid = int(p["w1"].shape[0])
    cout = int(p["wt"].shape[1])

    # ---- Conv2d(3x3, valid) + BN(folded) + ReLU : flat layout, row stride W
    # Outputs are computed over full-width rows; columns >= Wo of each row are
    # junk that only ever feeds junk columns downstream, never valid results,
    # so conv1 -> conv2 chain with no relayout at all.
    ho1, ho2 = H - 2, H - 4
    max_off = 2 * W + 2                                   # (K-1)*(W+1), K=3
    taps3x3 = tuple((ky * 3 + kx, ky * W + kx)
                    for ky in range(3) for kx in range(3))

    p1 = _round_up(ho1 * W, 128)
    w1_taps = p["w1"].transpose(2, 3, 0, 1).reshape(9, mid, cin)
    y1 = _tap_conv(x.reshape(N, cin, H * W), w1_taps, p["b1"],
                   groups=(taps3x3,), p_out=p1, pin_needed=p1 + max_off,
                   relu=True, out_dtype=jnp.bfloat16)

    p2 = ho2 * W
    w2_taps = p["w2"].transpose(2, 3, 0, 1).reshape(9, mid, mid)
    y2 = _tap_conv(y1, w2_taps, p["b2"],
                   groups=(taps3x3,), p_out=p2, pin_needed=p2 + max_off,
                   relu=True, out_dtype=jnp.bfloat16)
    # y2: (N, mid, ho2*W); valid block = rows < ho2, cols < W-4 (stride W).

    # ---- ConvTranspose2d(k=5, stride=2, output_padding=1, dilation=3) ------
    # Polyphase: output parity (py, px) selects a sub-filter of the 5x5 kernel
    # applied as a stride-1 dilated VALID conv on the zero-haloed input.
    K, S, D = 5, 2, 3
    hi, wi = ho2, W - 4
    ho = (hi - 1) * S + D * (K - 1) + 1 + 1
    wo = (wi - 1) * S + D * (K - 1) + 1 + 1
    hph, wph = ho // S, wo // S                     # per-phase output size
    L = (D * (K - 1) + S - 1) // S                  # real-zero halo = 6
    hpad, wpad = hi + 2 * L, wi + 2 * L

    # Tiny XLA glue: extract the valid (hi, wi) block and add the zero halo.
    y2_img = y2.reshape(N, mid, ho2, W)[:, :, :hi, :wi]
    x3 = jnp.pad(y2_img, ((0, 0), (0, 0), (L, L), (L, L)))
    x3 = x3.reshape(N, mid, hpad * wpad)

    def phase_taps(ph):
        # 1-D taps of the stride-S polyphase sub-filter for output parity ph:
        # (kernel index k, base offset into the L-padded axis).
        return tuple((k, L + (ph - k * D) // S)
                     for k in range(K) if (ph - k * D) % S == 0)

    wt_mats = p["wt"].transpose(2, 3, 1, 0)          # (K, K, Cout, Cin=mid)
    w_list, groups3, t = [], [], 0
    for py in (0, 1):
        for px in (0, 1):
            g = []
            for ky, oy in phase_taps(py):
                for kx, ox in phase_taps(px):
                    w_list.append(wt_mats[ky, kx])
                    g.append((t, oy * wpad + ox))
                    t += 1
            groups3.append(tuple(g))
    w3_taps = jnp.stack(w_list, axis=0)              # (25, Cout, mid)

    p3 = hph * wpad
    out3 = _tap_conv(x3, w3_taps, p["bt"],
                     groups=tuple(groups3), p_out=p3,
                     pin_needed=p3 + L * wpad + L,
                     relu=False, out_dtype=jnp.float32)

    # Interleave the 4 phases back onto the (ho, wo) grid (final, small).
    ph_out = out3.reshape(N, 2, 2, cout, hph, wpad)[..., :wph]
    return ph_out.transpose(0, 3, 4, 1, 5, 2).reshape(N, cout, ho, wo)


# --------------------------------------------------------------------------
# Parameters (deterministic); BatchNorm folded in eval mode
# --------------------------------------------------------------------------
def _uniform(key, shape, bound):
    return jax.random.uniform(key, shape, jnp.float32, -bound, bound)


def _fold_bn(w, b, gamma, beta, mean, var, eps=1e-5):
    scale = gamma / jnp.sqrt(var + eps)
    return w * scale[:, None, None, None], (b - mean) * scale + beta


def build_params(in_ch, mid_ch, out_ch, seed=1234):
    keys = jax.random.split(jax.random.PRNGKey(seed), 8)

    def conv_init(kw, kb, cout, cin, k):
        bound = 1.0 / np.sqrt(cin * k * k)
        return _uniform(kw, (cout, cin, k, k), bound), _uniform(kb, (cout,), bound)

    def bn_init(k, c):
        kg, kb2, km, kv = jax.random.split(k, 4)
        return (jax.random.uniform(kg, (c,), jnp.float32, 0.5, 1.5),
                jax.random.uniform(kb2, (c,), jnp.float32, -0.2, 0.2),
                jax.random.uniform(km, (c,), jnp.float32, -0.2, 0.2),
                jax.random.uniform(kv, (c,), jnp.float32, 0.5, 1.5))

    w1, b1 = conv_init(keys[0], keys[1], mid_ch, in_ch, 3)
    w1, b1 = _fold_bn(w1, b1, *bn_init(keys[2], mid_ch))
    w2, b2 = conv_init(keys[3], keys[4], mid_ch, mid_ch, 3)
    w2, b2 = _fold_bn(w2, b2, *bn_init(keys[5], mid_ch))
    # ConvTranspose2d weight layout: (in_channels, out_channels, K, K)
    bound = 1.0 / np.sqrt(mid_ch * 5 * 5)
    wt = _uniform(keys[6], (mid_ch, out_ch, 5, 5), bound)
    bt = _uniform(keys[7], (out_ch,), bound)
    # NOTE: only jnp arrays here (no Python ints/bools) -> safe under jit.
    return dict(w1=w1, b1=b1, w2=w2, b2=b2, wt=wt, bt=bt)


# Pure-JAX f32 reference for a loose numerical check against the bf16 kernels.
def reference_forward(x, p):
    def conv(v, w, b):
        y = jax.lax.conv_general_dilated(
            v, w, window_strides=(1, 1), padding="VALID",
            dimension_numbers=("NCHW", "OIHW", "NCHW"))
        return y + b[None, :, None, None]

    y = jax.nn.relu(conv(x, p["w1"], p["b1"]))
    y = jax.nn.relu(conv(y, p["w2"], p["b2"]))
    wt = p["wt"]
    K = int(wt.shape[2])
    w_conv = jnp.flip(wt, axis=(2, 3)).transpose(1, 0, 2, 3)
    pad = 3 * (K - 1)
    y = jax.lax.conv_general_dilated(
        y, w_conv, window_strides=(1, 1),
        padding=((pad, pad + 1), (pad, pad + 1)),
        lhs_dilation=(2, 2), rhs_dilation=(3, 3),
        dimension_numbers=("NCHW", "OIHW", "NCHW"))
    return y + p["bt"][None, :, None, None]


# --------------------------------------------------------------------------
if __name__ == "__main__":
    N, in_ch, H, W = 2, 4, 16, 16
    mid_ch, out_ch = 32, 8

    x = jax.random.normal(jax.random.PRNGKey(0), (N, in_ch, H, W), jnp.float32)
    params = build_params(in_ch, mid_ch, out_ch)

    fwd = jax.jit(decoder_block_forward)
    out = jax.block_until_ready(fwd(x, params))

    H2 = H - 4                                          # after two valid 3x3 convs
    Ho = (H2 - 1) * 2 + 3 * (5 - 1) + 1 + 1             # ConvTranspose2d output size
    assert out.shape == (N, out_ch, Ho, Ho), out.shape
    assert bool(jnp.all(jnp.isfinite(out)))

    ref = reference_forward(x, params)
    err = float(jnp.max(jnp.abs(out - ref)) / (jnp.max(jnp.abs(ref)) + 1e-6))
    assert err < 5e-2, err

    print("KERNEL_OK")
</pallas_src>

<mosaic_0001>
module attributes {stable_mosaic.version = 11 : i64} {
  func.func @_tap_conv_kernel(%arg0: i32, %arg1: memref<1x8x384xbf16, #tpu.memory_space<vmem>>, %arg2: memref<9x32x8xbf16, #tpu.memory_space<vmem>>, %arg3: memref<32x1xf32, #tpu.memory_space<vmem>>, %arg4: memref<1x32x256xbf16, #tpu.memory_space<vmem>>) attributes {dimension_semantics = [#tpu.dimension_semantics<parallel>], iteration_bounds = array<i64: 2>, scalar_prefetch = 0 : i64, scratch_operands = 0 : i64, tpu.core_type = #tpu.core_type<tc>, window_params = [{transform_indices = @transform_0, window_bounds = array<i64: 1, 8, 384>}, {pipeline_mode = #tpu.pipeline_mode<synchronous>, transform_indices = @transform_1, window_bounds = array<i64: 9, 32, 8>}, {pipeline_mode = #tpu.pipeline_mode<synchronous>, transform_indices = @transform_2, window_bounds = array<i64: 32, 1>}, {transform_indices = @transform_3, window_bounds = array<i64: 1, 32, 256>}]} {
    %c0 = arith.constant 0 : index
    %c0_0 = arith.constant 0 : index
    %c0_1 = arith.constant 0 : index
    %0 = vector.load %arg1[%c0, %c0_0, %c0_1] : memref<1x8x384xbf16, #tpu.memory_space<vmem>>, vector<1x8x384xbf16>
    %1 = vector.shape_cast %0 : vector<1x8x384xbf16> to vector<8x384xbf16>
    %c0_2 = arith.constant 0 : index
    %c0_3 = arith.constant 0 : index
    %2 = vector.load %arg3[%c0_2, %c0_3] : memref<32x1xf32, #tpu.memory_space<vmem>>, vector<32x1xf32>
    %c0_4 = arith.constant 0 : index
    %c0_5 = arith.constant 0 : index
    %c0_6 = arith.constant 0 : index
    %3 = vector.load %arg2[%c0_4, %c0_5, %c0_6] : memref<9x32x8xbf16, #tpu.memory_space<vmem>>, vector<1x32x8xbf16>
    %4 = vector.shape_cast %3 : vector<1x32x8xbf16> to vector<32x8xbf16>
    %5 = vector.extract_strided_slice %1 {offsets = [0, 0], sizes = [8, 256], strides = [1, 1]} : vector<8x384xbf16> to vector<8x256xbf16>
    %cst = arith.constant dense<0.000000e+00> : vector<32x256xf32>
    %6 = tpu.matmul %4, %5, %cst {dimension_numbers = #tpu.dot_dimension_numbers<[1], [0], [0], [1], [0, 0, 1, 1], [], []>} : vector<32x8xbf16>, vector<8x256xbf16>, vector<32x256xf32> -> vector<32x256xf32>
    %c1 = arith.constant 1 : index
    %c0_7 = arith.constant 0 : index
    %c0_8 = arith.constant 0 : index
    %7 = vector.load %arg2[%c1, %c0_7, %c0_8] : memref<9x32x8xbf16, #tpu.memory_space<vmem>>, vector<1x32x8xbf16>
    %8 = vector.shape_cast %7 : vector<1x32x8xbf16> to vector<32x8xbf16>
    %9 = vector.extract_strided_slice %1 {offsets = [0, 1], sizes = [8, 256], strides = [1, 1]} : vector<8x384xbf16> to vector<8x256xbf16>
    %cst_9 = arith.constant dense<0.000000e+00> : vector<32x256xf32>
    %10 = tpu.matmul %8, %9, %cst_9 {dimension_numbers = #tpu.dot_dimension_numbers<[1], [0], [0], [1], [0, 0, 1, 1], [], []>} : vector<32x8xbf16>, vector<8x256xbf16>, vector<32x256xf32> -> vector<32x256xf32>
    %11 = arith.addf %6, %10 : vector<32x256xf32>
    %c2 = arith.constant 2 : index
    %c0_10 = arith.constant 0 : index
    %c0_11 = arith.constant 0 : index
    %12 = vector.load %arg2[%c2, %c0_10, %c0_11] : memref<9x32x8xbf16, #tpu.memory_space<vmem>>, vector<1x32x8xbf16>
    %13 = vector.shape_cast %12 : vector<1x32x8xbf16> to vector<32x8xbf16>
    %14 = vector.extract_strided_slice %1 {offsets = [0, 2], sizes = [8, 256], strides = [1, 1]} : vector<8x384xbf16> to vector<8x256xbf16>
    %cst_12 = arith.constant dense<0.000000e+00> : vector<32x256xf32>
    %15 = tpu.matmul %13, %14, %cst_12 {dimension_numbers = #tpu.dot_dimension_numbers<[1], [0], [0], [1], [0, 0, 1, 1], [], []>} : vector<32x8xbf16>, vector<8x256xbf16>, vector<32x256xf32> -> vector<32x256xf32>
    %16 = arith.addf %11, %15 : vector<32x256xf32>
    %c3 = arith.constant 3 : index
    %c0_13 = arith.constant 0 : index
    %c0_14 = arith.constant 0 : index
    %17 = vector.load %arg2[%c3, %c0_13, %c0_14] : memref<9x32x8xbf16, #tpu.memory_space<vmem>>, vector<1x32x8xbf16>
    %18 = vector.shape_cast %17 : vector<1x32x8xbf16> to vector<32x8xbf16>
    %19 = vector.extract_strided_slice %1 {offsets = [0, 16], sizes = [8, 256], strides = [1, 1]} : vector<8x384xbf16> to vector<8x256xbf16>
    %cst_15 = arith.constant dense<0.000000e+00> : vector<32x256xf32>
    %20 = tpu.matmul %18, %19, %cst_15 {dimension_numbers = #tpu.dot_dimension_numbers<[1], [0], [0], [1], [0, 0, 1, 1], [], []>} : vector<32x8xbf16>, vector<8x256xbf16>, vector<32x256xf32> -> vector<32x256xf32>
    %21 = arith.addf %16, %20 : vector<32x256xf32>
    %c4 = arith.constant 4 : index
    %c0_16 = arith.constant 0 : index
    %c0_17 = arith.constant 0 : index
    %22 = vector.load %arg2[%c4, %c0_16, %c0_17] : memref<9x32x8xbf16, #tpu.memory_space<vmem>>, vector<1x32x8xbf16>
    %23 = vector.shape_cast %22 : vector<1x32x8xbf16> to vector<32x8xbf16>
    %24 = vector.extract_strided_slice %1 {offsets = [0, 17], sizes = [8, 256], strides = [1, 1]} : vector<8x384xbf16> to vector<8x256xbf16>
    %cst_18 = arith.constant dense<0.000000e+00> : vector<32x256xf32>
    %25 = tpu.matmul %23, %24, %cst_18 {dimension_numbers = #tpu.dot_dimension_numbers<[1], [0], [0], [1], [0, 0, 1, 1], [], []>} : vector<32x8xbf16>, vector<8x256xbf16>, vector<32x256xf32> -> vector<32x256xf32>
    %26 = arith.addf %21, %25 : vector<32x256xf32>
    %c5 = arith.constant 5 : index
    %c0_19 = arith.constant 0 : index
    %c0_20 = arith.constant 0 : index
    %27 = vector.load %arg2[%c5, %c0_19, %c0_20] : memref<9x32x8xbf16, #tpu.memory_space<vmem>>, vector<1x32x8xbf16>
    %28 = vector.shape_cast %27 : vector<1x32x8xbf16> to vector<32x8xbf16>
    %29 = vector.extract_strided_slice %1 {offsets = [0, 18], sizes = [8, 256], strides = [1, 1]} : vector<8x384xbf16> to vector<8x256xbf16>
    %cst_21 = arith.constant dense<0.000000e+00> : vector<32x256xf32>
    %30 = tpu.matmul %28, %29, %cst_21 {dimension_numbers = #tpu.dot_dimension_numbers<[1], [0], [0], [1], [0, 0, 1, 1], [], []>} : vector<32x8xbf16>, vector<8x256xbf16>, vector<32x256xf32> -> vector<32x256xf32>
    %31 = arith.addf %26, %30 : vector<32x256xf32>
    %c6 = arith.constant 6 : index
    %c0_22 = arith.constant 0 : index
    %c0_23 = arith.constant 0 : index
    %32 = vector.load %arg2[%c6, %c0_22, %c0_23] : memref<9x32x8xbf16, #tpu.memory_space<vmem>>, vector<1x32x8xbf16>
    %33 = vector.shape_cast %32 : vector<1x32x8xbf16> to vector<32x8xbf16>
    %34 = vector.extract_strided_slice %1 {offsets = [0, 32], sizes = [8, 256], strides = [1, 1]} : vector<8x384xbf16> to vector<8x256xbf16>
    %cst_24 = arith.constant dense<0.000000e+00> : vector<32x256xf32>
    %35 = tpu.matmul %33, %34, %cst_24 {dimension_numbers = #tpu.dot_dimension_numbers<[1], [0], [0], [1], [0, 0, 1, 1], [], []>} : vector<32x8xbf16>, vector<8x256xbf16>, vector<32x256xf32> -> vector<32x256xf32>
    %36 = arith.addf %31, %35 : vector<32x256xf32>
    %c7 = arith.constant 7 : index
    %c0_25 = arith.constant 0 : index
    %c0_26 = arith.constant 0 : index
    %37 = vector.load %arg2[%c7, %c0_25, %c0_26] : memref<9x32x8xbf16, #tpu.memory_space<vmem>>, vector<1x32x8xbf16>
    %38 = vector.shape_cast %37 : vector<1x32x8xbf16> to vector<32x8xbf16>
    %39 = vector.extract_strided_slice %1 {offsets = [0, 33], sizes = [8, 256], strides = [1, 1]} : vector<8x384xbf16> to vector<8x256xbf16>
    %cst_27 = arith.constant dense<0.000000e+00> : vector<32x256xf32>
    %40 = tpu.matmul %38, %39, %cst_27 {dimension_numbers = #tpu.dot_dimension_numbers<[1], [0], [0], [1], [0, 0, 1, 1], [], []>} : vector<32x8xbf16>, vector<8x256xbf16>, vector<32x256xf32> -> vector<32x256xf32>
    %41 = arith.addf %36, %40 : vector<32x256xf32>
    %c8 = arith.constant 8 : index
    %c0_28 = arith.constant 0 : index
    %c0_29 = arith.constant 0 : index
    %42 = vector.load %arg2[%c8, %c0_28, %c0_29] : memref<9x32x8xbf16, #tpu.memory_space<vmem>>, vector<1x32x8xbf16>
    %43 = vector.shape_cast %42 : vector<1x32x8xbf16> to vector<32x8xbf16>
    %44 = vector.extract_strided_slice %1 {offsets = [0, 34], sizes = [8, 256], strides = [1, 1]} : vector<8x384xbf16> to vector<8x256xbf16>
    %cst_30 = arith.constant dense<0.000000e+00> : vector<32x256xf32>
    %45 = tpu.matmul %43, %44, %cst_30 {dimension_numbers = #tpu.dot_dimension_numbers<[1], [0], [0], [1], [0, 0, 1, 1], [], []>} : vector<32x8xbf16>, vector<8x256xbf16>, vector<32x256xf32> -> vector<32x256xf32>
    %46 = arith.addf %41, %45 : vector<32x256xf32>
    %47 = vector.broadcast %2 : vector<32x1xf32> to vector<32x256xf32>
    %48 = arith.addf %46, %47 : vector<32x256xf32>
    %cst_31 = arith.constant 0.000000e+00 : f32
    %49 = vector.broadcast %cst_31 : f32 to vector<32x256xf32>
    %50 = arith.maximumf %48, %49 : vector<32x256xf32>
    %51 = arith.truncf %50 : vector<32x256xf32> to vector<32x256xbf16>
    %c0_32 = arith.constant 0 : index
    %c0_33 = arith.constant 0 : index
    %c0_34 = arith.constant 0 : index
    %52 = vector.load %arg4[%c0_32, %c0_33, %c0_34] : memref<1x32x256xbf16, #tpu.memory_space<vmem>>, vector<1x32x256xbf16>
    %53 = vector.shape_cast %52 : vector<1x32x256xbf16> to vector<32x256xbf16>
    %54 = vector.shape_cast %51 : vector<32x256xbf16> to vector<1x32x256xbf16>
    tpu.vector_store %arg4[%c0_32, %c0_33, %c0_34], %54 {strides = array<i32>} : memref<1x32x256xbf16, #tpu.memory_space<vmem>>, vector<1x32x256xbf16>,
    return
  }
  func.func @transform_0(%arg0: i32) -> (i32, i32, i32) {
    %c0_i32 = arith.constant 0 : i32
    %c0_i32_0 = arith.constant 0 : i32
    %c0_i32_1 = arith.constant 0 : i32
    return %arg0, %c0_i32, %c0_i32_0 : i32, i32, i32
  }
  func.func @transform_1(%arg0: i32) -> (i32, i32, i32) {
    %c0_i32 = arith.constant 0 : i32
    %c0_i32_0 = arith.constant 0 : i32
    %c0_i32_1 = arith.constant 0 : i32
    %c0_i32_2 = arith.constant 0 : i32
    return %c0_i32, %c0_i32_0, %c0_i32_1 : i32, i32, i32
  }
  func.func @transform_2(%arg0: i32) -> (i32, i32) {
    %c0_i32 = arith.constant 0 : i32
    %c0_i32_0 = arith.constant 0 : i32
    %c0_i32_1 = arith.constant 0 : i32
    return %c0_i32, %c0_i32_0 : i32, i32
  }
  func.func @transform_3(%arg0: i32) -> (i32, i32, i32) {
    %c0_i32 = arith.constant 0 : i32
    %c0_i32_0 = arith.constant 0 : i32
    %c0_i32_1 = arith.constant 0 : i32
    return %arg0, %c0_i32, %c0_i32_0 : i32, i32, i32
  }
}

module attributes {stable_mosaic.version = 11 : i64} {
  func.func @_tap_conv_kernel(%arg0: i32, %arg1: memref<1x32x256xbf16, #tpu.memory_space<vmem>>, %arg2: memref<9x32x32xbf16, #tpu.memory_space<vmem>>, %arg3: memref<32x1xf32, #tpu.memory_space<vmem>>, %arg4: memref<1x32x192xbf16, #tpu.memory_space<vmem>>) attributes {dimension_semantics = [#tpu.dimension_semantics<parallel>], iteration_bounds = array<i64: 2>, scalar_prefetch = 0 : i64, scratch_operands = 0 : i64, tpu.core_type = #tpu.core_type<tc>, window_params = [{transform_indices = @transform_0, window_bounds = array<i64: 1, 32, 256>}, {pipeline_mode = #tpu.pipeline_mode<synchronous>, transform_indices = @transform_1, window_bounds = array<i64: 9, 32, 32>}, {pipeline_mode = #tpu.pipeline_mode<synchronous>, transform_indices = @transform_2, window_bounds = array<i64: 32, 1>}, {transform_indices = @transform_3, window_bounds = array<i64: 1, 32, 192>}]} {
    %c0 = arith.constant 0 : index
    %c0_0 = arith.constant 0 : index
    %c0_1 = arith.constant 0 : index
    %0 = vector.load %arg1[%c0, %c0_0, %c0_1] : memref<1x32x256xbf16, #tpu.memory_space<vmem>>, vector<1x32x256xbf16>
    %1 = vector.shape_cast %0 : vector<1x32x256xbf16> to vector<32x256xbf16>
    %c0_2 = arith.constant 0 : index
    %c0_3 = arith.constant 0 : index
    %2 = vector.load %arg3[%c0_2, %c0_3] : memref<32x1xf32, #tpu.memory_space<vmem>>, vector<32x1xf32>
    %c0_4 = arith.constant 0 : index
    %c0_5 = arith.constant 0 : index
    %c0_6 = arith.constant 0 : index
    %3 = vector.load %arg2[%c0_4, %c0_5, %c0_6] : memref<9x32x32xbf16, #tpu.memory_space<vmem>>, vector<1x32x32xbf16>
    %4 = vector.shape_cast %3 : vector<1x32x32xbf16> to vector<32x32xbf16>
    %5 = vector.extract_strided_slice %1 {offsets = [0, 0], sizes = [32, 192], strides = [1, 1]} : vector<32x256xbf16> to vector<32x192xbf16>
    %cst = arith.constant dense<0.000000e+00> : vector<32x192xf32>
    %6 = tpu.matmul %4, %5, %cst {dimension_numbers = #tpu.dot_dimension_numbers<[1], [0], [0], [1], [0, 0, 1, 1], [], []>} : vector<32x32xbf16>, vector<32x192xbf16>, vector<32x192xf32> -> vector<32x192xf32>
    %c1 = arith.constant 1 : index
    %c0_7 = arith.constant 0 : index
    %c0_8 = arith.constant 0 : index
    %7 = vector.load %arg2[%c1, %c0_7, %c0_8] : memref<9x32x32xbf16, #tpu.memory_space<vmem>>, vector<1x32x32xbf16>
    %8 = vector.shape_cast %7 : vector<1x32x32xbf16> to vector<32x32xbf16>
    %9 = vector.extract_strided_slice %1 {offsets = [0, 1], sizes = [32, 192], strides = [1, 1]} : vector<32x256xbf16> to vector<32x192xbf16>
    %cst_9 = arith.constant dense<0.000000e+00> : vector<32x192xf32>
    %10 = tpu.matmul %8, %9, %cst_9 {dimension_numbers = #tpu.dot_dimension_numbers<[1], [0], [0], [1], [0, 0, 1, 1], [], []>} : vector<32x32xbf16>, vector<32x192xbf16>, vector<32x192xf32> -> vector<32x192xf32>
    %11 = arith.addf %6, %10 : vector<32x192xf32>
    %c2 = arith.constant 2 : index
    %c0_10 = arith.constant 0 : index
    %c0_11 = arith.constant 0 : index
    %12 = vector.load %arg2[%c2, %c0_10, %c0_11] : memref<9x32x32xbf16, #tpu.memory_space<vmem>>, vector<1x32x32xbf16>
    %13 = vector.shape_cast %12 : vector<1x32x32xbf16> to vector<32x32xbf16>
    %14 = vector.extract_strided_slice %1 {offsets = [0, 2], sizes = [32, 192], strides = [1, 1]} : vector<32x256xbf16> to vector<32x192xbf16>
    %cst_12 = arith.constant dense<0.000000e+00> : vector<32x192xf32>
    %15 = tpu.matmul %13, %14, %cst_12 {dimension_numbers = #tpu.dot_dimension_numbers<[1], [0], [0], [1], [0, 0, 1, 1], [], []>} : vector<32x32xbf16>, vector<32x192xbf16>, vector<32x192xf32> -> vector<32x192xf32>
    %16 = arith.addf %11, %15 : vector<32x192xf32>
    %c3 = arith.constant 3 : index
    %c0_13 = arith.constant 0 : index
    %c0_14 = arith.constant 0 : index
    %17 = vector.load %arg2[%c3, %c0_13, %c0_14] : memref<9x32x32xbf16, #tpu.memory_space<vmem>>, vector<1x32x32xbf16>
    %18 = vector.shape_cast %17 : vector<1x32x32xbf16> to vector<32x32xbf16>
    %19 = vector.extract_strided_slice %1 {offsets = [0, 16], sizes = [32, 192], strides = [1, 1]} : vector<32x256xbf16> to vector<32x192xbf16>
    %cst_15 = arith.constant dense<0.000000e+00> : vector<32x192xf32>
    %20 = tpu.matmul %18, %19, %cst_15 {dimension_numbers = #tpu.dot_dimension_numbers<[1], [0], [0], [1], [0, 0, 1, 1], [], []>} : vector<32x32xbf16>, vector<32x192xbf16>, vector<32x192xf32> -> vector<32x192xf32>
    %21 = arith.addf %16, %20 : vector<32x192xf32>
    %c4 = arith.constant 4 : index
    %c0_16 = arith.constant 0 : index
    %c0_17 = arith.constant 0 : index
    %22 = vector.load %arg2[%c4, %c0_16, %c0_17] : memref<9x32x32xbf16, #tpu.memory_space<vmem>>, vector<1x32x32xbf16>
    %23 = vector.shape_cast %22 : vector<1x32x32xbf16> to vector<32x32xbf16>
    %24 = vector.extract_strided_slice %1 {offsets = [0, 17], sizes = [32, 192], strides = [1, 1]} : vector<32x256xbf16> to vector<32x192xbf16>
    %cst_18 = arith.constant dense<0.000000e+00> : vector<32x192xf32>
    %25 = tpu.matmul %23, %24, %cst_18 {dimension_numbers = #tpu.dot_dimension_numbers<[1], [0], [0], [1], [0, 0, 1, 1], [], []>} : vector<32x32xbf16>, vector<32x192xbf16>, vector<32x192xf32> -> vector<32x192xf32>
    %26 = arith.addf %21, %25 : vector<32x192xf32>
    %c5 = arith.constant 5 : index
    %c0_19 = arith.constant 0 : index
    %c0_20 = arith.constant 0 : index
    %27 = vector.load %arg2[%c5, %c0_19, %c0_20] : memref<9x32x32xbf16, #tpu.memory_space<vmem>>, vector<1x32x32xbf16>
    %28 = vector.shape_cast %27 : vector<1x32x32xbf16> to vector<32x32xbf16>
    %29 = vector.extract_strided_slice %1 {offsets = [0, 18], sizes = [32, 192], strides = [1, 1]} : vector<32x256xbf16> to vector<32x192xbf16>
    %cst_21 = arith.constant dense<0.000000e+00> : vector<32x192xf32>
    %30 = tpu.matmul %28, %29, %cst_21 {dimension_numbers = #tpu.dot_dimension_numbers<[1], [0], [0], [1], [0, 0, 1, 1], [], []>} : vector<32x32xbf16>, vector<32x192xbf16>, vector<32x192xf32> -> vector<32x192xf32>
    %31 = arith.addf %26, %30 : vector<32x192xf32>
    %c6 = arith.constant 6 : index
    %c0_22 = arith.constant 0 : index
    %c0_23 = arith.constant 0 : index
    %32 = vector.load %arg2[%c6, %c0_22, %c0_23] : memref<9x32x32xbf16, #tpu.memory_space<vmem>>, vector<1x32x32xbf16>
    %33 = vector.shape_cast %32 : vector<1x32x32xbf16> to vector<32x32xbf16>
    %34 = vector.extract_strided_slice %1 {offsets = [0, 32], sizes = [32, 192], strides = [1, 1]} : vector<32x256xbf16> to vector<32x192xbf16>
    %cst_24 = arith.constant dense<0.000000e+00> : vector<32x192xf32>
    %35 = tpu.matmul %33, %34, %cst_24 {dimension_numbers = #tpu.dot_dimension_numbers<[1], [0], [0], [1], [0, 0, 1, 1], [], []>} : vector<32x32xbf16>, vector<32x192xbf16>, vector<32x192xf32> -> vector<32x192xf32>
    %36 = arith.addf %31, %35 : vector<32x192xf32>
    %c7 = arith.constant 7 : index
    %c0_25 = arith.constant 0 : index
    %c0_26 = arith.constant 0 : index
    %37 = vector.load %arg2[%c7, %c0_25, %c0_26] : memref<9x32x32xbf16, #tpu.memory_space<vmem>>, vector<1x32x32xbf16>
    %38 = vector.shape_cast %37 : vector<1x32x32xbf16> to vector<32x32xbf16>
    %39 = vector.extract_strided_slice %1 {offsets = [0, 33], sizes = [32, 192], strides = [1, 1]} : vector<32x256xbf16> to vector<32x192xbf16>
    %cst_27 = arith.constant dense<0.000000e+00> : vector<32x192xf32>
    %40 = tpu.matmul %38, %39, %cst_27 {dimension_numbers = #tpu.dot_dimension_numbers<[1], [0], [0], [1], [0, 0, 1, 1], [], []>} : vector<32x32xbf16>, vector<32x192xbf16>, vector<32x192xf32> -> vector<32x192xf32>
    %41 = arith.addf %36, %40 : vector<32x192xf32>
    %c8 = arith.constant 8 : index
    %c0_28 = arith.constant 0 : index
    %c0_29 = arith.constant 0 : index
    %42 = vector.load %arg2[%c8, %c0_28, %c0_29] : memref<9x32x32xbf16, #tpu.memory_space<vmem>>, vector<1x32x32xbf16>
    %43 = vector.shape_cast %42 : vector<1x32x32xbf16> to vector<32x32xbf16>
    %44 = vector.extract_strided_slice %1 {offsets = [0, 34], sizes = [32, 192], strides = [1, 1]} : vector<32x256xbf16> to vector<32x192xbf16>
    %cst_30 = arith.constant dense<0.000000e+00> : vector<32x192xf32>
    %45 = tpu.matmul %43, %44, %cst_30 {dimension_numbers = #tpu.dot_dimension_numbers<[1], [0], [0], [1], [0, 0, 1, 1], [], []>} : vector<32x32xbf16>, vector<32x192xbf16>, vector<32x192xf32> -> vector<32x192xf32>
    %46 = arith.addf %41, %45 : vector<32x192xf32>
    %47 = vector.broadcast %2 : vector<32x1xf32> to vector<32x192xf32>
    %48 = arith.addf %46, %47 : vector<32x192xf32>
    %cst_31 = arith.constant 0.000000e+00 : f32
    %49 = vector.broadcast %cst_31 : f32 to vector<32x192xf32>
    %50 = arith.maximumf %48, %49 : vector<32x192xf32>
    %51 = arith.truncf %50 : vector<32x192xf32> to vector<32x192xbf16>
    %c0_32 = arith.constant 0 : index
    %c0_33 = arith.constant 0 : index
    %c0_34 = arith.constant 0 : index
    %52 = vector.load %arg4[%c0_32, %c0_33, %c0_34] : memref<1x32x192xbf16, #tpu.memory_space<vmem>>, vector<1x32x192xbf16>
    %53 = vector.shape_cast %52 : vector<1x32x192xbf16> to vector<32x192xbf16>
    %54 = vector.shape_cast %51 : vector<32x192xbf16> to vector<1x32x192xbf16>
    tpu.vector_store %arg4[%c0_32, %c0_33, %c0_34], %54 {strides = array<i32>} : memref<1x32x192xbf16, #tpu.memory_space<vmem>>, vector<1x32x192xbf16>,
    return
  }
  func.func @transform_0(%arg0: i32) -> (i32, i32, i32) {
    %c0_i32 = arith.constant 0 : i32
    %c0_i32_0 = arith.constant 0 : i32
    %c0_i32_1 = arith.constant 0 : i32
    return %arg0, %c0_i32, %c0_i32_0 : i32, i32, i32
  }
  func.func @transform_1(%arg0: i32) -> (i32, i32, i32) {
    %c0_i32 = arith.constant 0 : i32
    %c0_i32_0 = arith.constant 0 : i32
    %c0_i32_1 = arith.constant 0 : i32
    %c0_i32_2 = arith.constant 0 : i32
    return %c0_i32, %c0_i32_0, %c0_i32_1 : i32, i32, i32
  }
  func.func @transform_2(%arg0: i32) -> (i32, i32) {
    %c0_i32 = arith.constant 0 : i32
    %c0_i32_0 = arith.constant 0 : i32
    %c0_i32_1 = arith.constant 0 : i32
    return %c0_i32, %c0_i32_0 : i32, i32
  }
  func.func @transform_3(%arg0: i32) -> (i32, i32, i32) {
    %c0_i32 = arith.constant 0 : i32
    %c0_i32_0 = arith.constant 0 : i32
    %c0_i32_1 = arith.constant 0 : i32
    return %arg0, %c0_i32, %c0_i32_0 : i32, i32, i32
  }
}

module attributes {stable_mosaic.version = 11 : i64} {
  func.func @_tap_conv_kernel(%arg0: i32, %arg1: memref<1x32x640xbf16, #tpu.memory_space<vmem>>, %arg2: memref<25x8x32xbf16, #tpu.memory_space<vmem>>, %arg3: memref<8x1xf32, #tpu.memory_space<vmem>>, %arg4: memref<1x32x432xf32, #tpu.memory_space<vmem>>) attributes {dimension_semantics = [#tpu.dimension_semantics<parallel>], iteration_bounds = array<i64: 2>, scalar_prefetch = 0 : i64, scratch_operands = 0 : i64, tpu.core_type = #tpu.core_type<tc>, window_params = [{transform_indices = @transform_0, window_bounds = array<i64: 1, 32, 640>}, {pipeline_mode = #tpu.pipeline_mode<synchronous>, transform_indices = @transform_1, window_bounds = array<i64: 25, 8, 32>}, {pipeline_mode = #tpu.pipeline_mode<synchronous>, transform_indices = @transform_2, window_bounds = array<i64: 8, 1>}, {transform_indices = @transform_3, window_bounds = array<i64: 1, 32, 432>}]} {
    %c0 = arith.constant 0 : index
    %c0_0 = arith.constant 0 : index
    %c0_1 = arith.constant 0 : index
    %0 = vector.load %arg1[%c0, %c0_0, %c0_1] : memref<1x32x640xbf16, #tpu.memory_space<vmem>>, vector<1x32x640xbf16>
    %1 = vector.shape_cast %0 : vector<1x32x640xbf16> to vector<32x640xbf16>
    %c0_2 = arith.constant 0 : index
    %c0_3 = arith.constant 0 : index
    %2 = vector.load %arg3[%c0_2, %c0_3] : memref<8x1xf32, #tpu.memory_space<vmem>>, vector<8x1xf32>
    %c0_4 = arith.constant 0 : index
    %c0_5 = arith.constant 0 : index
    %c0_6 = arith.constant 0 : index
    %3 = vector.load %arg2[%c0_4, %c0_5, %c0_6] : memref<25x8x32xbf16, #tpu.memory_space<vmem>>, vector<1x8x32xbf16>
    %4 = vector.shape_cast %3 : vector<1x8x32xbf16> to vector<8x32xbf16>
    %5 = vector.extract_strided_slice %1 {offsets = [0, 150], sizes = [32, 432], strides = [1, 1]} : vector<32x640xbf16> to vector<32x432xbf16>
    %cst = arith.constant dense<0.000000e+00> : vector<8x432xf32>
    %6 = tpu.matmul %4, %5, %cst {dimension_numbers = #tpu.dot_dimension_numbers<[1], [0], [0], [1], [0, 0, 1, 1], [], []>} : vector<8x32xbf16>, vector<32x432xbf16>, vector<8x432xf32> -> vector<8x432xf32>
    %c1 = arith.constant 1 : index
    %c0_7 = arith.constant 0 : index
    %c0_8 = arith.constant 0 : index
    %7 = vector.load %arg2[%c1, %c0_7, %c0_8] : memref<25x8x32xbf16, #tpu.memory_space<vmem>>, vector<1x8x32xbf16>
    %8 = vector.shape_cast %7 : vector<1x8x32xbf16> to vector<8x32xbf16>
    %9 = vector.extract_strided_slice %1 {offsets = [0, 147], sizes = [32, 432], strides = [1, 1]} : vector<32x640xbf16> to vector<32x432xbf16>
    %cst_9 = arith.constant dense<0.000000e+00> : vector<8x432xf32>
    %10 = tpu.matmul %8, %9, %cst_9 {dimension_numbers = #tpu.dot_dimension_numbers<[1], [0], [0], [1], [0, 0, 1, 1], [], []>} : vector<8x32xbf16>, vector<32x432xbf16>, vector<8x432xf32> -> vector<8x432xf32>
    %11 = arith.addf %6, %10 : vector<8x432xf32>
    %c2 = arith.constant 2 : index
    %c0_10 = arith.constant 0 : index
    %c0_11 = arith.constant 0 : index
    %12 = vector.load %arg2[%c2, %c0_10, %c0_11] : memref<25x8x32xbf16, #tpu.memory_space<vmem>>, vector<1x8x32xbf16>
    %13 = vector.shape_cast %12 : vector<1x8x32xbf16> to vector<8x32xbf16>
    %14 = vector.extract_strided_slice %1 {offsets = [0, 144], sizes = [32, 432], strides = [1, 1]} : vector<32x640xbf16> to vector<32x432xbf16>
    %cst_12 = arith.constant dense<0.000000e+00> : vector<8x432xf32>
    %15 = tpu.matmul %13, %14, %cst_12 {dimension_numbers = #tpu.dot_dimension_numbers<[1], [0], [0], [1], [0, 0, 1, 1], [], []>} : vector<8x32xbf16>, vector<32x432xbf16>, vector<8x432xf32> -> vector<8x432xf32>
    %16 = arith.addf %11, %15 : vector<8x432xf32>
    %c3 = arith.constant 3 : index
    %c0_13 = arith.constant 0 : index
    %c0_14 = arith.constant 0 : index
    %17 = vector.load %arg2[%c3, %c0_13, %c0_14] : memref<25x8x32xbf16, #tpu.memory_space<vmem>>, vector<1x8x32xbf16>
    %18 = vector.shape_cast %17 : vector<1x8x32xbf16> to vector<8x32xbf16>
    %19 = vector.extract_strided_slice %1 {offsets = [0, 78], sizes = [32, 432], strides = [1, 1]} : vector<32x640xbf16> to vector<32x432xbf16>
    %cst_15 = arith.constant dense<0.000000e+00> : vector<8x432xf32>
    %20 = tpu.matmul %18, %19, %cst_15 {dimension_numbers = #tpu.dot_dimension_numbers<[1], [0], [0], [1], [0, 0, 1, 1], [], []>} : vector<8x32xbf16>, vector<32x432xbf16>, vector<8x432xf32> -> vector<8x432xf32>
    %21 = arith.addf %16, %20 : vector<8x432xf32>
    %c4 = arith.constant 4 : index
    %c0_16 = arith.constant 0 : index
    %c0_17 = arith.constant 0 : index
    %22 = vector.load %arg2[%c4, %c0_16, %c0_17] : memref<25x8x32xbf16, #tpu.memory_space<vmem>>, vector<1x8x32xbf16>
    %23 = vector.shape_cast %22 : vector<1x8x32xbf16> to vector<8x32xbf16>
    %24 = vector.extract_strided_slice %1 {offsets = [0, 75], sizes = [32, 432], strides = [1, 1]} : vector<32x640xbf16> to vector<32x432xbf16>
    %cst_18 = arith.constant dense<0.000000e+00> : vector<8x432xf32>
    %25 = tpu.matmul %23, %24, %cst_18 {dimension_numbers = #tpu.dot_dimension_numbers<[1], [0], [0], [1], [0, 0, 1, 1], [], []>} : vector<8x32xbf16>, vector<32x432xbf16>, vector<8x432xf32> -> vector<8x432xf32>
    %26 = arith.addf %21, %25 : vector<8x432xf32>
    %c5 = arith.constant 5 : index
    %c0_19 = arith.constant 0 : index
    %c0_20 = arith.constant 0 : index
    %27 = vector.load %arg2[%c5, %c0_19, %c0_20] : memref<25x8x32xbf16, #tpu.memory_space<vmem>>, vector<1x8x32xbf16>
    %28 = vector.shape_cast %27 : vector<1x8x32xbf16> to vector<8x32xbf16>
    %29 = vector.extract_strided_slice %1 {offsets = [0, 72], sizes = [32, 432], strides = [1, 1]} : vector<32x640xbf16> to vector<32x432xbf16>
    %cst_21 = arith.constant dense<0.000000e+00> : vector<8x432xf32>
    %30 = tpu.matmul %28, %29, %cst_21 {dimension_numbers = #tpu.dot_dimension_numbers<[1], [0], [0], [1], [0, 0, 1, 1], [], []>} : vector<8x32xbf16>, vector<32x432xbf16>, vector<8x432xf32> -> vector<8x432xf32>
    %31 = arith.addf %26, %30 : vector<8x432xf32>
    %c6 = arith.constant 6 : index
    %c0_22 = arith.constant 0 : index
    %c0_23 = arith.constant 0 : index
    %32 = vector.load %arg2[%c6, %c0_22, %c0_23] : memref<25x8x32xbf16, #tpu.memory_space<vmem>>, vector<1x8x32xbf16>
    %33 = vector.shape_cast %32 : vector<1x8x32xbf16> to vector<8x32xbf16>
    %34 = vector.extract_strided_slice %1 {offsets = [0, 6], sizes = [32, 432], strides = [1, 1]} : vector<32x640xbf16> to vector<32x432xbf16>
    %cst_24 = arith.constant dense<0.000000e+00> : vector<8x432xf32>
    %35 = tpu.matmul %33, %34, %cst_24 {dimension_numbers = #tpu.dot_dimension_numbers<[1], [0], [0], [1], [0, 0, 1, 1], [], []>} : vector<8x32xbf16>, vector<32x432xbf16>, vector<8x432xf32> -> vector<8x432xf32>
    %36 = arith.addf %31, %35 : vector<8x432xf32>
    %c7 = arith.constant 7 : index
    %c0_25 = arith.constant 0 : index
    %c0_26 = arith.constant 0 : index
    %37 = vector.load %arg2[%c7, %c0_25, %c0_26] : memref<25x8x32xbf16, #tpu.memory_space<vmem>>, vector<1x8x32xbf16>
    %38 = vector.shape_cast %37 : vector<1x8x32xbf16> to vector<8x32xbf16>
    %39 = vector.extract_strided_slice %1 {offsets = [0, 3], sizes = [32, 432], strides = [1, 1]} : vector<32x640xbf16> to vector<32x432xbf16>
    %cst_27 = arith.constant dense<0.000000e+00> : vector<8x432xf32>
    %40 = tpu.matmul %38, %39, %cst_27 {dimension_numbers = #tpu.dot_dimension_numbers<[1], [0], [0], [1], [0, 0, 1, 1], [], []>} : vector<8x32xbf16>, vector<32x432xbf16>, vector<8x432xf32> -> vector<8x432xf32>
    %41 = arith.addf %36, %40 : vector<8x432xf32>
    %c8 = arith.constant 8 : index
    %c0_28 = arith.constant 0 : index
    %c0_29 = arith.constant 0 : index
    %42 = vector.load %arg2[%c8, %c0_28, %c0_29] : memref<25x8x32xbf16, #tpu.memory_space<vmem>>, vector<1x8x32xbf16>
    %43 = vector.shape_cast %42 : vector<1x8x32xbf16> to vector<8x32xbf16>
    %44 = vector.extract_strided_slice %1 {offsets = [0, 0], sizes = [32, 432], strides = [1, 1]} : vector<32x640xbf16> to vector<32x432xbf16>
    %cst_30 = arith.constant dense<0.000000e+00> : vector<8x432xf32>
    %45 = tpu.matmul %43, %44, %cst_30 {dimension_numbers = #tpu.dot_dimension_numbers<[1], [0], [0], [1], [0, 0, 1, 1], [], []>} : vector<8x32xbf16>, vector<32x432xbf16>, vector<8x432xf32> -> vector<8x432xf32>
    %46 = arith.addf %41, %45 : vector<8x432xf32>
    %47 = vector.broadcast %2 : vector<8x1xf32> to vector<8x432xf32>
    %48 = arith.addf %46, %47 : vector<8x432xf32>
    %c0_31 = arith.constant 0 : index
    %c0_32 = arith.constant 0 : index
    %c0_33 = arith.constant 0 : index
    %49 = vector.load %arg4[%c0_31, %c0_32, %c0_33] : memref<1x32x432xf32, #tpu.memory_space<vmem>>, vector<1x8x432xf32>
    %50 = vector.shape_cast %49 : vector<1x8x432xf32> to vector<8x432xf32>
    %51 = vector.shape_cast %48 : vector<8x432xf32> to vector<1x8x432xf32>
    tpu.vector_store %arg4[%c0_31, %c0_32, %c0_33], %51 {strides = array<i32>} : memref<1x32x432xf32, #tpu.memory_space<vmem>>, vector<1x8x432xf32>,
    %c9 = arith.constant 9 : index
    %c0_34 = arith.constant 0 : index
    %c0_35 = arith.constant 0 : index
    %52 = vector.load %arg2[%c9, %c0_34, %c0_35] : memref<25x8x32xbf16, #tpu.memory_space<vmem>>, vector<1x8x32xbf16>
    %53 = vector.shape_cast %52 : vector<1x8x32xbf16> to vector<8x32xbf16>
    %54 = vector.extract_strided_slice %1 {offsets = [0, 149], sizes = [32, 432], strides = [1, 1]} : vector<32x640xbf16> to vector<32x432xbf16>
    %cst_36 = arith.constant dense<0.000000e+00> : vector<8x432xf32>
    %55 = tpu.matmul %53, %54, %cst_36 {dimension_numbers = #tpu.dot_dimension_numbers<[1], [0], [0], [1], [0, 0, 1, 1], [], []>} : vector<8x32xbf16>, vector<32x432xbf16>, vector<8x432xf32> -> vector<8x432xf32>
    %c10 = arith.constant 10 : index
    %c0_37 = arith.constant 0 : index
    %c0_38 = arith.constant 0 : index
    %56 = vector.load %arg2[%c10, %c0_37, %c0_38] : memref<25x8x32xbf16, #tpu.memory_space<vmem>>, vector<1x8x32xbf16>
    %57 = vector.shape_cast %56 : vector<1x8x32xbf16> to vector<8x32xbf16>
    %58 = vector.extract_strided_slice %1 {offsets = [0, 146], sizes = [32, 432], strides = [1, 1]} : vector<32x640xbf16> to vector<32x432xbf16>
    %cst_39 = arith.constant dense<0.000000e+00> : vector<8x432xf32>
    %59 = tpu.matmul %57, %58, %cst_39 {dimension_numbers = #tpu.dot_dimension_numbers<[1], [0], [0], [1], [0, 0, 1, 1], [], []>} : vector<8x32xbf16>, vector<32x432xbf16>, vector<8x432xf32> -> vector<8x432xf32>
    %60 = arith.addf %55, %59 : vector<8x432xf32>
    %c11 = arith.constant 11 : index
    %c0_40 = arith.constant 0 : index
    %c0_41 = arith.constant 0 : index
    %61 = vector.load %arg2[%c11, %c0_40, %c0_41] : memref<25x8x32xbf16, #tpu.memory_space<vmem>>, vector<1x8x32xbf16>
    %62 = vector.shape_cast %61 : vector<1x8x32xbf16> to vector<8x32xbf16>
    %63 = vector.extract_strided_slice %1 {offsets = [0, 77], sizes = [32, 432], strides = [1, 1]} : vector<32x640xbf16> to vector<32x432xbf16>
    %cst_42 = arith.constant dense<0.000000e+00> : vector<8x432xf32>
    %64 = tpu.matmul %62, %63, %cst_42 {dimension_numbers = #tpu.dot_dimension_numbers<[1], [0], [0], [1], [0, 0, 1, 1], [], []>} : vector<8x32xbf16>, vector<32x432xbf16>, vector<8x432xf32> -> vector<8x432xf32>
    %65 = arith.addf %60, %64 : vector<8x432xf32>
    %c12 = arith.constant 12 : index
    %c0_43 = arith.constant 0 : index
    %c0_44 = arith.constant 0 : index
    %66 = vector.load %arg2[%c12, %c0_43, %c0_44] : memref<25x8x32xbf16, #tpu.memory_space<vmem>>, vector<1x8x32xbf16>
    %67 = vector.shape_cast %66 : vector<1x8x32xbf16> to vector<8x32xbf16>
    %68 = vector.extract_strided_slice %1 {offsets = [0, 74], sizes = [32, 432], strides = [1, 1]} : vector<32x640xbf16> to vector<32x432xbf16>
    %cst_45 = arith.constant dense<0.000000e+00> : vector<8x432xf32>
    %69 = tpu.matmul %67, %68, %cst_45 {dimension_numbers = #tpu.dot_dimension_numbers<[1], [0], [0], [1], [0, 0, 1, 1], [], []>} : vector<8x32xbf16>, vector<32x432xbf16>, vector<8x432xf32> -> vector<8x432xf32>
    %70 = arith.addf %65, %69 : vector<8x432xf32>
    %c13 = arith.constant 13 : index
    %c0_46 = arith.constant 0 : index
    %c0_47 = arith.constant 0 : index
    %71 = vector.load %arg2[%c13, %c0_46, %c0_47] : memref<25x8x32xbf16, #tpu.memory_space<vmem>>, vector<1x8x32xbf16>
    %72 = vector.shape_cast %71 : vector<1x8x32xbf16> to vector<8x32xbf16>
    %73 = vector.extract_strided_slice %1 {offsets = [0, 5], sizes = [32, 432], strides = [1, 1]} : vector<32x640xbf16> to vector<32x432xbf16>
    %cst_48 = arith.constant dense<0.000000e+00> : vector<8x432xf32>
    %74 = tpu.matmul %72, %73, %cst_48 {dimension_numbers = #tpu.dot_dimension_numbers<[1], [0], [0], [1], [0, 0, 1, 1], [], []>} : vector<8x32xbf16>, vector<32x432xbf16>, vector<8x432xf32> -> vector<8x432xf32>
    %75 = arith.addf %70, %74 : vector<8x432xf32>
    %c14 = arith.constant 14 : index
    %c0_49 = arith.constant 0 : index
    %c0_50 = arith.constant 0 : index
    %76 = vector.load %arg2[%c14, %c0_49, %c0_50] : memref<25x8x32xbf16, #tpu.memory_space<vmem>>, vector<1x8x32xbf16>
    %77 = vector.shape_cast %76 : vector<1x8x32xbf16> to vector<8x32xbf16>
    %78 = vector.extract_strided_slice %1 {offsets = [0, 2], sizes = [32, 432], strides = [1, 1]} : vector<32x640xbf16> to vector<32x432xbf16>
    %cst_51 = arith.constant dense<0.000000e+00> : vector<8x432xf32>
    %79 = tpu.matmul %77, %78, %cst_51 {dimension_numbers = #tpu.dot_dimension_numbers<[1], [0], [0], [1], [0, 0, 1, 1], [], []>} : vector<8x32xbf16>, vector<32x432xbf16>, vector<8x432xf32> -> vector<8x432xf32>
    %80 = arith.addf %75, %79 : vector<8x432xf32>
    %81 = vector.broadcast %2 : vector<8x1xf32> to vector<8x432xf32>
    %82 = arith.addf %80, %81 : vector<8x432xf32>
    %c0_52 = arith.constant 0 : index
    %c8_53 = arith.constant 8 : index
    %c0_54 = arith.constant 0 : index
    %83 = vector.load %arg4[%c0_52, %c8_53, %c0_54] : memref<1x32x432xf32, #tpu.memory_space<vmem>>, vector<1x8x432xf32>
    %84 = vector.shape_cast %83 : vector<1x8x432xf32> to vector<8x432xf32>
    %85 = vector.shape_cast %82 : vector<8x432xf32> to vector<1x8x432xf32>
    tpu.vector_store %arg4[%c0_52, %c8_53, %c0_54], %85 {strides = array<i32>} : memref<1x32x432xf32, #tpu.memory_space<vmem>>, vector<1x8x432xf32>,
    %c15 = arith.constant 15 : index
    %c0_55 = arith.constant 0 : index
    %c0_56 = arith.constant 0 : index
    %86 = vector.load %arg2[%c15, %c0_55, %c0_56] : memref<25x8x32xbf16, #tpu.memory_space<vmem>>, vector<1x8x32xbf16>
    %87 = vector.shape_cast %86 : vector<1x8x32xbf16> to vector<8x32xbf16>
    %88 = vector.extract_strided_slice %1 {offsets = [0, 126], sizes = [32, 432], strides = [1, 1]} : vector<32x640xbf16> to vector<32x432xbf16>
    %cst_57 = arith.constant dense<0.000000e+00> : vector<8x432xf32>
    %89 = tpu.matmul %87, %88, %cst_57 {dimension_numbers = #tpu.dot_dimension_numbers<[1], [0], [0], [1], [0, 0, 1, 1], [], []>} : vector<8x32xbf16>, vector<32x432xbf16>, vector<8x432xf32> -> vector<8x432xf32>
    %c16 = arith.constant 16 : index
    %c0_58 = arith.constant 0 : index
    %c0_59 = arith.constant 0 : index
    %90 = vector.load %arg2[%c16, %c0_58, %c0_59] : memref<25x8x32xbf16, #tpu.memory_space<vmem>>, vector<1x8x32xbf16>
    %91 = vector.shape_cast %90 : vector<1x8x32xbf16> to vector<8x32xbf16>
    %92 = vector.extract_strided_slice %1 {offsets = [0, 123], sizes = [32, 432], strides = [1, 1]} : vector<32x640xbf16> to vector<32x432xbf16>
    %cst_60 = arith.constant dense<0.000000e+00> : vector<8x432xf32>
    %93 = tpu.matmul %91, %92, %cst_60 {dimension_numbers = #tpu.dot_dimension_numbers<[1], [0], [0], [1], [0, 0, 1, 1], [], []>} : vector<8x32xbf16>, vector<32x432xbf16>, vector<8x432xf32> -> vector<8x432xf32>
    %94 = arith.addf %89, %93 : vector<8x432xf32>
    %c17 = arith.constant 17 : index
    %c0_61 = arith.constant 0 : index
    %c0_62 = arith.constant 0 : index
    %95 = vector.load %arg2[%c17, %c0_61, %c0_62] : memref<25x8x32xbf16, #tpu.memory_space<vmem>>, vector<1x8x32xbf16>
    %96 = vector.shape_cast %95 : vector<1x8x32xbf16> to vector<8x32xbf16>
    %97 = vector.extract_strided_slice %1 {offsets = [0, 120], sizes = [32, 432], strides = [1, 1]} : vector<32x640xbf16> to vector<32x432xbf16>
    %cst_63 = arith.constant dense<0.000000e+00> : vector<8x432xf32>
    %98 = tpu.matmul %96, %97, %cst_63 {dimension_numbers = #tpu.dot_dimension_numbers<[1], [0], [0], [1], [0, 0, 1, 1], [], []>} : vector<8x32xbf16>, vector<32x432xbf16>, vector<8x432xf32> -> vector<8x432xf32>
    %99 = arith.addf %94, %98 : vector<8x432xf32>
    %c18 = arith.constant 18 : index
    %c0_64 = arith.constant 0 : index
    %c0_65 = arith.constant 0 : index
    %100 = vector.load %arg2[%c18, %c0_64, %c0_65] : memref<25x8x32xbf16, #tpu.memory_space<vmem>>, vector<1x8x32xbf16>
    %101 = vector.shape_cast %100 : vector<1x8x32xbf16> to vector<8x32xbf16>
    %102 = vector.extract_strided_slice %1 {offsets = [0, 54], sizes = [32, 432], strides = [1, 1]} : vector<32x640xbf16> to vector<32x432xbf16>
    %cst_66 = arith.constant dense<0.000000e+00> : vector<8x432xf32>
    %103 = tpu.matmul %101, %102, %cst_66 {dimension_numbers = #tpu.dot_dimension_numbers<[1], [0], [0], [1], [0, 0, 1, 1], [], []>} : vector<8x32xbf16>, vector<32x432xbf16>, vector<8x432xf32> -> vector<8x432xf32>
    %104 = arith.addf %99, %103 : vector<8x432xf32>
    %c19 = arith.constant 19 : index
    %c0_67 = arith.constant 0 : index
    %c0_68 = arith.constant 0 : index
    %105 = vector.load %arg2[%c19, %c0_67, %c0_68] : memref<25x8x32xbf16, #tpu.memory_space<vmem>>, vector<1x8x32xbf16>
    %106 = vector.shape_cast %105 : vector<1x8x32xbf16> to vector<8x32xbf16>
    %107 = vector.extract_strided_slice %1 {offsets = [0, 51], sizes = [32, 432], strides = [1, 1]} : vector<32x640xbf16> to vector<32x432xbf16>
    %cst_69 = arith.constant dense<0.000000e+00> : vector<8x432xf32>
    %108 = tpu.matmul %106, %107, %cst_69 {dimension_numbers = #tpu.dot_dimension_numbers<[1], [0], [0], [1], [0, 0, 1, 1], [], []>} : vector<8x32xbf16>, vector<32x432xbf16>, vector<8x432xf32> -> vector<8x432xf32>
    %109 = arith.addf %104, %108 : vector<8x432xf32>
    %c20 = arith.constant 20 : index
    %c0_70 = arith.constant 0 : index
    %c0_71 = arith.constant 0 : index
    %110 = vector.load %arg2[%c20, %c0_70, %c0_71] : memref<25x8x32xbf16, #tpu.memory_space<vmem>>, vector<1x8x32xbf16>
    %111 = vector.shape_cast %110 : vector<1x8x32xbf16> to vector<8x32xbf16>
    %112 = vector.extract_strided_slice %1 {offsets = [0, 48], sizes = [32, 432], strides = [1, 1]} : vector<32x640xbf16> to vector<32x432xbf16>
    %cst_72 = arith.constant dense<0.000000e+00> : vector<8x432xf32>
    %113 = tpu.matmul %111, %112, %cst_72 {dimension_numbers = #tpu.dot_dimension_numbers<[1], [0], [0], [1], [0, 0, 1, 1], [], []>} : vector<8x32xbf16>, vector<32x432xbf16>, vector<8x432xf32> -> vector<8x432xf32>
    %114 = arith.addf %109, %113 : vector<8x432xf32>
    %115 = vector.broadcast %2 : vector<8x1xf32> to vector<8x432xf32>
    %116 = arith.addf %114, %115 : vector<8x432xf32>
    %c0_73 = arith.constant 0 : index
    %c16_74 = arith.constant 16 : index
    %c0_75 = arith.constant 0 : index
    %117 = vector.load %arg4[%c0_73, %c16_74, %c0_75] : memref<1x32x432xf32, #tpu.memory_space<vmem>>, vector<1x8x432xf32>
    %118 = vector.shape_cast %117 : vector<1x8x432xf32> to vector<8x432xf32>
    %119 = vector.shape_cast %116 : vector<8x432xf32> to vector<1x8x432xf32>
    tpu.vector_store %arg4[%c0_73, %c16_74, %c0_75], %119 {strides = array<i32>} : memref<1x32x432xf32, #tpu.memory_space<vmem>>, vector<1x8x432xf32>,
    %c21 = arith.constant 21 : index
    %c0_76 = arith.constant 0 : index
    %c0_77 = arith.constant 0 : index
    %120 = vector.load %arg2[%c21, %c0_76, %c0_77] : memref<25x8x32xbf16, #tpu.memory_space<vmem>>, vector<1x8x32xbf16>
    %121 = vector.shape_cast %120 : vector<1x8x32xbf16> to vector<8x32xbf16>
    %122 = vector.extract_strided_slice %1 {offsets = [0, 125], sizes = [32, 432], strides = [1, 1]} : vector<32x640xbf16> to vector<32x432xbf16>
    %cst_78 = arith.constant dense<0.000000e+00> : vector<8x432xf32>
    %123 = tpu.matmul %121, %122, %cst_78 {dimension_numbers = #tpu.dot_dimension_numbers<[1], [0], [0], [1], [0, 0, 1, 1], [], []>} : vector<8x32xbf16>, vector<32x432xbf16>, vector<8x432xf32> -> vector<8x432xf32>
    %c22 = arith.constant 22 : index
    %c0_79 = arith.constant 0 : index
    %c0_80 = arith.constant 0 : index
    %124 = vector.load %arg2[%c22, %c0_79, %c0_80] : memref<25x8x32xbf16, #tpu.memory_space<vmem>>, vector<1x8x32xbf16>
    %125 = vector.shape_cast %124 : vector<1x8x32xbf16> to vector<8x32xbf16>
    %126 = vector.extract_strided_slice %1 {offsets = [0, 122], sizes = [32, 432], strides = [1, 1]} : vector<32x640xbf16> to vector<32x432xbf16>
    %cst_81 = arith.constant dense<0.000000e+00> : vector<8x432xf32>
    %127 = tpu.matmul %125, %126, %cst_81 {dimension_numbers = #tpu.dot_dimension_numbers<[1], [0], [0], [1], [0, 0, 1, 1], [], []>} : vector<8x32xbf16>, vector<32x432xbf16>, vector<8x432xf32> -> vector<8x432xf32>
    %128 = arith.addf %123, %127 : vector<8x432xf32>
    %c23 = arith.constant 23 : index
    %c0_82 = arith.constant 0 : index
    %c0_83 = arith.constant 0 : index
    %129 = vector.load %arg2[%c23, %c0_82, %c0_83] : memref<25x8x32xbf16, #tpu.memory_space<vmem>>, vector<1x8x32xbf16>
    %130 = vector.shape_cast %129 : vector<1x8x32xbf16> to vector<8x32xbf16>
    %131 = vector.extract_strided_slice %1 {offsets = [0, 53], sizes = [32, 432], strides = [1, 1]} : vector<32x640xbf16> to vector<32x432xbf16>
    %cst_84 = arith.constant dense<0.000000e+00> : vector<8x432xf32>
    %132 = tpu.matmul %130, %131, %cst_84 {dimension_numbers = #tpu.dot_dimension_numbers<[1], [0], [0], [1], [0, 0, 1, 1], [], []>} : vector<8x32xbf16>, vector<32x432xbf16>, vector<8x432xf32> -> vector<8x432xf32>
    %133 = arith.addf %128, %132 : vector<8x432xf32>
    %c24 = arith.constant 24 : index
    %c0_85 = arith.constant 0 : index
    %c0_86 = arith.constant 0 : index
    %134 = vector.load %arg2[%c24, %c0_85, %c0_86] : memref<25x8x32xbf16, #tpu.memory_space<vmem>>, vector<1x8x32xbf16>
    %135 = vector.shape_cast %134 : vector<1x8x32xbf16> to vector<8x32xbf16>
    %136 = vector.extract_strided_slice %1 {offsets = [0, 50], sizes = [32, 432], strides = [1, 1]} : vector<32x640xbf16> to vector<32x432xbf16>
    %cst_87 = arith.constant dense<0.000000e+00> : vector<8x432xf32>
    %137 = tpu.matmul %135, %136, %cst_87 {dimension_numbers = #tpu.dot_dimension_numbers<[1], [0], [0], [1], [0, 0, 1, 1], [], []>} : vector<8x32xbf16>, vector<32x432xbf16>, vector<8x432xf32> -> vector<8x432xf32>
    %138 = arith.addf %133, %137 : vector<8x432xf32>
    %139 = vector.broadcast %2 : vector<8x1xf32> to vector<8x432xf32>
    %140 = arith.addf %138, %139 : vector<8x432xf32>
    %c0_88 = arith.constant 0 : index
    %c24_89 = arith.constant 24 : index
    %c0_90 = arith.constant 0 : index
    %141 = vector.load %arg4[%c0_88, %c24_89, %c0_90] : memref<1x32x432xf32, #tpu.memory_space<vmem>>, vector<1x8x432xf32>
    %142 = vector.shape_cast %141 : vector<1x8x432xf32> to vector<8x432xf32>
    %143 = vector.shape_cast %140 : vector<8x432xf32> to vector<1x8x432xf32>
    tpu.vector_store %arg4[%c0_88, %c24_89, %c0_90], %143 {strides = array<i32>} : memref<1x32x432xf32, #tpu.memory_space<vmem>>, vector<1x8x432xf32>,
    return
  }
  func.func @transform_0(%arg0: i32) -> (i32, i32, i32) {
    %c0_i32 = arith.constant 0 : i32
    %c0_i32_0 = arith.constant 0 : i32
    %c0_i32_1 = arith.constant 0 : i32
    return %arg0, %c0_i32, %c0_i32_0 : i32, i32, i32
  }
  func.func @transform_1(%arg0: i32) -> (i32, i32, i32) {
    %c0_i32 = arith.constant 0 : i32
    %c0_i32_0 = arith.constant 0 : i32
    %c0_i32_1 = arith.constant 0 : i32
    %c0_i32_2 = arith.constant 0 : i32
    return %c0_i32, %c0_i32_0, %c0_i32_1 : i32, i32, i32
  }
  func.func @transform_2(%arg0: i32) -> (i32, i32) {
    %c0_i32 = arith.constant 0 : i32
    %c0_i32_0 = arith.constant 0 : i32
    %c0_i32_1 = arith.constant 0 : i32
    return %c0_i32, %c0_i32_0 : i32, i32
  }
  func.func @transform_3(%arg0: i32) -> (i32, i32, i32) {
    %c0_i32 = arith.constant 0 : i32
    %c0_i32_0 = arith.constant 0 : i32
    %c0_i32_1 = arith.constant 0 : i32
    return %arg0, %c0_i32, %c0_i32_0 : i32, i32, i32
  }
}

</mosaic_0001>

<llo_original>
// kernel: decoder_block_forward.4
$region0: #{decoder_block_forward.4}
  #allocation0 [shape = 'u32[]', space=smem, size = 0x4, offset = 0x4, fixed_abs, tag = 'smem constant byte address 0x4 - core index']
  #allocation1 [shape = 'u32[144,128]{1,0:T(1,128)}', space=vmem, size = 0x12000, scoped, tag = 'internal scratch']
  %s0 = inlined_call_operand.vmem [shape: bf16[2,32,256], index: 0, kind: input, shape index: {}]
  %s1 = inlined_call_operand.vmem [shape: bf16[9,32,32], index: 1, kind: input, shape index: {}]
  %s2 = inlined_call_operand.vmem [shape: f32[32,1], index: 2, kind: input, shape index: {}]
  %s3 = inlined_call_operand.vmem [shape: bf16[2,32,192], index: 3, kind: output, shape index: {}]
  %s4 = sld [smem:[#allocation0]]
  $region45: #{decoder_block_forward.4} parent=0
    _
  %s6 = ssub.s32 1, %s4
  %s7 = scalar_select 0, %s6, %s4
  loop: start=0, step=1, limit=4
  $region2: #{decoder_block_forward.4} parent=0 // loop_pre_header
    _
  $region3: #{decoder_block_forward.4} parent=0 // loop_header
    %s9 = sphi 0, %s13
    %p10 = scmp.ge.s32.totalorder %s9, 4
    %s19 = sphi 0, %s21
    %s22 = sphi 0, %s19
    %s23 = sphi 0, %s22
    %s39 = sphi 0, %s23
    %s43 = sphi 0, %s43
    %s45 = sphi 0, %s43
    %s46 = sphi 0, %s45
    %s60 = sphi 0, %s46
    %s64 = sphi 0, %s64
    %s66 = sphi 0, %s64
    %s67 = sphi 0, %s66
    %s81 = sphi 0, %s67
    %s87 = sphi 0, %s89
    %s90 = sphi 0, %s87
    %s91 = sphi 0, %s90
    %s107 = sphi 0, %s91
  $region4: #{decoder_block_forward.4} parent=0 // loop_header_branch
    %12 = sbr.rel (%p10) target = $region8
  $region5: #{decoder_block_forward.4} parent=0 // loop_body
    %s14 = ssub.s32 %s9, 1
    %s15 = ssub.s32 %s9, 2
    %s16 = sadd.s32 %s9, 1
    %s17 = ssub.s32 %s9, %s16
    %p18 = scmp.eq.s32.totalorder %s17, 0
    %s20 = sadd.s32 %s19, 1
    %s21 = scalar_select %p18, %s19, %s20
    %p24 = pneg %p18
    %p25 = scmp.eq.s32.totalorder %s9, 1
    %p26 = por %p24, %p25
    %p27 = scmp.ne.s32.totalorder %s19, %s22
    %p28 = scmp.eq.s32.totalorder %s9, 0
    %p29 = por %p27, %p28
    %p30 = scmp.ne.s32.totalorder %s19, %s22
    %p31 = scmp.eq.s32.totalorder %s14, 1
    %p32 = por %p30, %p31
    %p33 = scmp.ne.s32.totalorder %s22, %s23
    %p34 = scmp.eq.s32.totalorder %s14, 0
    %p35 = por %p33, %p34
    %p36 = scmp.ne.s32.totalorder %s22, %s23
    %p37 = scmp.eq.s32.totalorder %s15, 1
    %p38 = por %p36, %p37
    %p40 = scmp.ne.s32.totalorder %s23, %s39
    %p41 = scmp.eq.s32.totalorder %s15, 0
    %p42 = por %p40, %p41
    %s44 = sadd.s32 %s43, 1
    %p47 = scmp.eq.s32.totalorder %s9, 1
    %p48 = scmp.ne.s32.totalorder %s43, %s45
    %p49 = scmp.eq.s32.totalorder %s9, 0
    %p50 = por %p48, %p49
    %p51 = scmp.ne.s32.totalorder %s43, %s45
    %p52 = scmp.eq.s32.totalorder %s14, 1
    %p53 = por %p51, %p52
    %p54 = scmp.ne.s32.totalorder %s45, %s46
    %p55 = scmp.eq.s32.totalorder %s14, 0
    %p56 = por %p54, %p55
    %p57 = scmp.ne.s32.totalorder %s45, %s46
    %p58 = scmp.eq.s32.totalorder %s15, 1
    %p59 = por %p57, %p58
    %p61 = scmp.ne.s32.totalorder %s46, %s60
    %p62 = scmp.eq.s32.totalorder %s15, 0
    %p63 = por %p61, %p62
    %s65 = sadd.s32 %s64, 1
    %p68 = scmp.eq.s32.totalorder %s9, 1
    %p69 = scmp.ne.s32.totalorder %s64, %s66
    %p70 = scmp.eq.s32.totalorder %s9, 0
    %p71 = por %p69, %p70
    %p72 = scmp.ne.s32.totalorder %s64, %s66
    %p73 = scmp.eq.s32.totalorder %s14, 1
    %p74 = por %p72, %p73
    %p75 = scmp.ne.s32.totalorder %s66, %s67
    %p76 = scmp.eq.s32.totalorder %s14, 0
    %p77 = por %p75, %p76
    %p78 = scmp.ne.s32.totalorder %s66, %s67
    %p79 = scmp.eq.s32.totalorder %s15, 1
    %p80 = por %p78, %p79
    %p82 = scmp.ne.s32.totalorder %s67, %s81
    %p83 = scmp.eq.s32.totalorder %s15, 0
    %p84 = por %p82, %p83
    %s85 = ssub.s32 %s9, %s16
    %p86 = scmp.eq.s32.totalorder %s85, 0
    %s88 = sadd.s32 %s87, 1
    %s89 = scalar_select %p86, %s87, %s88
    %p92 = pneg %p86
    %p93 = scmp.eq.s32.totalorder %s9, 1
    %p94 = por %p92, %p93
    %p95 = scmp.ne.s32.totalorder %s87, %s90
    %p96 = scmp.eq.s32.totalorder %s9, 0
    %p97 = por %p95, %p96
    %p98 = scmp.ne.s32.totalorder %s87, %s90
    %p99 = scmp.eq.s32.totalorder %s14, 1
    %p100 = por %p98, %p99
    %p101 = scmp.ne.s32.totalorder %s90, %s91
    %p102 = scmp.eq.s32.totalorder %s14, 0
    %p103 = por %p101, %p102
    %p104 = scmp.ne.s32.totalorder %s90, %s91
    %p105 = scmp.eq.s32.totalorder %s15, 1
    %p106 = por %p104, %p105
    %p108 = scmp.ne.s32.totalorder %s91, %s107
    %p109 = scmp.eq.s32.totalorder %s15, 0
    %p110 = por %p108, %p109
    %p111 = scmp.le.s32.totalorder 1, %s9
    %p112 = scmp.lt.s32.totalorder %s9, 3
    %p113 = pnand %p111, %p112
    %p114 = pneg %p113
    // Predicated region
    $region9: #{decoder_block_forward.4} parent=5 // pred_check
      _
    $region10: #{decoder_block_forward.4} parent=5 // pred_check_branch
      %116 = sbr.rel (%p113) target = $region12
    $region11: #{decoder_block_forward.4} parent=5 // pred_region
      %s117 = ssub.s32 %s9, 1
      // Predicated region
      $region13: #{decoder_block_forward.4} parent=11 // pred_check
        %p118 = pneg %p56
      $region14: #{decoder_block_forward.4} parent=11 // pred_check_branch
        %120 = sbr.rel (%p118) target = $region16
      $region15: #{decoder_block_forward.4} parent=11 // pred_region
        _
      $region16: #{decoder_block_forward.4} parent=11 // pred_fallthru
        _
      // Predicated region
      $region17: #{decoder_block_forward.4} parent=11 // pred_check
        %p121 = pneg %p77
      $region18: #{decoder_block_forward.4} parent=11 // pred_check_branch
        %123 = sbr.rel (%p121) target = $region20
      $region19: #{decoder_block_forward.4} parent=11 // pred_region
        _
      $region20: #{decoder_block_forward.4} parent=11 // pred_fallthru
        _
    $region12: #{decoder_block_forward.4} parent=5 // pred_fallthru
      _
    %p124 = scmp.lt.s32.totalorder %s9, 2
    // Predicated region
    $region21: #{decoder_block_forward.4} parent=5 // pred_check
      %p125 = pneg %p124
    $region22: #{decoder_block_forward.4} parent=5 // pred_check_branch
      %127 = sbr.rel (%p125) target = $region24
    $region23: #{decoder_block_forward.4} parent=5 // pred_region
      // Predicated region
      $region25: #{decoder_block_forward.4} parent=23 // pred_check
        %p128 = pneg %p29
      $region26: #{decoder_block_forward.4} parent=23 // pred_check_branch
        %130 = sbr.rel (%p128) target = $region28
      $region27: #{decoder_block_forward.4} parent=23 // pred_region
        %p131 = scmp.lt.s32.totalorder %s9, 1
        %s132 = scalar_select %p131, %s9, 1
        %s133 = smul.addr %s132, 8
        %s134 = smul.addr %s133, 4
        %s135 = scalar_lea.vmem %s0, %s134
      $region28: #{decoder_block_forward.4} parent=23 // pred_fallthru
        _
    $region24: #{decoder_block_forward.4} parent=5 // pred_fallthru
      _
    %p136 = scmp.le.s32.totalorder 1, %s9
    %p137 = scmp.lt.s32.totalorder %s9, 3
    %p138 = pnand %p136, %p137
    %p139 = pneg %p138
    // Predicated region
    $region29: #{decoder_block_forward.4} parent=5 // pred_check
      _
    $region30: #{decoder_block_forward.4} parent=5 // pred_check_branch
      %141 = sbr.rel (%p138) target = $region32
    $region31: #{decoder_block_forward.4} parent=5 // pred_region
      %s142 = ssub.s32 %s9, 1
      %p143 = scmp.lt.s32.totalorder %s14, 1
      %s144 = scalar_select %p143, %s14, 1
      %s145 = smul.addr %s144, 8
      %s146 = smul.addr %s145, 4
      %s147 = scalar_lea.vmem %s0, %s146
      %p148 = pneg %p35
      %p149 = pneg %p32
      %p150 = pneg %p56
      %p151 = pneg %p53
      %p152 = pneg %p77
      %p153 = pneg %p74
      %p154 = pneg %p103
      %p155 = pneg %p100
      %p156 = scmp.lt.s32.totalorder %s14, 1
      %s157 = scalar_select %p156, %s14, 1
      %s158 = smul.addr %s157, 8
      %s159 = smul.addr %s158, 4
      %s160 = scalar_lea.vmem %s3, %s159
      %p161 = scmp.lt.s32.totalorder %s14, 1
      %s162 = scalar_select %p161, %s14, 1
      %s163 = smul.addr %s162, 8
      %s164 = smul.addr %s163, 4
      %s165 = scalar_lea.vmem %s0, %s164
      %p166 = scmp.lt.s32.totalorder %s14, 1
      %s167 = scalar_select %p166, %s14, 1
      %s168 = smul.addr %s167, 8
      %s169 = smul.addr %s168, 4
      %s170 = scalar_lea.vmem %s3, %s169
      %v172 = vld [vmem:[%s165] sm:$0xff]
      %v173 = vld [vmem:[%s165 + $0x8] sm:$0xff]
      %v174 = vld [vmem:[%s165 + $0x10] sm:$0xff]
      %v175 = vld [vmem:[%s165 + $0x18] sm:$0xff]
      %v176 = vld [vmem:[%s2] sm:$0xff]
      %v177 = vld [vmem:[%s2 + $0x8] sm:$0xff]
      %v178 = vld [vmem:[%s2 + $0x10] sm:$0xff]
      %v179 = vld [vmem:[%s2 + $0x18] sm:$0xff]
      %v180 = vld [vmem:[%s1] sm:$0xf]
      %v181 = vld [vmem:[%s1 + $0x4] sm:$0xf]
      %v182 = vld [vmem:[%s1 + $0x8] sm:$0xf]
      %v183 = vld [vmem:[%s1 + $0xc] sm:$0xf]
      %s184 = scalar_lea.vmem %s1, 16
      %v185 = vld [vmem:[%s184] sm:$0xf]
      %v186 = vld [vmem:[%s184 + $0x4] sm:$0xf]
      %v187 = vld [vmem:[%s184 + $0x8] sm:$0xf]
      %v188 = vld [vmem:[%s184 + $0xc] sm:$0xf]
      %v193 = vunpack.c.l.b16 %v185
      %v194 = vunpack.c.l.b16 %v186
      %v195 = vunpack.c.l.b16 %v187
      %v196 = vunpack.c.l.b16 %v188
      %v197 = vpack.c.b16 %v194, %v193
      %v198 = vpack.c.b16 %v196, %v195
      %v203 = vunpack.c.l.b16 %v172
      %v204 = vunpack.c.h.b16 %v172
      %v205 = vunpack.c.l.b16 %v173
      %v206 = vunpack.c.h.b16 %v173
      %v207 = vunpack.c.l.b16 %v174
      %v208 = vunpack.c.h.b16 %v174
      %v209 = vunpack.c.l.b16 %v175
      %v210 = vunpack.c.h.b16 %v175
      %v211 = vpack.c.b16 %v205, %v203
      %v212 = vpack.c.b16 %v206, %v204
      %v213 = vpack.c.b16 %v209, %v207
      %v214 = vpack.c.b16 %v210, %v208
      %215 = vrot.lane.b32.xlu0 %v211, 127
      %v216 = vpop.permute.xlu0 %215
      %217 = vrot.lane.b32.xlu0 %v212, 127
      %v218 = vpop.permute.xlu0 %217
      %219 = vrot.lane.b32.xlu0 %v213, 127
      %v220 = vpop.permute.xlu0 %219
      %221 = vrot.lane.b32.xlu0 %v214, 127
      %v222 = vpop.permute.xlu0 %221
      %vm223 = vcmask 1039360
      %v224 = vsel %vm223, %v216, %v218
      %v225 = vsel %vm223, %v220, %v222
      %vm230 = vcmask 261120
      %v232 = vsel %vm230, %v197, 0
      %v235 = vsel %vm230, %v198, 0
      %237 = vmatprep.subr.bf16.mxu0 0
      %238 = vmatpush1.bf16.msra.mxu0 0
      %239 = vmatprep.subr.bf16.mxu0 0
      %240 = vmatpush1.bf16.msra.mxu0 0
      %241 = vmatprep.subr.bf16.mxu0 0
      %242 = vmatpush1.bf16.msra.mxu0 0
      %243 = vmatprep.subr.bf16.mxu0 0
      %244 = vmatpush1.bf16.msra.mxu0 0
      %245 = vmatprep.subr.bf16.mxu0 0
      %246 = vmatpush1.bf16.msra.mxu0 0
      %247 = vmatprep.subr.bf16.mxu0 0
      %248 = vmatpush1.bf16.msra.mxu0 0
      %249 = vmatprep.subr.bf16.mxu0 %v222
      %250 = vmatpush1.bf16.msra.mxu0 %v225
      %251 = vmatprep.subr.bf16.mxu0 %v218
      %252 = vmatpush1.bf16.msra.mxu0 %v224
      %253 = vmatprep.subr.bf16.mxu0 0
      %254 = vmatpush2.bf16.msra.mxu0 0
      %255 = vmatprep.subr.bf16.mxu0 0
      %256 = vmatpush2.bf16.msra.mxu0 0
      %257 = vmatprep.subr.bf16.mxu0 0
      %258 = vmatpush2.bf16.msra.mxu0 0
      %259 = vmatprep.subr.bf16.mxu0 0
      %260 = vmatpush2.bf16.msra.mxu0 0
      %261 = vmatprep.subr.bf16.mxu0 0
      %262 = vmatpush2.bf16.msra.mxu0 0
      %263 = vmatprep.subr.bf16.mxu0 0
      %264 = vmatpush2.bf16.msra.mxu0 0
      %265 = vmatprep.subr.bf16.mxu0 0
      %266 = vmatpush2.bf16.msra.mxu0 0
      %267 = vmatprep.subr.bf16.mxu0 0
      %268 = vmatpush2.bf16.msra.mxu0 0
      %269 = vmatprep.mubr.bf16.mxu0 0
      %270 = vmatmul.mubr.bf16.gmra.mxu0 %v232
      %v271 = vpop.f32.mrf.mxu0
      %v272 = vadd.f32 0.0, %v271
      %v273 = vpop.f32.mrf.mxu0
      %v274 = vadd.f32 0.0, %v273
      %v275 = vpop.f32.mrf.mxu0
      %v276 = vadd.f32 0.0, %v275
      %v277 = vpop.f32.mrf.mxu0
      %v278 = vadd.f32 0.0, %v277
      %279 = vmatprep.mubr.bf16.mxu0 0
      %280 = vmatmul.mubr.bf16.gmra.mxu0 %v235
      %v281 = vpop.f32.mrf.mxu0
      %v282 = vadd.f32 0.0, %v281
      %v283 = vpop.f32.mrf.mxu0
      %v284 = vadd.f32 0.0, %v283
      %v285 = vpop.f32.mrf.mxu0
      %v286 = vadd.f32 0.0, %v285
      %v287 = vpop.f32.mrf.mxu0
      %v288 = vadd.f32 0.0, %v287
      %289 = vdwg.mxu0
      %v294 = vunpack.c.l.b16 %v180
      %v295 = vunpack.c.l.b16 %v181
      %v296 = vunpack.c.l.b16 %v182
      %v297 = vunpack.c.l.b16 %v183
      %v298 = vpack.c.b16 %v295, %v294
      %v299 = vpack.c.b16 %v297, %v296
      %v305 = vsel %vm230, %v298, 0
      %v308 = vsel %vm230, %v299, 0
      %310 = vmatprep.subr.bf16.mxu0 0
      %311 = vmatpush1.bf16.msra.mxu0 0
      %312 = vmatprep.subr.bf16.mxu0 0
      %313 = vmatpush1.bf16.msra.mxu0 0
      %314 = vmatprep.subr.bf16.mxu0 0
      %315 = vmatpush1.bf16.msra.mxu0 0
      %316 = vmatprep.subr.bf16.mxu0 0
      %317 = vmatpush1.bf16.msra.mxu0 0
      %318 = vmatprep.subr.bf16.mxu0 0
      %319 = vmatpush1.bf16.msra.mxu0 0
      %320 = vmatprep.subr.bf16.mxu0 0
      %321 = vmatpush1.bf16.msra.mxu0 0
      %322 = vmatprep.subr.bf16.mxu0 %v214
      %323 = vmatpush1.bf16.msra.mxu0 %v213
      %324 = vmatprep.subr.bf16.mxu0 %v212
      %325 = vmatpush1.bf16.msra.mxu0 %v211
      %326 = vmatprep.subr.bf16.mxu0 0
      %327 = vmatpush2.bf16.msra.mxu0 0
      %328 = vmatprep.subr.bf16.mxu0 0
      %329 = vmatpush2.bf16.msra.mxu0 0
      %330 = vmatprep.subr.bf16.mxu0 0
      %331 = vmatpush2.bf16.msra.mxu0 0
      %332 = vmatprep.subr.bf16.mxu0 0
      %333 = vmatpush2.bf16.msra.mxu0 0
      %334 = vmatprep.subr.bf16.mxu0 0
      %335 = vmatpush2.bf16.msra.mxu0 0
      %336 = vmatprep.subr.bf16.mxu0 0
      %337 = vmatpush2.bf16.msra.mxu0 0
      %338 = vmatprep.subr.bf16.mxu0 0
      %339 = vmatpush2.bf16.msra.mxu0 0
      %340 = vmatprep.subr.bf16.mxu0 0
      %341 = vmatpush2.bf16.msra.mxu0 0
      %342 = vmatprep.mubr.bf16.mxu0 0
      %343 = vmatmul.mubr.bf16.gmra.mxu0 %v305
      %v344 = vpop.f32.mrf.mxu0
      %v345 = vadd.f32 %v272, %v344
      %v346 = vpop.f32.mrf.mxu0
      %v347 = vadd.f32 %v274, %v346
      %v348 = vpop.f32.mrf.mxu0
      %v349 = vadd.f32 %v276, %v348
      %v350 = vpop.f32.mrf.mxu0
      %v351 = vadd.f32 %v278, %v350
      %352 = vmatprep.mubr.bf16.mxu0 0
      %353 = vmatmul.mubr.bf16.gmra.mxu0 %v308
      %v354 = vpop.f32.mrf.mxu0
      %v355 = vadd.f32 %v282, %v354
      %v356 = vpop.f32.mrf.mxu0
      %v357 = vadd.f32 %v284, %v356
      %v358 = vpop.f32.mrf.mxu0
      %v359 = vadd.f32 %v286, %v358
      %v360 = vpop.f32.mrf.mxu0
      %v361 = vadd.f32 %v288, %v360
      %362 = vdwg.mxu0
      %s363 = scalar_lea.vmem %s1, 32
      %v364 = vld [vmem:[%s363] sm:$0xf]
      %v365 = vld [vmem:[%s363 + $0x4] sm:$0xf]
      %v366 = vld [vmem:[%s363 + $0x8] sm:$0xf]
      %v367 = vld [vmem:[%s363 + $0xc] sm:$0xf]
      %v372 = vunpack.c.l.b16 %v364
      %v373 = vunpack.c.l.b16 %v365
      %v374 = vunpack.c.l.b16 %v366
      %v375 = vunpack.c.l.b16 %v367
      %v376 = vpack.c.b16 %v373, %v372
      %v377 = vpack.c.b16 %v375, %v374
      %378 = vrot.lane.b32.xlu0 %v211, 126
      %v379 = vpop.permute.xlu0 %378
      %380 = vrot.lane.b32.xlu0 %v212, 126
      %v381 = vpop.permute.xlu0 %380
      %382 = vrot.lane.b32.xlu0 %v213, 126
      %v383 = vpop.permute.xlu0 %382
      %384 = vrot.lane.b32.xlu0 %v214, 126
      %v385 = vpop.permute.xlu0 %384
      %vm386 = vcmask 1031168
      %v387 = vsel %vm386, %v379, %v381
      %v388 = vsel %vm386, %v383, %v385
      %v394 = vsel %vm230, %v376, 0
      %v397 = vsel %vm230, %v377, 0
      %399 = vmatprep.subr.bf16.mxu0 0
      %400 = vmatpush1.bf16.msra.mxu0 0
      %401 = vmatprep.subr.bf16.mxu0 0
      %402 = vmatpush1.bf16.msra.mxu0 0
      %403 = vmatprep.subr.bf16.mxu0 0
      %404 = vmatpush1.bf16.msra.mxu0 0
      %405 = vmatprep.subr.bf16.mxu0 0
      %406 = vmatpush1.bf16.msra.mxu0 0
      %407 = vmatprep.subr.bf16.mxu0 0
      %408 = vmatpush1.bf16.msra.mxu0 0
      %409 = vmatprep.subr.bf16.mxu0 0
      %410 = vmatpush1.bf16.msra.mxu0 0
      %411 = vmatprep.subr.bf16.mxu0 %v385
      %412 = vmatpush1.bf16.msra.mxu0 %v388
      %413 = vmatprep.subr.bf16.mxu0 %v381
      %414 = vmatpush1.bf16.msra.mxu0 %v387
      %415 = vmatprep.subr.bf16.mxu0 0
      %416 = vmatpush2.bf16.msra.mxu0 0
      %417 = vmatprep.subr.bf16.mxu0 0
      %418 = vmatpush2.bf16.msra.mxu0 0
      %419 = vmatprep.subr.bf16.mxu0 0
      %420 = vmatpush2.bf16.msra.mxu0 0
      %421 = vmatprep.subr.bf16.mxu0 0
      %422 = vmatpush2.bf16.msra.mxu0 0
      %423 = vmatprep.subr.bf16.mxu0 0
      %424 = vmatpush2.bf16.msra.mxu0 0
      %425 = vmatprep.subr.bf16.mxu0 0
      %426 = vmatpush2.bf16.msra.mxu0 0
      %427 = vmatprep.subr.bf16.mxu0 0
      %428 = vmatpush2.bf16.msra.mxu0 0
      %429 = vmatprep.subr.bf16.mxu0 0
      %430 = vmatpush2.bf16.msra.mxu0 0
      %431 = vmatprep.mubr.bf16.mxu0 0
      %432 = vmatmul.mubr.bf16.gmra.mxu0 %v394
      %v433 = vpop.f32.mrf.mxu0
      %v434 = vadd.f32 0.0, %v433
      %v435 = vpop.f32.mrf.mxu0
      %v436 = vadd.f32 0.0, %v435
      %v437 = vpop.f32.mrf.mxu0
      %v438 = vadd.f32 0.0, %v437
      %v439 = vpop.f32.mrf.mxu0
      %v440 = vadd.f32 0.0, %v439
      %441 = vmatprep.mubr.bf16.mxu0 0
      %442 = vmatmul.mubr.bf16.gmra.mxu0 %v397
      %v443 = vpop.f32.mrf.mxu0
      %v444 = vadd.f32 0.0, %v443
      %v445 = vpop.f32.mrf.mxu0
      %v446 = vadd.f32 0.0, %v445
      %v447 = vpop.f32.mrf.mxu0
      %v448 = vadd.f32 0.0, %v447
      %v449 = vpop.f32.mrf.mxu0
      %v450 = vadd.f32 0.0, %v449
      %451 = vdwg.mxu0
      %v452 = vadd.f32 %v345, %v434
      %v453 = vadd.f32 %v347, %v436
      %v454 = vadd.f32 %v349, %v438
      %v455 = vadd.f32 %v351, %v440
      %v456 = vadd.f32 %v355, %v444
      %v457 = vadd.f32 %v357, %v446
      %v458 = vadd.f32 %v359, %v448
      %v459 = vadd.f32 %v361, %v450
      %s460 = scalar_lea.vmem %s1, 48
      %v461 = vld [vmem:[%s460] sm:$0xf]
      %v462 = vld [vmem:[%s460 + $0x4] sm:$0xf]
      %v463 = vld [vmem:[%s460 + $0x8] sm:$0xf]
      %v464 = vld [vmem:[%s460 + $0xc] sm:$0xf]
      %v469 = vunpack.c.l.b16 %v461
      %v470 = vunpack.c.l.b16 %v462
      %v471 = vunpack.c.l.b16 %v463
      %v472 = vunpack.c.l.b16 %v464
      %v473 = vpack.c.b16 %v470, %v469
      %v474 = vpack.c.b16 %v472, %v471
      %475 = vrot.lane.b32.xlu0 %v211, 112
      %v476 = vpop.permute.xlu0 %475
      %477 = vrot.lane.b32.xlu0 %v212, 112
      %v478 = vpop.permute.xlu0 %477
      %479 = vrot.lane.b32.xlu0 %v213, 112
      %v480 = vpop.permute.xlu0 %479
      %481 = vrot.lane.b32.xlu0 %v214, 112
      %v482 = vpop.permute.xlu0 %481
      %vm483 = vcmask 916480
      %v484 = vsel %vm483, %v476, %v478
      %v485 = vsel %vm483, %v480, %v482
      %v491 = vsel %vm230, %v473, 0
      %v494 = vsel %vm230, %v474, 0
      %496 = vmatprep.subr.bf16.mxu0 0
      %497 = vmatpush1.bf16.msra.mxu0 0
      %498 = vmatprep.subr.bf16.mxu0 0
      %499 = vmatpush1.bf16.msra.mxu0 0
      %500 = vmatprep.subr.bf16.mxu0 0
      %501 = vmatpush1.bf16.msra.mxu0 0
      %502 = vmatprep.subr.bf16.mxu0 0
      %503 = vmatpush1.bf16.msra.mxu0 0
      %504 = vmatprep.subr.bf16.mxu0 0
      %505 = vmatpush1.bf16.msra.mxu0 0
      %506 = vmatprep.subr.bf16.mxu0 0
      %507 = vmatpush1.bf16.msra.mxu0 0
      %508 = vmatprep.subr.bf16.mxu0 %v482
      %509 = vmatpush1.bf16.msra.mxu0 %v485
      %510 = vmatprep.subr.bf16.mxu0 %v478
      %511 = vmatpush1.bf16.msra.mxu0 %v484
      %512 = vmatprep.subr.bf16.mxu0 0
      %513 = vmatpush2.bf16.msra.mxu0 0
      %514 = vmatprep.subr.bf16.mxu0 0
      %515 = vmatpush2.bf16.msra.mxu0 0
      %516 = vmatprep.subr.bf16.mxu0 0
      %517 = vmatpush2.bf16.msra.mxu0 0
      %518 = vmatprep.subr.bf16.mxu0 0
      %519 = vmatpush2.bf16.msra.mxu0 0
      %520 = vmatprep.subr.bf16.mxu0 0
      %521 = vmatpush2.bf16.msra.mxu0 0
      %522 = vmatprep.subr.bf16.mxu0 0
      %523 = vmatpush2.bf16.msra.mxu0 0
      %524 = vmatprep.subr.bf16.mxu0 0
      %525 = vmatpush2.bf16.msra.mxu0 0
      %526 = vmatprep.subr.bf16.mxu0 0
      %527 = vmatpush2.bf16.msra.mxu0 0
      %528 = vmatprep.mubr.bf16.mxu0 0
      %529 = vmatmul.mubr.bf16.gmra.mxu0 %v491
      %v530 = vpop.f32.mrf.mxu0
      %v531 = vadd.f32 0.0, %v530
      %v532 = vpop.f32.mrf.mxu0
      %v533 = vadd.f32 0.0, %v532
      %v534 = vpop.f32.mrf.mxu0
      %v535 = vadd.f32 0.0, %v534
      %v536 = vpop.f32.mrf.mxu0
      %v537 = vadd.f32 0.0, %v536
      %538 = vmatprep.mubr.bf16.mxu0 0
      %539 = vmatmul.mubr.bf16.gmra.mxu0 %v494
      %v540 = vpop.f32.mrf.mxu0
      %v541 = vadd.f32 0.0, %v540
      %v542 = vpop.f32.mrf.mxu0
      %v543 = vadd.f32 0.0, %v542
      %v544 = vpop.f32.mrf.mxu0
      %v545 = vadd.f32 0.0, %v544
      %v546 = vpop.f32.mrf.mxu0
      %v547 = vadd.f32 0.0, %v546
      %548 = vdwg.mxu0
      %v549 = vadd.f32 %v452, %v531
      %v550 = vadd.f32 %v453, %v533
      %v551 = vadd.f32 %v454, %v535
      %v552 = vadd.f32 %v455, %v537
      %v553 = vadd.f32 %v456, %v541
      %v554 = vadd.f32 %v457, %v543
      %v555 = vadd.f32 %v458, %v545
      %v556 = vadd.f32 %v459, %v547
      %s557 = scalar_lea.vmem %s1, 64
      %v558 = vld [vmem:[%s557] sm:$0xf]
      %v559 = vld [vmem:[%s557 + $0x4] sm:$0xf]
      %v560 = vld [vmem:[%s557 + $0x8] sm:$0xf]
      %v561 = vld [vmem:[%s557 + $0xc] sm:$0xf]
      %v566 = vunpack.c.l.b16 %v558
      %v567 = vunpack.c.l.b16 %v559
      %v568 = vunpack.c.l.b16 %v560
      %v569 = vunpack.c.l.b16 %v561
      %v570 = vpack.c.b16 %v567, %v566
      %v571 = vpack.c.b16 %v569, %v568
      %572 = vrot.lane.b32.xlu0 %v211, 111
      %v573 = vpop.permute.xlu0 %572
      %574 = vrot.lane.b32.xlu0 %v212, 111
      %v575 = vpop.permute.xlu0 %574
      %576 = vrot.lane.b32.xlu0 %v213, 111
      %v577 = vpop.permute.xlu0 %576
      %578 = vrot.lane.b32.xlu0 %v214, 111
      %v579 = vpop.permute.xlu0 %578
      %vm580 = vcmask 908288
      %v581 = vsel %vm580, %v573, %v575
      %v582 = vsel %vm580, %v577, %v579
      %v588 = vsel %vm230, %v570, 0
      %v591 = vsel %vm230, %v571, 0
      %593 = vmatprep.subr.bf16.mxu0 0
      %594 = vmatpush1.bf16.msra.mxu0 0
      %595 = vmatprep.subr.bf16.mxu0 0
      %596 = vmatpush1.bf16.msra.mxu0 0
      %597 = vmatprep.subr.bf16.mxu0 0
      %598 = vmatpush1.bf16.msra.mxu0 0
      %599 = vmatprep.subr.bf16.mxu0 0
      %600 = vmatpush1.bf16.msra.mxu0 0
      %601 = vmatprep.subr.bf16.mxu0 0
      %602 = vmatpush1.bf16.msra.mxu0 0
      %603 = vmatprep.subr.bf16.mxu0 0
      %604 = vmatpush1.bf16.msra.mxu0 0
      %605 = vmatprep.subr.bf16.mxu0 %v579
      %606 = vmatpush1.bf16.msra.mxu0 %v582
      %607 = vmatprep.subr.bf16.mxu0 %v575
      %608 = vmatpush1.bf16.msra.mxu0 %v581
      %609 = vmatprep.subr.bf16.mxu0 0
      %610 = vmatpush2.bf16.msra.mxu0 0
      %611 = vmatprep.subr.bf16.mxu0 0
      %612 = vmatpush2.bf16.msra.mxu0 0
      %613 = vmatprep.subr.bf16.mxu0 0
      %614 = vmatpush2.bf16.msra.mxu0 0
      %615 = vmatprep.subr.bf16.mxu0 0
      %616 = vmatpush2.bf16.msra.mxu0 0
      %617 = vmatprep.subr.bf16.mxu0 0
      %618 = vmatpush2.bf16.msra.mxu0 0
      %619 = vmatprep.subr.bf16.mxu0 0
      %620 = vmatpush2.bf16.msra.mxu0 0
      %621 = vmatprep.subr.bf16.mxu0 0
      %622 = vmatpush2.bf16.msra.mxu0 0
      %623 = vmatprep.subr.bf16.mxu0 0
      %624 = vmatpush2.bf16.msra.mxu0 0
      %625 = vmatprep.mubr.bf16.mxu0 0
      %626 = vmatmul.mubr.bf16.gmra.mxu0 %v588
      %v627 = vpop.f32.mrf.mxu0
      %v628 = vadd.f32 0.0, %v627
      %v629 = vpop.f32.mrf.mxu0
      %v630 = vadd.f32 0.0, %v629
      %v631 = vpop.f32.mrf.mxu0
      %v632 = vadd.f32 0.0, %v631
      %v633 = vpop.f32.mrf.mxu0
      %v634 = vadd.f32 0.0, %v633
      %635 = vmatprep.mubr.bf16.mxu0 0
      %636 = vmatmul.mubr.bf16.gmra.mxu0 %v591
      %v637 = vpop.f32.mrf.mxu0
      %v638 = vadd.f32 0.0, %v637
      %v639 = vpop.f32.mrf.mxu0
      %v640 = vadd.f32 0.0, %v639
      %v641 = vpop.f32.mrf.mxu0
      %v642 = vadd.f32 0.0, %v641
      %v643 = vpop.f32.mrf.mxu0
      %v644 = vadd.f32 0.0, %v643
      %645 = vdwg.mxu0
      %v646 = vadd.f32 %v549, %v628
      %v647 = vadd.f32 %v550, %v630
      %v648 = vadd.f32 %v551, %v632
      %v649 = vadd.f32 %v552, %v634
      %v650 = vadd.f32 %v553, %v638
      %v651 = vadd.f32 %v554, %v640
      %v652 = vadd.f32 %v555, %v642
      %v653 = vadd.f32 %v556, %v644
      %s654 = scalar_lea.vmem %s1, 80
      %v655 = vld [vmem:[%s654] sm:$0xf]
      %v656 = vld [vmem:[%s654 + $0x4] sm:$0xf]
      %v657 = vld [vmem:[%s654 + $0x8] sm:$0xf]
      %v658 = vld [vmem:[%s654 + $0xc] sm:$0xf]
      %v663 = vunpack.c.l.b16 %v655
      %v664 = vunpack.c.l.b16 %v656
      %v665 = vunpack.c.l.b16 %v657
      %v666 = vunpack.c.l.b16 %v658
      %v667 = vpack.c.b16 %v664, %v663
      %v668 = vpack.c.b16 %v666, %v665
      %669 = vrot.lane.b32.xlu0 %v211, 110
      %v670 = vpop.permute.xlu0 %669
      %671 = vrot.lane.b32.xlu0 %v212, 110
      %v672 = vpop.permute.xlu0 %671
      %673 = vrot.lane.b32.xlu0 %v213, 110
      %v674 = vpop.permute.xlu0 %673
      %675 = vrot.lane.b32.xlu0 %v214, 110
      %v676 = vpop.permute.xlu0 %675
      %vm677 = vcmask 900096
      %v678 = vsel %vm677, %v670, %v672
      %v679 = vsel %vm677, %v674, %v676
      %v685 = vsel %vm230, %v667, 0
      %v688 = vsel %vm230, %v668, 0
      %690 = vmatprep.subr.bf16.mxu0 0
      %691 = vmatpush1.bf16.msra.mxu0 0
      %692 = vmatprep.subr.bf16.mxu0 0
      %693 = vmatpush1.bf16.msra.mxu0 0
      %694 = vmatprep.subr.bf16.mxu0 0
      %695 = vmatpush1.bf16.msra.mxu0 0
      %696 = vmatprep.subr.bf16.mxu0 0
      %697 = vmatpush1.bf16.msra.mxu0 0
      %698 = vmatprep.subr.bf16.mxu0 0
      %699 = vmatpush1.bf16.msra.mxu0 0
      %700 = vmatprep.subr.bf16.mxu0 0
      %701 = vmatpush1.bf16.msra.mxu0 0
      %702 = vmatprep.subr.bf16.mxu0 %v676
      %703 = vmatpush1.bf16.msra.mxu0 %v679
      %704 = vmatprep.subr.bf16.mxu0 %v672
      %705 = vmatpush1.bf16.msra.mxu0 %v678
      %706 = vmatprep.subr.bf16.mxu0 0
      %707 = vmatpush2.bf16.msra.mxu0 0
      %708 = vmatprep.subr.bf16.mxu0 0
      %709 = vmatpush2.bf16.msra.mxu0 0
      %710 = vmatprep.subr.bf16.mxu0 0
      %711 = vmatpush2.bf16.msra.mxu0 0
      %712 = vmatprep.subr.bf16.mxu0 0
      %713 = vmatpush2.bf16.msra.mxu0 0
      %714 = vmatprep.subr.bf16.mxu0 0
      %715 = vmatpush2.bf16.msra.mxu0 0
      %716 = vmatprep.subr.bf16.mxu0 0
      %717 = vmatpush2.bf16.msra.mxu0 0
      %718 = vmatprep.subr.bf16.mxu0 0
      %719 = vmatpush2.bf16.msra.mxu0 0
      %720 = vmatprep.subr.bf16.mxu0 0
      %721 = vmatpush2.bf16.msra.mxu0 0
      %722 = vmatprep.mubr.bf16.mxu0 0
      %723 = vmatmul.mubr.bf16.gmra.mxu0 %v685
      %v724 = vpop.f32.mrf.mxu0
      %v725 = vadd.f32 0.0, %v724
      %v726 = vpop.f32.mrf.mxu0
      %v727 = vadd.f32 0.0, %v726
      %v728 = vpop.f32.mrf.mxu0
      %v729 = vadd.f32 0.0, %v728
      %v730 = vpop.f32.mrf.mxu0
      %v731 = vadd.f32 0.0, %v730
      %732 = vmatprep.mubr.bf16.mxu0 0
      %733 = vmatmul.mubr.bf16.gmra.mxu0 %v688
      %v734 = vpop.f32.mrf.mxu0
      %v735 = vadd.f32 0.0, %v734
      %v736 = vpop.f32.mrf.mxu0
      %v737 = vadd.f32 0.0, %v736
      %v738 = vpop.f32.mrf.mxu0
      %v739 = vadd.f32 0.0, %v738
      %v740 = vpop.f32.mrf.mxu0
      %v741 = vadd.f32 0.0, %v740
      %742 = vdwg.mxu0
      %v743 = vadd.f32 %v646, %v725
      %v744 = vadd.f32 %v647, %v727
      %v745 = vadd.f32 %v648, %v729
      %v746 = vadd.f32 %v649, %v731
      %v747 = vadd.f32 %v650, %v735
      %v748 = vadd.f32 %v651, %v737
      %v749 = vadd.f32 %v652, %v739
      %v750 = vadd.f32 %v653, %v741
      %s751 = scalar_lea.vmem %s1, 96
      %v752 = vld [vmem:[%s751] sm:$0xf]
      %v753 = vld [vmem:[%s751 + $0x4] sm:$0xf]
      %v754 = vld [vmem:[%s751 + $0x8] sm:$0xf]
      %v755 = vld [vmem:[%s751 + $0xc] sm:$0xf]
      %v760 = vunpack.c.l.b16 %v752
      %v761 = vunpack.c.l.b16 %v753
      %v762 = vunpack.c.l.b16 %v754
      %v763 = vunpack.c.l.b16 %v755
      %v764 = vpack.c.b16 %v761, %v760
      %v765 = vpack.c.b16 %v763, %v762
      %766 = vrot.lane.b32.xlu0 %v211, 96
      %v767 = vpop.permute.xlu0 %766
      %768 = vrot.lane.b32.xlu0 %v212, 96
      %v769 = vpop.permute.xlu0 %768
      %770 = vrot.lane.b32.xlu0 %v213, 96
      %v771 = vpop.permute.xlu0 %770
      %772 = vrot.lane.b32.xlu0 %v214, 96
      %v773 = vpop.permute.xlu0 %772
      %vm774 = vcmask 785408
      %v775 = vsel %vm774, %v767, %v769
      %v776 = vsel %vm774, %v771, %v773
      %v782 = vsel %vm230, %v764, 0
      %v785 = vsel %vm230, %v765, 0
      %787 = vmatprep.subr.bf16.mxu0 0
      %788 = vmatpush1.bf16.msra.mxu0 0
      %789 = vmatprep.subr.bf16.mxu0 0
      %790 = vmatpush1.bf16.msra.mxu0 0
      %791 = vmatprep.subr.bf16.mxu0 0
      %792 = vmatpush1.bf16.msra.mxu0 0
      %793 = vmatprep.subr.bf16.mxu0 0
      %794 = vmatpush1.bf16.msra.mxu0 0
      %795 = vmatprep.subr.bf16.mxu0 0
      %796 = vmatpush1.bf16.msra.mxu0 0
      %797 = vmatprep.subr.bf16.mxu0 0
      %798 = vmatpush1.bf16.msra.mxu0 0
      %799 = vmatprep.subr.bf16.mxu0 %v773
      %800 = vmatpush1.bf16.msra.mxu0 %v776
      %801 = vmatprep.subr.bf16.mxu0 %v769
      %802 = vmatpush1.bf16.msra.mxu0 %v775
      %803 = vmatprep.subr.bf16.mxu0 0
      %804 = vmatpush2.bf16.msra.mxu0 0
      %805 = vmatprep.subr.bf16.mxu0 0
      %806 = vmatpush2.bf16.msra.mxu0 0
      %807 = vmatprep.subr.bf16.mxu0 0
      %808 = vmatpush2.bf16.msra.mxu0 0
      %809 = vmatprep.subr.bf16.mxu0 0
      %810 = vmatpush2.bf16.msra.mxu0 0
      %811 = vmatprep.subr.bf16.mxu0 0
      %812 = vmatpush2.bf16.msra.mxu0 0
      %813 = vmatprep.subr.bf16.mxu0 0
      %814 = vmatpush2.bf16.msra.mxu0 0
      %815 = vmatprep.subr.bf16.mxu0 0
      %816 = vmatpush2.bf16.msra.mxu0 0
      %817 = vmatprep.subr.bf16.mxu0 0
      %818 = vmatpush2.bf16.msra.mxu0 0
      %819 = vmatprep.mubr.bf16.mxu0 0
      %820 = vmatmul.mubr.bf16.gmra.mxu0 %v782
      %v821 = vpop.f32.mrf.mxu0
      %v822 = vadd.f32 0.0, %v821
      %v823 = vpop.f32.mrf.mxu0
      %v824 = vadd.f32 0.0, %v823
      %v825 = vpop.f32.mrf.mxu0
      %v826 = vadd.f32 0.0, %v825
      %v827 = vpop.f32.mrf.mxu0
      %v828 = vadd.f32 0.0, %v827
      %829 = vmatprep.mubr.bf16.mxu0 0
      %830 = vmatmul.mubr.bf16.gmra.mxu0 %v785
      %v831 = vpop.f32.mrf.mxu0
      %v832 = vadd.f32 0.0, %v831
      %v833 = vpop.f32.mrf.mxu0
      %v834 = vadd.f32 0.0, %v833
      %v835 = vpop.f32.mrf.mxu0
      %v836 = vadd.f32 0.0, %v835
      %v837 = vpop.f32.mrf.mxu0
      %v838 = vadd.f32 0.0, %v837
      %839 = vdwg.mxu0
      %v840 = vadd.f32 %v743, %v822
      %v841 = vadd.f32 %v744, %v824
      %v842 = vadd.f32 %v745, %v826
      %v843 = vadd.f32 %v746, %v828
      %v844 = vadd.f32 %v747, %v832
      %v845 = vadd.f32 %v748, %v834
      %v846 = vadd.f32 %v749, %v836
      %v847 = vadd.f32 %v750, %v838
      %s848 = scalar_lea.vmem %s1, 112
      %v849 = vld [vmem:[%s848] sm:$0xf]
      %v850 = vld [vmem:[%s848 + $0x4] sm:$0xf]
      %v851 = vld [vmem:[%s848 + $0x8] sm:$0xf]
      %v852 = vld [vmem:[%s848 + $0xc] sm:$0xf]
      %v857 = vunpack.c.l.b16 %v849
      %v858 = vunpack.c.l.b16 %v850
      %v859 = vunpack.c.l.b16 %v851
      %v860 = vunpack.c.l.b16 %v852
      %v861 = vpack.c.b16 %v858, %v857
      %v862 = vpack.c.b16 %v860, %v859
      %863 = vrot.lane.b32.xlu0 %v211, 95
      %v864 = vpop.permute.xlu0 %863
      %865 = vrot.lane.b32.xlu0 %v212, 95
      %v866 = vpop.permute.xlu0 %865
      %867 = vrot.lane.b32.xlu0 %v213, 95
      %v868 = vpop.permute.xlu0 %867
      %869 = vrot.lane.b32.xlu0 %v214, 95
      %v870 = vpop.permute.xlu0 %869
      %vm871 = vcmask 777216
      %v872 = vsel %vm871, %v864, %v866
      %v873 = vsel %vm871, %v868, %v870
      %v879 = vsel %vm230, %v861, 0
      %v882 = vsel %vm230, %v862, 0
      %884 = vmatprep.subr.bf16.mxu0 0
      %885 = vmatpush1.bf16.msra.mxu0 0
      %886 = vmatprep.subr.bf16.mxu0 0
      %887 = vmatpush1.bf16.msra.mxu0 0
      %888 = vmatprep.subr.bf16.mxu0 0
      %889 = vmatpush1.bf16.msra.mxu0 0
      %890 = vmatprep.subr.bf16.mxu0 0
      %891 = vmatpush1.bf16.msra.mxu0 0
      %892 = vmatprep.subr.bf16.mxu0 0
      %893 = vmatpush1.bf16.msra.mxu0 0
      %894 = vmatprep.subr.bf16.mxu0 0
      %895 = vmatpush1.bf16.msra.mxu0 0
      %896 = vmatprep.subr.bf16.mxu0 %v870
      %897 = vmatpush1.bf16.msra.mxu0 %v873
      %898 = vmatprep.subr.bf16.mxu0 %v866
      %899 = vmatpush1.bf16.msra.mxu0 %v872
      %900 = vmatprep.subr.bf16.mxu0 0
      %901 = vmatpush2.bf16.msra.mxu0 0
      %902 = vmatprep.subr.bf16.mxu0 0
      %903 = vmatpush2.bf16.msra.mxu0 0
      %904 = vmatprep.subr.bf16.mxu0 0
      %905 = vmatpush2.bf16.msra.mxu0 0
      %906 = vmatprep.subr.bf16.mxu0 0
      %907 = vmatpush2.bf16.msra.mxu0 0
      %908 = vmatprep.subr.bf16.mxu0 0
      %909 = vmatpush2.bf16.msra.mxu0 0
      %910 = vmatprep.subr.bf16.mxu0 0
      %911 = vmatpush2.bf16.msra.mxu0 0
      %912 = vmatprep.subr.bf16.mxu0 0
      %913 = vmatpush2.bf16.msra.mxu0 0
      %914 = vmatprep.subr.bf16.mxu0 0
      %915 = vmatpush2.bf16.msra.mxu0 0
      %916 = vmatprep.mubr.bf16.mxu0 0
      %917 = vmatmul.mubr.bf16.gmra.mxu0 %v879
      %v918 = vpop.f32.mrf.mxu0
      %v919 = vadd.f32 0.0, %v918
      %v920 = vpop.f32.mrf.mxu0
      %v921 = vadd.f32 0.0, %v920
      %v922 = vpop.f32.mrf.mxu0
      %v923 = vadd.f32 0.0, %v922
      %v924 = vpop.f32.mrf.mxu0
      %v925 = vadd.f32 0.0, %v924
      %926 = vmatprep.mubr.bf16.mxu0 0
      %927 = vmatmul.mubr.bf16.gmra.mxu0 %v882
      %v928 = vpop.f32.mrf.mxu0
      %v929 = vadd.f32 0.0, %v928
      %v930 = vpop.f32.mrf.mxu0
      %v931 = vadd.f32 0.0, %v930
      %v932 = vpop.f32.mrf.mxu0
      %v933 = vadd.f32 0.0, %v932
      %v934 = vpop.f32.mrf.mxu0
      %v935 = vadd.f32 0.0, %v934
      %936 = vdwg.mxu0
      %v937 = vadd.f32 %v840, %v919
      %v938 = vadd.f32 %v841, %v921
      %v939 = vadd.f32 %v842, %v923
      %v940 = vadd.f32 %v843, %v925
      %v941 = vadd.f32 %v844, %v929
      %v942 = vadd.f32 %v845, %v931
      %v943 = vadd.f32 %v846, %v933
      %v944 = vadd.f32 %v847, %v935
      %s945 = scalar_lea.vmem %s1, 128
      %v946 = vld [vmem:[%s945] sm:$0xf]
      %v947 = vld [vmem:[%s945 + $0x4] sm:$0xf]
      %v948 = vld [vmem:[%s945 + $0x8] sm:$0xf]
      %v949 = vld [vmem:[%s945 + $0xc] sm:$0xf]
      %v954 = vunpack.c.l.b16 %v946
      %v955 = vunpack.c.l.b16 %v947
      %v956 = vunpack.c.l.b16 %v948
      %v957 = vunpack.c.l.b16 %v949
      %v958 = vpack.c.b16 %v955, %v954
      %v959 = vpack.c.b16 %v957, %v956
      %960 = vrot.lane.b32.xlu0 %v211, 94
      %v961 = vpop.permute.xlu0 %960
      %962 = vrot.lane.b32.xlu0 %v212, 94
      %v963 = vpop.permute.xlu0 %962
      %964 = vrot.lane.b32.xlu0 %v213, 94
      %v965 = vpop.permute.xlu0 %964
      %966 = vrot.lane.b32.xlu0 %v214, 94
      %v967 = vpop.permute.xlu0 %966
      %vm968 = vcmask 769024
      %v969 = vsel %vm968, %v961, %v963
      %v970 = vsel %vm968, %v965, %v967
      %v976 = vsel %vm230, %v958, 0
      %v979 = vsel %vm230, %v959, 0
      %981 = vmatprep.subr.bf16.mxu0 0
      %982 = vmatpush1.bf16.msra.mxu0 0
      %983 = vmatprep.subr.bf16.mxu0 0
      %984 = vmatpush1.bf16.msra.mxu0 0
      %985 = vmatprep.subr.bf16.mxu0 0
      %986 = vmatpush1.bf16.msra.mxu0 0
      %987 = vmatprep.subr.bf16.mxu0 0
      %988 = vmatpush1.bf16.msra.mxu0 0
      %989 = vmatprep.subr.bf16.mxu0 0
      %990 = vmatpush1.bf16.msra.mxu0 0
      %991 = vmatprep.subr.bf16.mxu0 0
      %992 = vmatpush1.bf16.msra.mxu0 0
      %993 = vmatprep.subr.bf16.mxu0 %v967
      %994 = vmatpush1.bf16.msra.mxu0 %v970
      %995 = vmatprep.subr.bf16.mxu0 %v963
      %996 = vmatpush1.bf16.msra.mxu0 %v969
      %997 = vmatprep.subr.bf16.mxu0 0
      %998 = vmatpush2.bf16.msra.mxu0 0
      %999 = vmatprep.subr.bf16.mxu0 0
      %1000 = vmatpush2.bf16.msra.mxu0 0
      %1001 = vmatprep.subr.bf16.mxu0 0
      %1002 = vmatpush2.bf16.msra.mxu0 0
      %1003 = vmatprep.subr.bf16.mxu0 0
      %1004 = vmatpush2.bf16.msra.mxu0 0
      %1005 = vmatprep.subr.bf16.mxu0 0
      %1006 = vmatpush2.bf16.msra.mxu0 0
      %1007 = vmatprep.subr.bf16.mxu0 0
      %1008 = vmatpush2.bf16.msra.mxu0 0
      %1009 = vmatprep.subr.bf16.mxu0 0
      %1010 = vmatpush2.bf16.msra.mxu0 0
      %1011 = vmatprep.subr.bf16.mxu0 0
      %1012 = vmatpush2.bf16.msra.mxu0 0
      %1013 = vmatprep.mubr.bf16.mxu0 0
      %1014 = vmatmul.mubr.bf16.gmra.mxu0 %v976
      %v1015 = vpop.f32.mrf.mxu0
      %v1016 = vadd.f32 0.0, %v1015
      %v1017 = vpop.f32.mrf.mxu0
      %v1018 = vadd.f32 0.0, %v1017
      %v1019 = vpop.f32.mrf.mxu0
      %v1020 = vadd.f32 0.0, %v1019
      %v1021 = vpop.f32.mrf.mxu0
      %v1022 = vadd.f32 0.0, %v1021
      %1023 = vmatprep.mubr.bf16.mxu0 0
      %1024 = vmatmul.mubr.bf16.gmra.mxu0 %v979
      %v1025 = vpop.f32.mrf.mxu0
      %v1026 = vadd.f32 0.0, %v1025
      %v1027 = vpop.f32.mrf.mxu0
      %v1028 = vadd.f32 0.0, %v1027
      %v1029 = vpop.f32.mrf.mxu0
      %v1030 = vadd.f32 0.0, %v1029
      %v1031 = vpop.f32.mrf.mxu0
      %v1032 = vadd.f32 0.0, %v1031
      %1033 = vdwg.mxu0
      %v1034 = vadd.f32 %v937, %v1016
      %v1035 = vadd.f32 %v938, %v1018
      %v1036 = vadd.f32 %v939, %v1020
      %v1037 = vadd.f32 %v940, %v1022
      %v1038 = vadd.f32 %v941, %v1026
      %v1039 = vadd.f32 %v942, %v1028
      %v1040 = vadd.f32 %v943, %v1030
      %v1041 = vadd.f32 %v944, %v1032
      %1043 = vset.pattern.permute.xlu0 0
      %1044 = vperm.xlu0 %1043, %v176
      %v1045 = vpop.permute.xlu0 %1044
      %1048 = vset.pattern.permute.xlu0 0
      %1049 = vperm.xlu0 %1048, %v177
      %v1050 = vpop.permute.xlu0 %1049
      %1053 = vset.pattern.permute.xlu0 0
      %1054 = vperm.xlu0 %1053, %v178
      %v1055 = vpop.permute.xlu0 %1054
      %1058 = vset.pattern.permute.xlu0 0
      %1059 = vperm.xlu0 %1058, %v179
      %v1060 = vpop.permute.xlu0 %1059
      %v1062 = vadd.f32 %v1034, %v1045
      %v1063 = vadd.f32 %v1035, %v1045
      %v1064 = vadd.f32 %v1036, %v1050
      %v1065 = vadd.f32 %v1037, %v1050
      %v1066 = vadd.f32 %v1038, %v1055
      %v1067 = vadd.f32 %v1039, %v1055
      %v1068 = vadd.f32 %v1040, %v1060
      %v1069 = vadd.f32 %v1041, %v1060
      %v1070 = vmax.f32 %v1062, 0.0
      %v1071 = vmax.f32 %v1063, 0.0
      %v1072 = vmax.f32 %v1064, 0.0
      %v1073 = vmax.f32 %v1065, 0.0
      %v1074 = vmax.f32 %v1066, 0.0
      %v1075 = vmax.f32 %v1067, 0.0
      %v1076 = vmax.f32 %v1068, 0.0
      %v1077 = vmax.f32 %v1069, 0.0
      %v1078 = vpack.c.bf16 %v1072, %v1070
      %v1079 = vpack.c.bf16 %v1073, %v1071
      %v1080 = vpack.c.bf16 %v1076, %v1074
      %v1081 = vpack.c.bf16 %v1077, %v1075
      %v1086 = vunpack.c.l.b16 %v1078
      %v1087 = vunpack.c.l.b16 %v1079
      %v1088 = vunpack.c.h.b16 %v1078
      %v1089 = vunpack.c.h.b16 %v1079
      %v1090 = vunpack.c.l.b16 %v1080
      %v1091 = vunpack.c.l.b16 %v1081
      %v1092 = vunpack.c.h.b16 %v1080
      %v1093 = vunpack.c.h.b16 %v1081
      %v1094 = vpack.c.b16 %v1087, %v1086
      %v1095 = vpack.c.b16 %v1089, %v1088
      %v1096 = vpack.c.b16 %v1091, %v1090
      %v1097 = vpack.c.b16 %v1093, %v1092
      %vm1102 = vcmask 1043456
      %vm1103 = vcmask 523268
      %vm1104 = vmor %vm1103, %vm1102
      %1105 = vst.msk [vmem:[%s170] sm:$0xff] %vm1104, %v1094
      %1106 = vst.msk [vmem:[%s170 + $0x8] sm:$0xff] %vm1104, %v1095
      %1107 = vst.msk [vmem:[%s170 + $0x10] sm:$0xff] %vm1104, %v1096
      %1108 = vst.msk [vmem:[%s170 + $0x18] sm:$0xff] %vm1104, %v1097
      %p1109 = scmp.lt.s32.totalorder %s14, 1
      %s1110 = scalar_select %p1109, %s14, 1
      %s1111 = smul.addr %s1110, 8
      %s1112 = smul.addr %s1111, 4
      %s1113 = scalar_lea.vmem %s3, %s1112
      // Predicated region
      $region33: #{decoder_block_forward.4} parent=31 // pred_check
        %p1114 = pneg %p100
      $region34: #{decoder_block_forward.4} parent=31 // pred_check_branch
        %1116 = sbr.rel (%p1114) target = $region36
      $region35: #{decoder_block_forward.4} parent=31 // pred_region
        _
      $region36: #{decoder_block_forward.4} parent=31 // pred_fallthru
        _
    $region32: #{decoder_block_forward.4} parent=5 // pred_fallthru
      _
    %p1117 = scmp.le.s32.totalorder 2, %s9
    // Predicated region
    $region37: #{decoder_block_forward.4} parent=5 // pred_check
      %p1118 = pneg %p1117
    $region38: #{decoder_block_forward.4} parent=5 // pred_check_branch
      %1120 = sbr.rel (%p1118) target = $region40
    $region39: #{decoder_block_forward.4} parent=5 // pred_region
      %s1121 = ssub.s32 %s9, 2
      // Predicated region
      $region41: #{decoder_block_forward.4} parent=39 // pred_check
        %p1122 = pneg %p106
      $region42: #{decoder_block_forward.4} parent=39 // pred_check_branch
        %1124 = sbr.rel (%p1122) target = $region44
      $region43: #{decoder_block_forward.4} parent=39 // pred_region
        %p1125 = scmp.lt.s32.totalorder %s15, 1
        %s1126 = scalar_select %p1125, %s15, 1
        %s1127 = smul.addr %s1126, 8
        %s1128 = smul.addr %s1127, 4
        %s1129 = scalar_lea.vmem %s3, %s1128
      $region44: #{decoder_block_forward.4} parent=39 // pred_fallthru
        _
    $region40: #{decoder_block_forward.4} parent=5 // pred_fallthru
      _
  $region6: #{decoder_block_forward.4} parent=0 // loop_footer
    %s13 = sadd.s32 1, %s9
  $region7: #{decoder_block_forward.4} parent=0 // loop_footer_branch
    %8 = sbr.rel target = $region3
  $region8: #{decoder_block_forward.4} parent=0 // loop_exit
    _

// kernel: decoder_block_forward.3
$region0: #{decoder_block_forward.3}
  #allocation0 [shape = 'u32[]', space=smem, size = 0x4, offset = 0x4, fixed_abs, tag = 'smem constant byte address 0x4 - core index']
  #allocation1 [shape = 'u32[144,128]{1,0:T(1,128)}', space=vmem, size = 0x12000, scoped, tag = 'internal scratch']
  %s0 = inlined_call_operand.vmem [shape: bf16[2,8,384], index: 0, kind: input, shape index: {}]
  %s1 = inlined_call_operand.vmem [shape: bf16[9,32,8], index: 1, kind: input, shape index: {}]
  %s2 = inlined_call_operand.vmem [shape: f32[32,1], index: 2, kind: input, shape index: {}]
  %s3 = inlined_call_operand.vmem [shape: bf16[2,32,256], index: 3, kind: output, shape index: {}]
  %s4 = sld [smem:[#allocation0]]
  $region45: #{decoder_block_forward.3} parent=0
    _
  %s6 = ssub.s32 1, %s4
  %s7 = scalar_select 0, %s6, %s4
  loop: start=0, step=1, limit=4
  $region2: #{decoder_block_forward.3} parent=0 // loop_pre_header
    _
  $region3: #{decoder_block_forward.3} parent=0 // loop_header
    %s9 = sphi 0, %s13
    %p10 = scmp.ge.s32.totalorder %s9, 4
    %s19 = sphi 0, %s21
    %s22 = sphi 0, %s19
    %s23 = sphi 0, %s22
    %s39 = sphi 0, %s23
    %s43 = sphi 0, %s43
    %s45 = sphi 0, %s43
    %s46 = sphi 0, %s45
    %s60 = sphi 0, %s46
    %s64 = sphi 0, %s64
    %s66 = sphi 0, %s64
    %s67 = sphi 0, %s66
    %s81 = sphi 0, %s67
    %s87 = sphi 0, %s89
    %s90 = sphi 0, %s87
    %s91 = sphi 0, %s90
    %s107 = sphi 0, %s91
  $region4: #{decoder_block_forward.3} parent=0 // loop_header_branch
    %12 = sbr.rel (%p10) target = $region8
  $region5: #{decoder_block_forward.3} parent=0 // loop_body
    %s14 = ssub.s32 %s9, 1
    %s15 = ssub.s32 %s9, 2
    %s16 = sadd.s32 %s9, 1
    %s17 = ssub.s32 %s9, %s16
    %p18 = scmp.eq.s32.totalorder %s17, 0
    %s20 = sadd.s32 %s19, 1
    %s21 = scalar_select %p18, %s19, %s20
    %p24 = pneg %p18
    %p25 = scmp.eq.s32.totalorder %s9, 1
    %p26 = por %p24, %p25
    %p27 = scmp.ne.s32.totalorder %s19, %s22
    %p28 = scmp.eq.s32.totalorder %s9, 0
    %p29 = por %p27, %p28
    %p30 = scmp.ne.s32.totalorder %s19, %s22
    %p31 = scmp.eq.s32.totalorder %s14, 1
    %p32 = por %p30, %p31
    %p33 = scmp.ne.s32.totalorder %s22, %s23
    %p34 = scmp.eq.s32.totalorder %s14, 0
    %p35 = por %p33, %p34
    %p36 = scmp.ne.s32.totalorder %s22, %s23
    %p37 = scmp.eq.s32.totalorder %s15, 1
    %p38 = por %p36, %p37
    %p40 = scmp.ne.s32.totalorder %s23, %s39
    %p41 = scmp.eq.s32.totalorder %s15, 0
    %p42 = por %p40, %p41
    %s44 = sadd.s32 %s43, 1
    %p47 = scmp.eq.s32.totalorder %s9, 1
    %p48 = scmp.ne.s32.totalorder %s43, %s45
    %p49 = scmp.eq.s32.totalorder %s9, 0
    %p50 = por %p48, %p49
    %p51 = scmp.ne.s32.totalorder %s43, %s45
    %p52 = scmp.eq.s32.totalorder %s14, 1
    %p53 = por %p51, %p52
    %p54 = scmp.ne.s32.totalorder %s45, %s46
    %p55 = scmp.eq.s32.totalorder %s14, 0
    %p56 = por %p54, %p55
    %p57 = scmp.ne.s32.totalorder %s45, %s46
    %p58 = scmp.eq.s32.totalorder %s15, 1
    %p59 = por %p57, %p58
    %p61 = scmp.ne.s32.totalorder %s46, %s60
    %p62 = scmp.eq.s32.totalorder %s15, 0
    %p63 = por %p61, %p62
    %s65 = sadd.s32 %s64, 1
    %p68 = scmp.eq.s32.totalorder %s9, 1
    %p69 = scmp.ne.s32.totalorder %s64, %s66
    %p70 = scmp.eq.s32.totalorder %s9, 0
    %p71 = por %p69, %p70
    %p72 = scmp.ne.s32.totalorder %s64, %s66
    %p73 = scmp.eq.s32.totalorder %s14, 1
    %p74 = por %p72, %p73
    %p75 = scmp.ne.s32.totalorder %s66, %s67
    %p76 = scmp.eq.s32.totalorder %s14, 0
    %p77 = por %p75, %p76
    %p78 = scmp.ne.s32.totalorder %s66, %s67
    %p79 = scmp.eq.s32.totalorder %s15, 1
    %p80 = por %p78, %p79
    %p82 = scmp.ne.s32.totalorder %s67, %s81
    %p83 = scmp.eq.s32.totalorder %s15, 0
    %p84 = por %p82, %p83
    %s85 = ssub.s32 %s9, %s16
    %p86 = scmp.eq.s32.totalorder %s85, 0
    %s88 = sadd.s32 %s87, 1
    %s89 = scalar_select %p86, %s87, %s88
    %p92 = pneg %p86
    %p93 = scmp.eq.s32.totalorder %s9, 1
    %p94 = por %p92, %p93
    %p95 = scmp.ne.s32.totalorder %s87, %s90
    %p96 = scmp.eq.s32.totalorder %s9, 0
    %p97 = por %p95, %p96
    %p98 = scmp.ne.s32.totalorder %s87, %s90
    %p99 = scmp.eq.s32.totalorder %s14, 1
    %p100 = por %p98, %p99
    %p101 = scmp.ne.s32.totalorder %s90, %s91
    %p102 = scmp.eq.s32.totalorder %s14, 0
    %p103 = por %p101, %p102
    %p104 = scmp.ne.s32.totalorder %s90, %s91
    %p105 = scmp.eq.s32.totalorder %s15, 1
    %p106 = por %p104, %p105
    %p108 = scmp.ne.s32.totalorder %s91, %s107
    %p109 = scmp.eq.s32.totalorder %s15, 0
    %p110 = por %p108, %p109
    %p111 = scmp.le.s32.totalorder 1, %s9
    %p112 = scmp.lt.s32.totalorder %s9, 3
    %p113 = pnand %p111, %p112
    %p114 = pneg %p113
    // Predicated region
    $region9: #{decoder_block_forward.3} parent=5 // pred_check
      _
    $region10: #{decoder_block_forward.3} parent=5 // pred_check_branch
      %116 = sbr.rel (%p113) target = $region12
    $region11: #{decoder_block_forward.3} parent=5 // pred_region
      %s117 = ssub.s32 %s9, 1
      // Predicated region
      $region13: #{decoder_block_forward.3} parent=11 // pred_check
        %p118 = pneg %p56
      $region14: #{decoder_block_forward.3} parent=11 // pred_check_branch
        %120 = sbr.rel (%p118) target = $region16
      $region15: #{decoder_block_forward.3} parent=11 // pred_region
        _
      $region16: #{decoder_block_forward.3} parent=11 // pred_fallthru
        _
      // Predicated region
      $region17: #{decoder_block_forward.3} parent=11 // pred_check
        %p121 = pneg %p77
      $region18: #{decoder_block_forward.3} parent=11 // pred_check_branch
        %123 = sbr.rel (%p121) target = $region20
      $region19: #{decoder_block_forward.3} parent=11 // pred_region
        _
      $region20: #{decoder_block_forward.3} parent=11 // pred_fallthru
        _
    $region12: #{decoder_block_forward.3} parent=5 // pred_fallthru
      _
    %p124 = scmp.lt.s32.totalorder %s9, 2
    // Predicated region
    $region21: #{decoder_block_forward.3} parent=5 // pred_check
      %p125 = pneg %p124
    $region22: #{decoder_block_forward.3} parent=5 // pred_check_branch
      %127 = sbr.rel (%p125) target = $region24
    $region23: #{decoder_block_forward.3} parent=5 // pred_region
      // Predicated region
      $region25: #{decoder_block_forward.3} parent=23 // pred_check
        %p128 = pneg %p29
      $region26: #{decoder_block_forward.3} parent=23 // pred_check_branch
        %130 = sbr.rel (%p128) target = $region28
      $region27: #{decoder_block_forward.3} parent=23 // pred_region
        %p131 = scmp.lt.s32.totalorder %s9, 1
        %s132 = scalar_select %p131, %s9, 1
        %s133 = smul.addr %s132, 3
        %s134 = smul.addr %s133, 4
        %s135 = scalar_lea.vmem %s0, %s134
      $region28: #{decoder_block_forward.3} parent=23 // pred_fallthru
        _
    $region24: #{decoder_block_forward.3} parent=5 // pred_fallthru
      _
    %p136 = scmp.le.s32.totalorder 1, %s9
    %p137 = scmp.lt.s32.totalorder %s9, 3
    %p138 = pnand %p136, %p137
    %p139 = pneg %p138
    // Predicated region
    $region29: #{decoder_block_forward.3} parent=5 // pred_check
      _
    $region30: #{decoder_block_forward.3} parent=5 // pred_check_branch
      %141 = sbr.rel (%p138) target = $region32
    $region31: #{decoder_block_forward.3} parent=5 // pred_region
      %s142 = ssub.s32 %s9, 1
      %p143 = scmp.lt.s32.totalorder %s14, 1
      %s144 = scalar_select %p143, %s14, 1
      %s145 = smul.addr %s144, 3
      %s146 = smul.addr %s145, 4
      %s147 = scalar_lea.vmem %s0, %s146
      %p148 = pneg %p35
      %p149 = pneg %p32
      %p150 = pneg %p56
      %p151 = pneg %p53
      %p152 = pneg %p77
      %p153 = pneg %p74
      %p154 = pneg %p103
      %p155 = pneg %p100
      %p156 = scmp.lt.s32.totalorder %s14, 1
      %s157 = scalar_select %p156, %s14, 1
      %s158 = smul.addr %s157, 8
      %s159 = smul.addr %s158, 4
      %s160 = scalar_lea.vmem %s3, %s159
      %p161 = scmp.lt.s32.totalorder %s14, 1
      %s162 = scalar_select %p161, %s14, 1
      %s163 = smul.addr %s162, 3
      %s164 = smul.addr %s163, 4
      %s165 = scalar_lea.vmem %s0, %s164
      %p166 = scmp.lt.s32.totalorder %s14, 1
      %s167 = scalar_select %p166, %s14, 1
      %s168 = smul.addr %s167, 8
      %s169 = smul.addr %s168, 4
      %s170 = scalar_lea.vmem %s3, %s169
      %v172 = vld [vmem:[%s165] sm:$0xff]
      %v173 = vld [vmem:[%s165 + $0x8] sm:$0xf]
      %v174 = vld [vmem:[%s2] sm:$0xff]
      %v175 = vld [vmem:[%s2 + $0x8] sm:$0xff]
      %v176 = vld [vmem:[%s2 + $0x10] sm:$0xff]
      %v177 = vld [vmem:[%s2 + $0x18] sm:$0xff]
      %v178 = vld [vmem:[%s1] sm:$0xf]
      %v179 = vld [vmem:[%s1 + $0x4] sm:$0xf]
      %v180 = vld [vmem:[%s1 + $0x8] sm:$0xf]
      %v181 = vld [vmem:[%s1 + $0xc] sm:$0xf]
      %s182 = scalar_lea.vmem %s1, 16
      %v183 = vld [vmem:[%s182] sm:$0xf]
      %v184 = vld [vmem:[%s182 + $0x4] sm:$0xf]
      %v185 = vld [vmem:[%s182 + $0x8] sm:$0xf]
      %v186 = vld [vmem:[%s182 + $0xc] sm:$0xf]
      %v191 = vunpack.c.l.b16 %v183
      %v192 = vunpack.c.l.b16 %v184
      %v193 = vunpack.c.l.b16 %v185
      %v194 = vunpack.c.l.b16 %v186
      %v195 = vpack.c.b16 %v192, %v191
      %v196 = vpack.c.b16 %v194, %v193
      %v199 = vunpack.c.l.b16 %v172
      %v200 = vunpack.c.h.b16 %v172
      %v201 = vunpack.c.l.b16 %v173
      %v202 = vpack.c.b16 %v199, %v199
      %v203 = vpack.c.b16 %v200, %v200
      %v204 = vpack.c.b16 %v201, %v201
      %205 = vrot.lane.b32.xlu0 %v202, 127
      %v206 = vpop.permute.xlu0 %205
      %207 = vrot.lane.b32.xlu0 %v203, 127
      %v208 = vpop.permute.xlu0 %207
      %209 = vrot.lane.b32.xlu0 %v204, 127
      %v210 = vpop.permute.xlu0 %209
      %vm211 = vcmask 1039360
      %v212 = vsel %vm211, %v206, %v208
      %v213 = vsel %vm211, %v208, %v210
      %vm214 = vcmask 64512
      %v216 = vsel %vm214, %v195, 0
      %v219 = vsel %vm214, %v196, 0
      %vm221 = vcmask 1043456
      %v223 = vsel %vm221, %v212, 0
      %v226 = vsel %vm221, %v213, 0
      %228 = vmatprep.subr.bf16.mxu0 0
      %229 = vmatpush1.bf16.msra.mxu0 0
      %230 = vmatprep.subr.bf16.mxu0 0
      %231 = vmatpush1.bf16.msra.mxu0 0
      %232 = vmatprep.subr.bf16.mxu0 0
      %233 = vmatpush1.bf16.msra.mxu0 0
      %234 = vmatprep.subr.bf16.mxu0 0
      %235 = vmatpush1.bf16.msra.mxu0 0
      %236 = vmatprep.subr.bf16.mxu0 0
      %237 = vmatpush1.bf16.msra.mxu0 0
      %238 = vmatprep.subr.bf16.mxu0 0
      %239 = vmatpush1.bf16.msra.mxu0 0
      %240 = vmatprep.subr.bf16.mxu0 0
      %241 = vmatpush1.bf16.msra.mxu0 0
      %242 = vmatprep.subr.bf16.mxu0 %v226
      %243 = vmatpush1.bf16.msra.mxu0 %v223
      %244 = vmatprep.subr.bf16.mxu0 0
      %245 = vmatpush2.bf16.msra.mxu0 0
      %246 = vmatprep.subr.bf16.mxu0 0
      %247 = vmatpush2.bf16.msra.mxu0 0
      %248 = vmatprep.subr.bf16.mxu0 0
      %249 = vmatpush2.bf16.msra.mxu0 0
      %250 = vmatprep.subr.bf16.mxu0 0
      %251 = vmatpush2.bf16.msra.mxu0 0
      %252 = vmatprep.subr.bf16.mxu0 0
      %253 = vmatpush2.bf16.msra.mxu0 0
      %254 = vmatprep.subr.bf16.mxu0 0
      %255 = vmatpush2.bf16.msra.mxu0 0
      %256 = vmatprep.subr.bf16.mxu0 0
      %257 = vmatpush2.bf16.msra.mxu0 0
      %258 = vmatprep.subr.bf16.mxu0 0
      %259 = vmatpush2.bf16.msra.mxu0 0
      %260 = vmatprep.mubr.bf16.mxu0 0
      %261 = vmatmul.mubr.bf16.gmra.mxu0 %v216
      %v262 = vpop.f32.mrf.mxu0
      %v263 = vadd.f32 0.0, %v262
      %v264 = vpop.f32.mrf.mxu0
      %v265 = vadd.f32 0.0, %v264
      %v266 = vpop.f32.mrf.mxu0
      %v267 = vadd.f32 0.0, %v266
      %v268 = vpop.f32.mrf.mxu0
      %v269 = vadd.f32 0.0, %v268
      %270 = vmatprep.mubr.bf16.mxu0 0
      %271 = vmatmul.mubr.bf16.gmra.mxu0 %v219
      %v272 = vpop.f32.mrf.mxu0
      %v273 = vadd.f32 0.0, %v272
      %v274 = vpop.f32.mrf.mxu0
      %v275 = vadd.f32 0.0, %v274
      %v276 = vpop.f32.mrf.mxu0
      %v277 = vadd.f32 0.0, %v276
      %v278 = vpop.f32.mrf.mxu0
      %v279 = vadd.f32 0.0, %v278
      %280 = vdwg.mxu0
      %v285 = vunpack.c.l.b16 %v178
      %v286 = vunpack.c.l.b16 %v179
      %v287 = vunpack.c.l.b16 %v180
      %v288 = vunpack.c.l.b16 %v181
      %v289 = vpack.c.b16 %v286, %v285
      %v290 = vpack.c.b16 %v288, %v287
      %v292 = vsel %vm214, %v289, 0
      %v295 = vsel %vm214, %v290, 0
      %v298 = vsel %vm221, %v202, 0
      %v301 = vsel %vm221, %v203, 0
      %303 = vmatprep.subr.bf16.mxu0 0
      %304 = vmatpush1.bf16.msra.mxu0 0
      %305 = vmatprep.subr.bf16.mxu0 0
      %306 = vmatpush1.bf16.msra.mxu0 0
      %307 = vmatprep.subr.bf16.mxu0 0
      %308 = vmatpush1.bf16.msra.mxu0 0
      %309 = vmatprep.subr.bf16.mxu0 0
      %310 = vmatpush1.bf16.msra.mxu0 0
      %311 = vmatprep.subr.bf16.mxu0 0
      %312 = vmatpush1.bf16.msra.mxu0 0
      %313 = vmatprep.subr.bf16.mxu0 0
      %314 = vmatpush1.bf16.msra.mxu0 0
      %315 = vmatprep.subr.bf16.mxu0 0
      %316 = vmatpush1.bf16.msra.mxu0 0
      %317 = vmatprep.subr.bf16.mxu0 %v301
      %318 = vmatpush1.bf16.msra.mxu0 %v298
      %319 = vmatprep.subr.bf16.mxu0 0
      %320 = vmatpush2.bf16.msra.mxu0 0
      %321 = vmatprep.subr.bf16.mxu0 0
      %322 = vmatpush2.bf16.msra.mxu0 0
      %323 = vmatprep.subr.bf16.mxu0 0
      %324 = vmatpush2.bf16.msra.mxu0 0
      %325 = vmatprep.subr.bf16.mxu0 0
      %326 = vmatpush2.bf16.msra.mxu0 0
      %327 = vmatprep.subr.bf16.mxu0 0
      %328 = vmatpush2.bf16.msra.mxu0 0
      %329 = vmatprep.subr.bf16.mxu0 0
      %330 = vmatpush2.bf16.msra.mxu0 0
      %331 = vmatprep.subr.bf16.mxu0 0
      %332 = vmatpush2.bf16.msra.mxu0 0
      %333 = vmatprep.subr.bf16.mxu0 0
      %334 = vmatpush2.bf16.msra.mxu0 0
      %335 = vmatprep.mubr.bf16.mxu0 0
      %336 = vmatmul.mubr.bf16.gmra.mxu0 %v292
      %v337 = vpop.f32.mrf.mxu0
      %v338 = vadd.f32 %v263, %v337
      %v339 = vpop.f32.mrf.mxu0
      %v340 = vadd.f32 %v265, %v339
      %v341 = vpop.f32.mrf.mxu0
      %v342 = vadd.f32 %v267, %v341
      %v343 = vpop.f32.mrf.mxu0
      %v344 = vadd.f32 %v269, %v343
      %345 = vmatprep.mubr.bf16.mxu0 0
      %346 = vmatmul.mubr.bf16.gmra.mxu0 %v295
      %v347 = vpop.f32.mrf.mxu0
      %v348 = vadd.f32 %v273, %v347
      %v349 = vpop.f32.mrf.mxu0
      %v350 = vadd.f32 %v275, %v349
      %v351 = vpop.f32.mrf.mxu0
      %v352 = vadd.f32 %v277, %v351
      %v353 = vpop.f32.mrf.mxu0
      %v354 = vadd.f32 %v279, %v353
      %355 = vdwg.mxu0
      %s356 = scalar_lea.vmem %s1, 32
      %v357 = vld [vmem:[%s356] sm:$0xf]
      %v358 = vld [vmem:[%s356 + $0x4] sm:$0xf]
      %v359 = vld [vmem:[%s356 + $0x8] sm:$0xf]
      %v360 = vld [vmem:[%s356 + $0xc] sm:$0xf]
      %v365 = vunpack.c.l.b16 %v357
      %v366 = vunpack.c.l.b16 %v358
      %v367 = vunpack.c.l.b16 %v359
      %v368 = vunpack.c.l.b16 %v360
      %v369 = vpack.c.b16 %v366, %v365
      %v370 = vpack.c.b16 %v368, %v367
      %371 = vrot.lane.b32.xlu0 %v202, 126
      %v372 = vpop.permute.xlu0 %371
      %373 = vrot.lane.b32.xlu0 %v203, 126
      %v374 = vpop.permute.xlu0 %373
      %375 = vrot.lane.b32.xlu0 %v204, 126
      %v376 = vpop.permute.xlu0 %375
      %vm377 = vcmask 1031168
      %v378 = vsel %vm377, %v372, %v374
      %v379 = vsel %vm377, %v374, %v376
      %v381 = vsel %vm214, %v369, 0
      %v384 = vsel %vm214, %v370, 0
      %v387 = vsel %vm221, %v378, 0
      %v390 = vsel %vm221, %v379, 0
      %392 = vmatprep.subr.bf16.mxu0 0
      %393 = vmatpush1.bf16.msra.mxu0 0
      %394 = vmatprep.subr.bf16.mxu0 0
      %395 = vmatpush1.bf16.msra.mxu0 0
      %396 = vmatprep.subr.bf16.mxu0 0
      %397 = vmatpush1.bf16.msra.mxu0 0
      %398 = vmatprep.subr.bf16.mxu0 0
      %399 = vmatpush1.bf16.msra.mxu0 0
      %400 = vmatprep.subr.bf16.mxu0 0
      %401 = vmatpush1.bf16.msra.mxu0 0
      %402 = vmatprep.subr.bf16.mxu0 0
      %403 = vmatpush1.bf16.msra.mxu0 0
      %404 = vmatprep.subr.bf16.mxu0 0
      %405 = vmatpush1.bf16.msra.mxu0 0
      %406 = vmatprep.subr.bf16.mxu0 %v390
      %407 = vmatpush1.bf16.msra.mxu0 %v387
      %408 = vmatprep.subr.bf16.mxu0 0
      %409 = vmatpush2.bf16.msra.mxu0 0
      %410 = vmatprep.subr.bf16.mxu0 0
      %411 = vmatpush2.bf16.msra.mxu0 0
      %412 = vmatprep.subr.bf16.mxu0 0
      %413 = vmatpush2.bf16.msra.mxu0 0
      %414 = vmatprep.subr.bf16.mxu0 0
      %415 = vmatpush2.bf16.msra.mxu0 0
      %416 = vmatprep.subr.bf16.mxu0 0
      %417 = vmatpush2.bf16.msra.mxu0 0
      %418 = vmatprep.subr.bf16.mxu0 0
      %419 = vmatpush2.bf16.msra.mxu0 0
      %420 = vmatprep.subr.bf16.mxu0 0
      %421 = vmatpush2.bf16.msra.mxu0 0
      %422 = vmatprep.subr.bf16.mxu0 0
      %423 = vmatpush2.bf16.msra.mxu0 0
      %424 = vmatprep.mubr.bf16.mxu0 0
      %425 = vmatmul.mubr.bf16.gmra.mxu0 %v381
      %v426 = vpop.f32.mrf.mxu0
      %v427 = vadd.f32 0.0, %v426
      %v428 = vpop.f32.mrf.mxu0
      %v429 = vadd.f32 0.0, %v428
      %v430 = vpop.f32.mrf.mxu0
      %v431 = vadd.f32 0.0, %v430
      %v432 = vpop.f32.mrf.mxu0
      %v433 = vadd.f32 0.0, %v432
      %434 = vmatprep.mubr.bf16.mxu0 0
      %435 = vmatmul.mubr.bf16.gmra.mxu0 %v384
      %v436 = vpop.f32.mrf.mxu0
      %v437 = vadd.f32 0.0, %v436
      %v438 = vpop.f32.mrf.mxu0
      %v439 = vadd.f32 0.0, %v438
      %v440 = vpop.f32.mrf.mxu0
      %v441 = vadd.f32 0.0, %v440
      %v442 = vpop.f32.mrf.mxu0
      %v443 = vadd.f32 0.0, %v442
      %444 = vdwg.mxu0
      %v445 = vadd.f32 %v338, %v427
      %v446 = vadd.f32 %v340, %v429
      %v447 = vadd.f32 %v342, %v431
      %v448 = vadd.f32 %v344, %v433
      %v449 = vadd.f32 %v348, %v437
      %v450 = vadd.f32 %v350, %v439
      %v451 = vadd.f32 %v352, %v441
      %v452 = vadd.f32 %v354, %v443
      %s453 = scalar_lea.vmem %s1, 48
      %v454 = vld [vmem:[%s453] sm:$0xf]
      %v455 = vld [vmem:[%s453 + $0x4] sm:$0xf]
      %v456 = vld [vmem:[%s453 + $0x8] sm:$0xf]
      %v457 = vld [vmem:[%s453 + $0xc] sm:$0xf]
      %v462 = vunpack.c.l.b16 %v454
      %v463 = vunpack.c.l.b16 %v455
      %v464 = vunpack.c.l.b16 %v456
      %v465 = vunpack.c.l.b16 %v457
      %v466 = vpack.c.b16 %v463, %v462
      %v467 = vpack.c.b16 %v465, %v464
      %468 = vrot.lane.b32.xlu0 %v202, 112
      %v469 = vpop.permute.xlu0 %468
      %470 = vrot.lane.b32.xlu0 %v203, 112
      %v471 = vpop.permute.xlu0 %470
      %472 = vrot.lane.b32.xlu0 %v204, 112
      %v473 = vpop.permute.xlu0 %472
      %vm474 = vcmask 916480
      %v475 = vsel %vm474, %v469, %v471
      %v476 = vsel %vm474, %v471, %v473
      %v478 = vsel %vm214, %v466, 0
      %v481 = vsel %vm214, %v467, 0
      %v484 = vsel %vm221, %v475, 0
      %v487 = vsel %vm221, %v476, 0
      %489 = vmatprep.subr.bf16.mxu0 0
      %490 = vmatpush1.bf16.msra.mxu0 0
      %491 = vmatprep.subr.bf16.mxu0 0
      %492 = vmatpush1.bf16.msra.mxu0 0
      %493 = vmatprep.subr.bf16.mxu0 0
      %494 = vmatpush1.bf16.msra.mxu0 0
      %495 = vmatprep.subr.bf16.mxu0 0
      %496 = vmatpush1.bf16.msra.mxu0 0
      %497 = vmatprep.subr.bf16.mxu0 0
      %498 = vmatpush1.bf16.msra.mxu0 0
      %499 = vmatprep.subr.bf16.mxu0 0
      %500 = vmatpush1.bf16.msra.mxu0 0
      %501 = vmatprep.subr.bf16.mxu0 0
      %502 = vmatpush1.bf16.msra.mxu0 0
      %503 = vmatprep.subr.bf16.mxu0 %v487
      %504 = vmatpush1.bf16.msra.mxu0 %v484
      %505 = vmatprep.subr.bf16.mxu0 0
      %506 = vmatpush2.bf16.msra.mxu0 0
      %507 = vmatprep.subr.bf16.mxu0 0
      %508 = vmatpush2.bf16.msra.mxu0 0
      %509 = vmatprep.subr.bf16.mxu0 0
      %510 = vmatpush2.bf16.msra.mxu0 0
      %511 = vmatprep.subr.bf16.mxu0 0
      %512 = vmatpush2.bf16.msra.mxu0 0
      %513 = vmatprep.subr.bf16.mxu0 0
      %514 = vmatpush2.bf16.msra.mxu0 0
      %515 = vmatprep.subr.bf16.mxu0 0
      %516 = vmatpush2.bf16.msra.mxu0 0
      %517 = vmatprep.subr.bf16.mxu0 0
      %518 = vmatpush2.bf16.msra.mxu0 0
      %519 = vmatprep.subr.bf16.mxu0 0
      %520 = vmatpush2.bf16.msra.mxu0 0
      %521 = vmatprep.mubr.bf16.mxu0 0
      %522 = vmatmul.mubr.bf16.gmra.mxu0 %v478
      %v523 = vpop.f32.mrf.mxu0
      %v524 = vadd.f32 0.0, %v523
      %v525 = vpop.f32.mrf.mxu0
      %v526 = vadd.f32 0.0, %v525
      %v527 = vpop.f32.mrf.mxu0
      %v528 = vadd.f32 0.0, %v527
      %v529 = vpop.f32.mrf.mxu0
      %v530 = vadd.f32 0.0, %v529
      %531 = vmatprep.mubr.bf16.mxu0 0
      %532 = vmatmul.mubr.bf16.gmra.mxu0 %v481
      %v533 = vpop.f32.mrf.mxu0
      %v534 = vadd.f32 0.0, %v533
      %v535 = vpop.f32.mrf.mxu0
      %v536 = vadd.f32 0.0, %v535
      %v537 = vpop.f32.mrf.mxu0
      %v538 = vadd.f32 0.0, %v537
      %v539 = vpop.f32.mrf.mxu0
      %v540 = vadd.f32 0.0, %v539
      %541 = vdwg.mxu0
      %v542 = vadd.f32 %v445, %v524
      %v543 = vadd.f32 %v446, %v526
      %v544 = vadd.f32 %v447, %v528
      %v545 = vadd.f32 %v448, %v530
      %v546 = vadd.f32 %v449, %v534
      %v547 = vadd.f32 %v450, %v536
      %v548 = vadd.f32 %v451, %v538
      %v549 = vadd.f32 %v452, %v540
      %s550 = scalar_lea.vmem %s1, 64
      %v551 = vld [vmem:[%s550] sm:$0xf]
      %v552 = vld [vmem:[%s550 + $0x4] sm:$0xf]
      %v553 = vld [vmem:[%s550 + $0x8] sm:$0xf]
      %v554 = vld [vmem:[%s550 + $0xc] sm:$0xf]
      %v559 = vunpack.c.l.b16 %v551
      %v560 = vunpack.c.l.b16 %v552
      %v561 = vunpack.c.l.b16 %v553
      %v562 = vunpack.c.l.b16 %v554
      %v563 = vpack.c.b16 %v560, %v559
      %v564 = vpack.c.b16 %v562, %v561
      %565 = vrot.lane.b32.xlu0 %v202, 111
      %v566 = vpop.permute.xlu0 %565
      %567 = vrot.lane.b32.xlu0 %v203, 111
      %v568 = vpop.permute.xlu0 %567
      %569 = vrot.lane.b32.xlu0 %v204, 111
      %v570 = vpop.permute.xlu0 %569
      %vm571 = vcmask 908288
      %v572 = vsel %vm571, %v566, %v568
      %v573 = vsel %vm571, %v568, %v570
      %v575 = vsel %vm214, %v563, 0
      %v578 = vsel %vm214, %v564, 0
      %v581 = vsel %vm221, %v572, 0
      %v584 = vsel %vm221, %v573, 0
      %586 = vmatprep.subr.bf16.mxu0 0
      %587 = vmatpush1.bf16.msra.mxu0 0
      %588 = vmatprep.subr.bf16.mxu0 0
      %589 = vmatpush1.bf16.msra.mxu0 0
      %590 = vmatprep.subr.bf16.mxu0 0
      %591 = vmatpush1.bf16.msra.mxu0 0
      %592 = vmatprep.subr.bf16.mxu0 0
      %593 = vmatpush1.bf16.msra.mxu0 0
      %594 = vmatprep.subr.bf16.mxu0 0
      %595 = vmatpush1.bf16.msra.mxu0 0
      %596 = vmatprep.subr.bf16.mxu0 0
      %597 = vmatpush1.bf16.msra.mxu0 0
      %598 = vmatprep.subr.bf16.mxu0 0
      %599 = vmatpush1.bf16.msra.mxu0 0
      %600 = vmatprep.subr.bf16.mxu0 %v584
      %601 = vmatpush1.bf16.msra.mxu0 %v581
      %602 = vmatprep.subr.bf16.mxu0 0
      %603 = vmatpush2.bf16.msra.mxu0 0
      %604 = vmatprep.subr.bf16.mxu0 0
      %605 = vmatpush2.bf16.msra.mxu0 0
      %606 = vmatprep.subr.bf16.mxu0 0
      %607 = vmatpush2.bf16.msra.mxu0 0
      %608 = vmatprep.subr.bf16.mxu0 0
      %609 = vmatpush2.bf16.msra.mxu0 0
      %610 = vmatprep.subr.bf16.mxu0 0
      %611 = vmatpush2.bf16.msra.mxu0 0
      %612 = vmatprep.subr.bf16.mxu0 0
      %613 = vmatpush2.bf16.msra.mxu0 0
      %614 = vmatprep.subr.bf16.mxu0 0
      %615 = vmatpush2.bf16.msra.mxu0 0
      %616 = vmatprep.subr.bf16.mxu0 0
      %617 = vmatpush2.bf16.msra.mxu0 0
      %618 = vmatprep.mubr.bf16.mxu0 0
      %619 = vmatmul.mubr.bf16.gmra.mxu0 %v575
      %v620 = vpop.f32.mrf.mxu0
      %v621 = vadd.f32 0.0, %v620
      %v622 = vpop.f32.mrf.mxu0
      %v623 = vadd.f32 0.0, %v622
      %v624 = vpop.f32.mrf.mxu0
      %v625 = vadd.f32 0.0, %v624
      %v626 = vpop.f32.mrf.mxu0
      %v627 = vadd.f32 0.0, %v626
      %628 = vmatprep.mubr.bf16.mxu0 0
      %629 = vmatmul.mubr.bf16.gmra.mxu0 %v578
      %v630 = vpop.f32.mrf.mxu0
      %v631 = vadd.f32 0.0, %v630
      %v632 = vpop.f32.mrf.mxu0
      %v633 = vadd.f32 0.0, %v632
      %v634 = vpop.f32.mrf.mxu0
      %v635 = vadd.f32 0.0, %v634
      %v636 = vpop.f32.mrf.mxu0
      %v637 = vadd.f32 0.0, %v636
      %638 = vdwg.mxu0
      %v639 = vadd.f32 %v542, %v621
      %v640 = vadd.f32 %v543, %v623
      %v641 = vadd.f32 %v544, %v625
      %v642 = vadd.f32 %v545, %v627
      %v643 = vadd.f32 %v546, %v631
      %v644 = vadd.f32 %v547, %v633
      %v645 = vadd.f32 %v548, %v635
      %v646 = vadd.f32 %v549, %v637
      %s647 = scalar_lea.vmem %s1, 80
      %v648 = vld [vmem:[%s647] sm:$0xf]
      %v649 = vld [vmem:[%s647 + $0x4] sm:$0xf]
      %v650 = vld [vmem:[%s647 + $0x8] sm:$0xf]
      %v651 = vld [vmem:[%s647 + $0xc] sm:$0xf]
      %v656 = vunpack.c.l.b16 %v648
      %v657 = vunpack.c.l.b16 %v649
      %v658 = vunpack.c.l.b16 %v650
      %v659 = vunpack.c.l.b16 %v651
      %v660 = vpack.c.b16 %v657, %v656
      %v661 = vpack.c.b16 %v659, %v658
      %662 = vrot.lane.b32.xlu0 %v202, 110
      %v663 = vpop.permute.xlu0 %662
      %664 = vrot.lane.b32.xlu0 %v203, 110
      %v665 = vpop.permute.xlu0 %664
      %666 = vrot.lane.b32.xlu0 %v204, 110
      %v667 = vpop.permute.xlu0 %666
      %vm668 = vcmask 900096
      %v669 = vsel %vm668, %v663, %v665
      %v670 = vsel %vm668, %v665, %v667
      %v672 = vsel %vm214, %v660, 0
      %v675 = vsel %vm214, %v661, 0
      %v678 = vsel %vm221, %v669, 0
      %v681 = vsel %vm221, %v670, 0
      %683 = vmatprep.subr.bf16.mxu0 0
      %684 = vmatpush1.bf16.msra.mxu0 0
      %685 = vmatprep.subr.bf16.mxu0 0
      %686 = vmatpush1.bf16.msra.mxu0 0
      %687 = vmatprep.subr.bf16.mxu0 0
      %688 = vmatpush1.bf16.msra.mxu0 0
      %689 = vmatprep.subr.bf16.mxu0 0
      %690 = vmatpush1.bf16.msra.mxu0 0
      %691 = vmatprep.subr.bf16.mxu0 0
      %692 = vmatpush1.bf16.msra.mxu0 0
      %693 = vmatprep.subr.bf16.mxu0 0
      %694 = vmatpush1.bf16.msra.mxu0 0
      %695 = vmatprep.subr.bf16.mxu0 0
      %696 = vmatpush1.bf16.msra.mxu0 0
      %697 = vmatprep.subr.bf16.mxu0 %v681
      %698 = vmatpush1.bf16.msra.mxu0 %v678
      %699 = vmatprep.subr.bf16.mxu0 0
      %700 = vmatpush2.bf16.msra.mxu0 0
      %701 = vmatprep.subr.bf16.mxu0 0
      %702 = vmatpush2.bf16.msra.mxu0 0
      %703 = vmatprep.subr.bf16.mxu0 0
      %704 = vmatpush2.bf16.msra.mxu0 0
      %705 = vmatprep.subr.bf16.mxu0 0
      %706 = vmatpush2.bf16.msra.mxu0 0
      %707 = vmatprep.subr.bf16.mxu0 0
      %708 = vmatpush2.bf16.msra.mxu0 0
      %709 = vmatprep.subr.bf16.mxu0 0
      %710 = vmatpush2.bf16.msra.mxu0 0
      %711 = vmatprep.subr.bf16.mxu0 0
      %712 = vmatpush2.bf16.msra.mxu0 0
      %713 = vmatprep.subr.bf16.mxu0 0
      %714 = vmatpush2.bf16.msra.mxu0 0
      %715 = vmatprep.mubr.bf16.mxu0 0
      %716 = vmatmul.mubr.bf16.gmra.mxu0 %v672
      %v717 = vpop.f32.mrf.mxu0
      %v718 = vadd.f32 0.0, %v717
      %v719 = vpop.f32.mrf.mxu0
      %v720 = vadd.f32 0.0, %v719
      %v721 = vpop.f32.mrf.mxu0
      %v722 = vadd.f32 0.0, %v721
      %v723 = vpop.f32.mrf.mxu0
      %v724 = vadd.f32 0.0, %v723
      %725 = vmatprep.mubr.bf16.mxu0 0
      %726 = vmatmul.mubr.bf16.gmra.mxu0 %v675
      %v727 = vpop.f32.mrf.mxu0
      %v728 = vadd.f32 0.0, %v727
      %v729 = vpop.f32.mrf.mxu0
      %v730 = vadd.f32 0.0, %v729
      %v731 = vpop.f32.mrf.mxu0
      %v732 = vadd.f32 0.0, %v731
      %v733 = vpop.f32.mrf.mxu0
      %v734 = vadd.f32 0.0, %v733
      %735 = vdwg.mxu0
      %v736 = vadd.f32 %v639, %v718
      %v737 = vadd.f32 %v640, %v720
      %v738 = vadd.f32 %v641, %v722
      %v739 = vadd.f32 %v642, %v724
      %v740 = vadd.f32 %v643, %v728
      %v741 = vadd.f32 %v644, %v730
      %v742 = vadd.f32 %v645, %v732
      %v743 = vadd.f32 %v646, %v734
      %s744 = scalar_lea.vmem %s1, 96
      %v745 = vld [vmem:[%s744] sm:$0xf]
      %v746 = vld [vmem:[%s744 + $0x4] sm:$0xf]
      %v747 = vld [vmem:[%s744 + $0x8] sm:$0xf]
      %v748 = vld [vmem:[%s744 + $0xc] sm:$0xf]
      %v753 = vunpack.c.l.b16 %v745
      %v754 = vunpack.c.l.b16 %v746
      %v755 = vunpack.c.l.b16 %v747
      %v756 = vunpack.c.l.b16 %v748
      %v757 = vpack.c.b16 %v754, %v753
      %v758 = vpack.c.b16 %v756, %v755
      %759 = vrot.lane.b32.xlu0 %v202, 96
      %v760 = vpop.permute.xlu0 %759
      %761 = vrot.lane.b32.xlu0 %v203, 96
      %v762 = vpop.permute.xlu0 %761
      %763 = vrot.lane.b32.xlu0 %v204, 96
      %v764 = vpop.permute.xlu0 %763
      %vm765 = vcmask 785408
      %v766 = vsel %vm765, %v760, %v762
      %v767 = vsel %vm765, %v762, %v764
      %v769 = vsel %vm214, %v757, 0
      %v772 = vsel %vm214, %v758, 0
      %v775 = vsel %vm221, %v766, 0
      %v778 = vsel %vm221, %v767, 0
      %780 = vmatprep.subr.bf16.mxu0 0
      %781 = vmatpush1.bf16.msra.mxu0 0
      %782 = vmatprep.subr.bf16.mxu0 0
      %783 = vmatpush1.bf16.msra.mxu0 0
      %784 = vmatprep.subr.bf16.mxu0 0
      %785 = vmatpush1.bf16.msra.mxu0 0
      %786 = vmatprep.subr.bf16.mxu0 0
      %787 = vmatpush1.bf16.msra.mxu0 0
      %788 = vmatprep.subr.bf16.mxu0 0
      %789 = vmatpush1.bf16.msra.mxu0 0
      %790 = vmatprep.subr.bf16.mxu0 0
      %791 = vmatpush1.bf16.msra.mxu0 0
      %792 = vmatprep.subr.bf16.mxu0 0
      %793 = vmatpush1.bf16.msra.mxu0 0
      %794 = vmatprep.subr.bf16.mxu0 %v778
      %795 = vmatpush1.bf16.msra.mxu0 %v775
      %796 = vmatprep.subr.bf16.mxu0 0
      %797 = vmatpush2.bf16.msra.mxu0 0
      %798 = vmatprep.subr.bf16.mxu0 0
      %799 = vmatpush2.bf16.msra.mxu0 0
      %800 = vmatprep.subr.bf16.mxu0 0
      %801 = vmatpush2.bf16.msra.mxu0 0
      %802 = vmatprep.subr.bf16.mxu0 0
      %803 = vmatpush2.bf16.msra.mxu0 0
      %804 = vmatprep.subr.bf16.mxu0 0
      %805 = vmatpush2.bf16.msra.mxu0 0
      %806 = vmatprep.subr.bf16.mxu0 0
      %807 = vmatpush2.bf16.msra.mxu0 0
      %808 = vmatprep.subr.bf16.mxu0 0
      %809 = vmatpush2.bf16.msra.mxu0 0
      %810 = vmatprep.subr.bf16.mxu0 0
      %811 = vmatpush2.bf16.msra.mxu0 0
      %812 = vmatprep.mubr.bf16.mxu0 0
      %813 = vmatmul.mubr.bf16.gmra.mxu0 %v769
      %v814 = vpop.f32.mrf.mxu0
      %v815 = vadd.f32 0.0, %v814
      %v816 = vpop.f32.mrf.mxu0
      %v817 = vadd.f32 0.0, %v816
      %v818 = vpop.f32.mrf.mxu0
      %v819 = vadd.f32 0.0, %v818
      %v820 = vpop.f32.mrf.mxu0
      %v821 = vadd.f32 0.0, %v820
      %822 = vmatprep.mubr.bf16.mxu0 0
      %823 = vmatmul.mubr.bf16.gmra.mxu0 %v772
      %v824 = vpop.f32.mrf.mxu0
      %v825 = vadd.f32 0.0, %v824
      %v826 = vpop.f32.mrf.mxu0
      %v827 = vadd.f32 0.0, %v826
      %v828 = vpop.f32.mrf.mxu0
      %v829 = vadd.f32 0.0, %v828
      %v830 = vpop.f32.mrf.mxu0
      %v831 = vadd.f32 0.0, %v830
      %832 = vdwg.mxu0
      %v833 = vadd.f32 %v736, %v815
      %v834 = vadd.f32 %v737, %v817
      %v835 = vadd.f32 %v738, %v819
      %v836 = vadd.f32 %v739, %v821
      %v837 = vadd.f32 %v740, %v825
      %v838 = vadd.f32 %v741, %v827
      %v839 = vadd.f32 %v742, %v829
      %v840 = vadd.f32 %v743, %v831
      %s841 = scalar_lea.vmem %s1, 112
      %v842 = vld [vmem:[%s841] sm:$0xf]
      %v843 = vld [vmem:[%s841 + $0x4] sm:$0xf]
      %v844 = vld [vmem:[%s841 + $0x8] sm:$0xf]
      %v845 = vld [vmem:[%s841 + $0xc] sm:$0xf]
      %v850 = vunpack.c.l.b16 %v842
      %v851 = vunpack.c.l.b16 %v843
      %v852 = vunpack.c.l.b16 %v844
      %v853 = vunpack.c.l.b16 %v845
      %v854 = vpack.c.b16 %v851, %v850
      %v855 = vpack.c.b16 %v853, %v852
      %856 = vrot.lane.b32.xlu0 %v202, 95
      %v857 = vpop.permute.xlu0 %856
      %858 = vrot.lane.b32.xlu0 %v203, 95
      %v859 = vpop.permute.xlu0 %858
      %860 = vrot.lane.b32.xlu0 %v204, 95
      %v861 = vpop.permute.xlu0 %860
      %vm862 = vcmask 777216
      %v863 = vsel %vm862, %v857, %v859
      %v864 = vsel %vm862, %v859, %v861
      %v866 = vsel %vm214, %v854, 0
      %v869 = vsel %vm214, %v855, 0
      %v872 = vsel %vm221, %v863, 0
      %v875 = vsel %vm221, %v864, 0
      %877 = vmatprep.subr.bf16.mxu0 0
      %878 = vmatpush1.bf16.msra.mxu0 0
      %879 = vmatprep.subr.bf16.mxu0 0
      %880 = vmatpush1.bf16.msra.mxu0 0
      %881 = vmatprep.subr.bf16.mxu0 0
      %882 = vmatpush1.bf16.msra.mxu0 0
      %883 = vmatprep.subr.bf16.mxu0 0
      %884 = vmatpush1.bf16.msra.mxu0 0
      %885 = vmatprep.subr.bf16.mxu0 0
      %886 = vmatpush1.bf16.msra.mxu0 0
      %887 = vmatprep.subr.bf16.mxu0 0
      %888 = vmatpush1.bf16.msra.mxu0 0
      %889 = vmatprep.subr.bf16.mxu0 0
      %890 = vmatpush1.bf16.msra.mxu0 0
      %891 = vmatprep.subr.bf16.mxu0 %v875
      %892 = vmatpush1.bf16.msra.mxu0 %v872
      %893 = vmatprep.subr.bf16.mxu0 0
      %894 = vmatpush2.bf16.msra.mxu0 0
      %895 = vmatprep.subr.bf16.mxu0 0
      %896 = vmatpush2.bf16.msra.mxu0 0
      %897 = vmatprep.subr.bf16.mxu0 0
      %898 = vmatpush2.bf16.msra.mxu0 0
      %899 = vmatprep.subr.bf16.mxu0 0
      %900 = vmatpush2.bf16.msra.mxu0 0
      %901 = vmatprep.subr.bf16.mxu0 0
      %902 = vmatpush2.bf16.msra.mxu0 0
      %903 = vmatprep.subr.bf16.mxu0 0
      %904 = vmatpush2.bf16.msra.mxu0 0
      %905 = vmatprep.subr.bf16.mxu0 0
      %906 = vmatpush2.bf16.msra.mxu0 0
      %907 = vmatprep.subr.bf16.mxu0 0
      %908 = vmatpush2.bf16.msra.mxu0 0
      %909 = vmatprep.mubr.bf16.mxu0 0
      %910 = vmatmul.mubr.bf16.gmra.mxu0 %v866
      %v911 = vpop.f32.mrf.mxu0
      %v912 = vadd.f32 0.0, %v911
      %v913 = vpop.f32.mrf.mxu0
      %v914 = vadd.f32 0.0, %v913
      %v915 = vpop.f32.mrf.mxu0
      %v916 = vadd.f32 0.0, %v915
      %v917 = vpop.f32.mrf.mxu0
      %v918 = vadd.f32 0.0, %v917
      %919 = vmatprep.mubr.bf16.mxu0 0
      %920 = vmatmul.mubr.bf16.gmra.mxu0 %v869
      %v921 = vpop.f32.mrf.mxu0
      %v922 = vadd.f32 0.0, %v921
      %v923 = vpop.f32.mrf.mxu0
      %v924 = vadd.f32 0.0, %v923
      %v925 = vpop.f32.mrf.mxu0
      %v926 = vadd.f32 0.0, %v925
      %v927 = vpop.f32.mrf.mxu0
      %v928 = vadd.f32 0.0, %v927
      %929 = vdwg.mxu0
      %v930 = vadd.f32 %v833, %v912
      %v931 = vadd.f32 %v834, %v914
      %v932 = vadd.f32 %v835, %v916
      %v933 = vadd.f32 %v836, %v918
      %v934 = vadd.f32 %v837, %v922
      %v935 = vadd.f32 %v838, %v924
      %v936 = vadd.f32 %v839, %v926
      %v937 = vadd.f32 %v840, %v928
      %s938 = scalar_lea.vmem %s1, 128
      %v939 = vld [vmem:[%s938] sm:$0xf]
      %v940 = vld [vmem:[%s938 + $0x4] sm:$0xf]
      %v941 = vld [vmem:[%s938 + $0x8] sm:$0xf]
      %v942 = vld [vmem:[%s938 + $0xc] sm:$0xf]
      %v947 = vunpack.c.l.b16 %v939
      %v948 = vunpack.c.l.b16 %v940
      %v949 = vunpack.c.l.b16 %v941
      %v950 = vunpack.c.l.b16 %v942
      %v951 = vpack.c.b16 %v948, %v947
      %v952 = vpack.c.b16 %v950, %v949
      %953 = vrot.lane.b32.xlu0 %v202, 94
      %v954 = vpop.permute.xlu0 %953
      %955 = vrot.lane.b32.xlu0 %v203, 94
      %v956 = vpop.permute.xlu0 %955
      %957 = vrot.lane.b32.xlu0 %v204, 94
      %v958 = vpop.permute.xlu0 %957
      %vm959 = vcmask 769024
      %v960 = vsel %vm959, %v954, %v956
      %v961 = vsel %vm959, %v956, %v958
      %v963 = vsel %vm214, %v951, 0
      %v966 = vsel %vm214, %v952, 0
      %v969 = vsel %vm221, %v960, 0
      %v972 = vsel %vm221, %v961, 0
      %974 = vmatprep.subr.bf16.mxu0 0
      %975 = vmatpush1.bf16.msra.mxu0 0
      %976 = vmatprep.subr.bf16.mxu0 0
      %977 = vmatpush1.bf16.msra.mxu0 0
      %978 = vmatprep.subr.bf16.mxu0 0
      %979 = vmatpush1.bf16.msra.mxu0 0
      %980 = vmatprep.subr.bf16.mxu0 0
      %981 = vmatpush1.bf16.msra.mxu0 0
      %982 = vmatprep.subr.bf16.mxu0 0
      %983 = vmatpush1.bf16.msra.mxu0 0
      %984 = vmatprep.subr.bf16.mxu0 0
      %985 = vmatpush1.bf16.msra.mxu0 0
      %986 = vmatprep.subr.bf16.mxu0 0
      %987 = vmatpush1.bf16.msra.mxu0 0
      %988 = vmatprep.subr.bf16.mxu0 %v972
      %989 = vmatpush1.bf16.msra.mxu0 %v969
      %990 = vmatprep.subr.bf16.mxu0 0
      %991 = vmatpush2.bf16.msra.mxu0 0
      %992 = vmatprep.subr.bf16.mxu0 0
      %993 = vmatpush2.bf16.msra.mxu0 0
      %994 = vmatprep.subr.bf16.mxu0 0
      %995 = vmatpush2.bf16.msra.mxu0 0
      %996 = vmatprep.subr.bf16.mxu0 0
      %997 = vmatpush2.bf16.msra.mxu0 0
      %998 = vmatprep.subr.bf16.mxu0 0
      %999 = vmatpush2.bf16.msra.mxu0 0
      %1000 = vmatprep.subr.bf16.mxu0 0
      %1001 = vmatpush2.bf16.msra.mxu0 0
      %1002 = vmatprep.subr.bf16.mxu0 0
      %1003 = vmatpush2.bf16.msra.mxu0 0
      %1004 = vmatprep.subr.bf16.mxu0 0
      %1005 = vmatpush2.bf16.msra.mxu0 0
      %1006 = vmatprep.mubr.bf16.mxu0 0
      %1007 = vmatmul.mubr.bf16.gmra.mxu0 %v963
      %v1008 = vpop.f32.mrf.mxu0
      %v1009 = vadd.f32 0.0, %v1008
      %v1010 = vpop.f32.mrf.mxu0
      %v1011 = vadd.f32 0.0, %v1010
      %v1012 = vpop.f32.mrf.mxu0
      %v1013 = vadd.f32 0.0, %v1012
      %v1014 = vpop.f32.mrf.mxu0
      %v1015 = vadd.f32 0.0, %v1014
      %1016 = vmatprep.mubr.bf16.mxu0 0
      %1017 = vmatmul.mubr.bf16.gmra.mxu0 %v966
      %v1018 = vpop.f32.mrf.mxu0
      %v1019 = vadd.f32 0.0, %v1018
      %v1020 = vpop.f32.mrf.mxu0
      %v1021 = vadd.f32 0.0, %v1020
      %v1022 = vpop.f32.mrf.mxu0
      %v1023 = vadd.f32 0.0, %v1022
      %v1024 = vpop.f32.mrf.mxu0
      %v1025 = vadd.f32 0.0, %v1024
      %1026 = vdwg.mxu0
      %v1027 = vadd.f32 %v930, %v1009
      %v1028 = vadd.f32 %v931, %v1011
      %v1029 = vadd.f32 %v932, %v1013
      %v1030 = vadd.f32 %v933, %v1015
      %v1031 = vadd.f32 %v934, %v1019
      %v1032 = vadd.f32 %v935, %v1021
      %v1033 = vadd.f32 %v936, %v1023
      %v1034 = vadd.f32 %v937, %v1025
      %1036 = vset.pattern.permute.xlu0 0
      %1037 = vperm.xlu0 %1036, %v174
      %v1038 = vpop.permute.xlu0 %1037
      %1041 = vset.pattern.permute.xlu0 0
      %1042 = vperm.xlu0 %1041, %v175
      %v1043 = vpop.permute.xlu0 %1042
      %1046 = vset.pattern.permute.xlu0 0
      %1047 = vperm.xlu0 %1046, %v176
      %v1048 = vpop.permute.xlu0 %1047
      %1051 = vset.pattern.permute.xlu0 0
      %1052 = vperm.xlu0 %1051, %v177
      %v1053 = vpop.permute.xlu0 %1052
      %v1055 = vadd.f32 %v1027, %v1038
      %v1056 = vadd.f32 %v1028, %v1038
      %v1057 = vadd.f32 %v1029, %v1043
      %v1058 = vadd.f32 %v1030, %v1043
      %v1059 = vadd.f32 %v1031, %v1048
      %v1060 = vadd.f32 %v1032, %v1048
      %v1061 = vadd.f32 %v1033, %v1053
      %v1062 = vadd.f32 %v1034, %v1053
      %v1063 = vmax.f32 %v1055, 0.0
      %v1064 = vmax.f32 %v1056, 0.0
      %v1065 = vmax.f32 %v1057, 0.0
      %v1066 = vmax.f32 %v1058, 0.0
      %v1067 = vmax.f32 %v1059, 0.0
      %v1068 = vmax.f32 %v1060, 0.0
      %v1069 = vmax.f32 %v1061, 0.0
      %v1070 = vmax.f32 %v1062, 0.0
      %v1071 = vpack.c.bf16 %v1065, %v1063
      %v1072 = vpack.c.bf16 %v1066, %v1064
      %v1073 = vpack.c.bf16 %v1069, %v1067
      %v1074 = vpack.c.bf16 %v1070, %v1068
      %v1079 = vunpack.c.l.b16 %v1071
      %v1080 = vunpack.c.l.b16 %v1072
      %v1081 = vunpack.c.h.b16 %v1071
      %v1082 = vunpack.c.h.b16 %v1072
      %v1083 = vunpack.c.l.b16 %v1073
      %v1084 = vunpack.c.l.b16 %v1074
      %v1085 = vunpack.c.h.b16 %v1073
      %v1086 = vunpack.c.h.b16 %v1074
      %v1087 = vpack.c.b16 %v1080, %v1079
      %v1088 = vpack.c.b16 %v1082, %v1081
      %v1089 = vpack.c.b16 %v1084, %v1083
      %v1090 = vpack.c.b16 %v1086, %v1085
      %1095 = vst [vmem:[%s170] sm:$0xff] %v1087
      %1096 = vst [vmem:[%s170 + $0x8] sm:$0xff] %v1088
      %1097 = vst [vmem:[%s170 + $0x10] sm:$0xff] %v1089
      %1098 = vst [vmem:[%s170 + $0x18] sm:$0xff] %v1090
      %p1099 = scmp.lt.s32.totalorder %s14, 1
      %s1100 = scalar_select %p1099, %s14, 1
      %s1101 = smul.addr %s1100, 8
      %s1102 = smul.addr %s1101, 4
      %s1103 = scalar_lea.vmem %s3, %s1102
      // Predicated region
      $region33: #{decoder_block_forward.3} parent=31 // pred_check
        %p1104 = pneg %p100
      $region34: #{decoder_block_forward.3} parent=31 // pred_check_branch
        %1106 = sbr.rel (%p1104) target = $region36
      $region35: #{decoder_block_forward.3} parent=31 // pred_region
        _
      $region36: #{decoder_block_forward.3} parent=31 // pred_fallthru
        _
    $region32: #{decoder_block_forward.3} parent=5 // pred_fallthru
      _
    %p1107 = scmp.le.s32.totalorder 2, %s9
    // Predicated region
    $region37: #{decoder_block_forward.3} parent=5 // pred_check
      %p1108 = pneg %p1107
    $region38: #{decoder_block_forward.3} parent=5 // pred_check_branch
      %1110 = sbr.rel (%p1108) target = $region40
    $region39: #{decoder_block_forward.3} parent=5 // pred_region
      %s1111 = ssub.s32 %s9, 2
      // Predicated region
      $region41: #{decoder_block_forward.3} parent=39 // pred_check
        %p1112 = pneg %p106
      $region42: #{decoder_block_forward.3} parent=39 // pred_check_branch
        %1114 = sbr.rel (%p1112) target = $region44
      $region43: #{decoder_block_forward.3} parent=39 // pred_region
        %p1115 = scmp.lt.s32.totalorder %s15, 1
        %s1116 = scalar_select %p1115, %s15, 1
        %s1117 = smul.addr %s1116, 8
        %s1118 = smul.addr %s1117, 4
        %s1119 = scalar_lea.vmem %s3, %s1118
      $region44: #{decoder_block_forward.3} parent=39 // pred_fallthru
        _
    $region40: #{decoder_block_forward.3} parent=5 // pred_fallthru
      _
  $region6: #{decoder_block_forward.3} parent=0 // loop_footer
    %s13 = sadd.s32 1, %s9
  $region7: #{decoder_block_forward.3} parent=0 // loop_footer_branch
    %8 = sbr.rel target = $region3
  $region8: #{decoder_block_forward.3} parent=0 // loop_exit
    _

// kernel: decoder_block_forward.5
$region0: #{decoder_block_forward.5}
  #allocation0 [shape = 'u32[]', space=smem, size = 0x4, offset = 0x4, fixed_abs, tag = 'smem constant byte address 0x4 - core index']
  #allocation1 [shape = 'u32[144,128]{1,0:T(1,128)}', space=vmem, size = 0x12000, scoped, tag = 'internal scratch']
  %s0 = inlined_call_operand.vmem [shape: bf16[2,32,640], index: 0, kind: input, shape index: {}]
  %s1 = inlined_call_operand.vmem [shape: bf16[25,8,32], index: 1, kind: input, shape index: {}]
  %s2 = inlined_call_operand.vmem [shape: f32[8,1], index: 2, kind: input, shape index: {}]
  %s3 = inlined_call_operand.vmem [shape: f32[2,32,432], index: 3, kind: output, shape index: {}]
  %s4 = sld [smem:[#allocation0]]
  $region45: #{decoder_block_forward.5} parent=0
    _
  %s6 = ssub.s32 1, %s4
  %s7 = scalar_select 0, %s6, %s4
  loop: start=0, step=1, limit=4
  $region2: #{decoder_block_forward.5} parent=0 // loop_pre_header
    _
  $region3: #{decoder_block_forward.5} parent=0 // loop_header
    %s9 = sphi 0, %s13
    %p10 = scmp.ge.s32.totalorder %s9, 4
    %s19 = sphi 0, %s21
    %s22 = sphi 0, %s19
    %s23 = sphi 0, %s22
    %s39 = sphi 0, %s23
    %s43 = sphi 0, %s43
    %s45 = sphi 0, %s43
    %s46 = sphi 0, %s45
    %s60 = sphi 0, %s46
    %s64 = sphi 0, %s64
    %s66 = sphi 0, %s64
    %s67 = sphi 0, %s66
    %s81 = sphi 0, %s67
    %s87 = sphi 0, %s89
    %s90 = sphi 0, %s87
    %s91 = sphi 0, %s90
    %s107 = sphi 0, %s91
  $region4: #{decoder_block_forward.5} parent=0 // loop_header_branch
    %12 = sbr.rel (%p10) target = $region8
  $region5: #{decoder_block_forward.5} parent=0 // loop_body
    %s14 = ssub.s32 %s9, 1
    %s15 = ssub.s32 %s9, 2
    %s16 = sadd.s32 %s9, 1
    %s17 = ssub.s32 %s9, %s16
    %p18 = scmp.eq.s32.totalorder %s17, 0
    %s20 = sadd.s32 %s19, 1
    %s21 = scalar_select %p18, %s19, %s20
    %p24 = pneg %p18
    %p25 = scmp.eq.s32.totalorder %s9, 1
    %p26 = por %p24, %p25
    %p27 = scmp.ne.s32.totalorder %s19, %s22
    %p28 = scmp.eq.s32.totalorder %s9, 0
    %p29 = por %p27, %p28
    %p30 = scmp.ne.s32.totalorder %s19, %s22
    %p31 = scmp.eq.s32.totalorder %s14, 1
    %p32 = por %p30, %p31
    %p33 = scmp.ne.s32.totalorder %s22, %s23
    %p34 = scmp.eq.s32.totalorder %s14, 0
    %p35 = por %p33, %p34
    %p36 = scmp.ne.s32.totalorder %s22, %s23
    %p37 = scmp.eq.s32.totalorder %s15, 1
    %p38 = por %p36, %p37
    %p40 = scmp.ne.s32.totalorder %s23, %s39
    %p41 = scmp.eq.s32.totalorder %s15, 0
    %p42 = por %p40, %p41
    %s44 = sadd.s32 %s43, 1
    %p47 = scmp.eq.s32.totalorder %s9, 1
    %p48 = scmp.ne.s32.totalorder %s43, %s45
    %p49 = scmp.eq.s32.totalorder %s9, 0
    %p50 = por %p48, %p49
    %p51 = scmp.ne.s32.totalorder %s43, %s45
    %p52 = scmp.eq.s32.totalorder %s14, 1
    %p53 = por %p51, %p52
    %p54 = scmp.ne.s32.totalorder %s45, %s46
    %p55 = scmp.eq.s32.totalorder %s14, 0
    %p56 = por %p54, %p55
    %p57 = scmp.ne.s32.totalorder %s45, %s46
    %p58 = scmp.eq.s32.totalorder %s15, 1
    %p59 = por %p57, %p58
    %p61 = scmp.ne.s32.totalorder %s46, %s60
    %p62 = scmp.eq.s32.totalorder %s15, 0
    %p63 = por %p61, %p62
    %s65 = sadd.s32 %s64, 1
    %p68 = scmp.eq.s32.totalorder %s9, 1
    %p69 = scmp.ne.s32.totalorder %s64, %s66
    %p70 = scmp.eq.s32.totalorder %s9, 0
    %p71 = por %p69, %p70
    %p72 = scmp.ne.s32.totalorder %s64, %s66
    %p73 = scmp.eq.s32.totalorder %s14, 1
    %p74 = por %p72, %p73
    %p75 = scmp.ne.s32.totalorder %s66, %s67
    %p76 = scmp.eq.s32.totalorder %s14, 0
    %p77 = por %p75, %p76
    %p78 = scmp.ne.s32.totalorder %s66, %s67
    %p79 = scmp.eq.s32.totalorder %s15, 1
    %p80 = por %p78, %p79
    %p82 = scmp.ne.s32.totalorder %s67, %s81
    %p83 = scmp.eq.s32.totalorder %s15, 0
    %p84 = por %p82, %p83
    %s85 = ssub.s32 %s9, %s16
    %p86 = scmp.eq.s32.totalorder %s85, 0
    %s88 = sadd.s32 %s87, 1
    %s89 = scalar_select %p86, %s87, %s88
    %p92 = pneg %p86
    %p93 = scmp.eq.s32.totalorder %s9, 1
    %p94 = por %p92, %p93
    %p95 = scmp.ne.s32.totalorder %s87, %s90
    %p96 = scmp.eq.s32.totalorder %s9, 0
    %p97 = por %p95, %p96
    %p98 = scmp.ne.s32.totalorder %s87, %s90
    %p99 = scmp.eq.s32.totalorder %s14, 1
    %p100 = por %p98, %p99
    %p101 = scmp.ne.s32.totalorder %s90, %s91
    %p102 = scmp.eq.s32.totalorder %s14, 0
    %p103 = por %p101, %p102
    %p104 = scmp.ne.s32.totalorder %s90, %s91
    %p105 = scmp.eq.s32.totalorder %s15, 1
    %p106 = por %p104, %p105
    %p108 = scmp.ne.s32.totalorder %s91, %s107
    %p109 = scmp.eq.s32.totalorder %s15, 0
    %p110 = por %p108, %p109
    %p111 = scmp.le.s32.totalorder 1, %s9
    %p112 = scmp.lt.s32.totalorder %s9, 3
    %p113 = pnand %p111, %p112
    %p114 = pneg %p113
    // Predicated region
    $region9: #{decoder_block_forward.5} parent=5 // pred_check
      _
    $region10: #{decoder_block_forward.5} parent=5 // pred_check_branch
      %116 = sbr.rel (%p113) target = $region12
    $region11: #{decoder_block_forward.5} parent=5 // pred_region
      %s117 = ssub.s32 %s9, 1
      // Predicated region
      $region13: #{decoder_block_forward.5} parent=11 // pred_check
        %p118 = pneg %p56
      $region14: #{decoder_block_forward.5} parent=11 // pred_check_branch
        %120 = sbr.rel (%p118) target = $region16
      $region15: #{decoder_block_forward.5} parent=11 // pred_region
        _
      $region16: #{decoder_block_forward.5} parent=11 // pred_fallthru
        _
      // Predicated region
      $region17: #{decoder_block_forward.5} parent=11 // pred_check
        %p121 = pneg %p77
      $region18: #{decoder_block_forward.5} parent=11 // pred_check_branch
        %123 = sbr.rel (%p121) target = $region20
      $region19: #{decoder_block_forward.5} parent=11 // pred_region
        _
      $region20: #{decoder_block_forward.5} parent=11 // pred_fallthru
        _
    $region12: #{decoder_block_forward.5} parent=5 // pred_fallthru
      _
    %p124 = scmp.lt.s32.totalorder %s9, 2
    // Predicated region
    $region21: #{decoder_block_forward.5} parent=5 // pred_check
      %p125 = pneg %p124
    $region22: #{decoder_block_forward.5} parent=5 // pred_check_branch
      %127 = sbr.rel (%p125) target = $region24
    $region23: #{decoder_block_forward.5} parent=5 // pred_region
      // Predicated region
      $region25: #{decoder_block_forward.5} parent=23 // pred_check
        %p128 = pneg %p29
      $region26: #{decoder_block_forward.5} parent=23 // pred_check_branch
        %130 = sbr.rel (%p128) target = $region28
      $region27: #{decoder_block_forward.5} parent=23 // pred_region
        %p131 = scmp.lt.s32.totalorder %s9, 1
        %s132 = scalar_select %p131, %s9, 1
        %s133 = smul.addr %s132, 20
        %s134 = smul.addr %s133, 4
        %s135 = scalar_lea.vmem %s0, %s134
      $region28: #{decoder_block_forward.5} parent=23 // pred_fallthru
        _
    $region24: #{decoder_block_forward.5} parent=5 // pred_fallthru
      _
    %p136 = scmp.le.s32.totalorder 1, %s9
    %p137 = scmp.lt.s32.totalorder %s9, 3
    %p138 = pnand %p136, %p137
    %p139 = pneg %p138
    // Predicated region
    $region29: #{decoder_block_forward.5} parent=5 // pred_check
      _
    $region30: #{decoder_block_forward.5} parent=5 // pred_check_branch
      %141 = sbr.rel (%p138) target = $region32
    $region31: #{decoder_block_forward.5} parent=5 // pred_region
      %s142 = ssub.s32 %s9, 1
      %p143 = scmp.lt.s32.totalorder %s14, 1
      %s144 = scalar_select %p143, %s14, 1
      %s145 = smul.addr %s144, 20
      %s146 = smul.addr %s145, 4
      %s147 = scalar_lea.vmem %s0, %s146
      %p148 = pneg %p35
      %p149 = pneg %p32
      %p150 = pneg %p56
      %p151 = pneg %p53
      %p152 = pneg %p77
      %p153 = pneg %p74
      %p154 = pneg %p103
      %p155 = pneg %p100
      %p156 = scmp.lt.s32.totalorder %s14, 1
      %s157 = scalar_select %p156, %s14, 1
      %s158 = smul.addr %s157, 16
      %s159 = smul.addr %s158, 8
      %s160 = scalar_lea.vmem %s3, %s159
      %p161 = scmp.lt.s32.totalorder %s14, 1
      %s162 = scalar_select %p161, %s14, 1
      %s163 = smul.addr %s162, 20
      %s164 = smul.addr %s163, 4
      %s165 = scalar_lea.vmem %s0, %s164
      %p166 = scmp.lt.s32.totalorder %s14, 1
      %s167 = scalar_select %p166, %s14, 1
      %s168 = smul.addr %s167, 16
      %s169 = smul.addr %s168, 8
      %s170 = scalar_lea.vmem %s3, %s169
      %v172 = vld [vmem:[%s165] sm:$0xff]
      %v173 = vld [vmem:[%s165 + $0x8] sm:$0xff]
      %v174 = vld [vmem:[%s165 + $0x10] sm:$0xf]
      %v175 = vld [vmem:[%s165 + $0x14] sm:$0xff]
      %v176 = vld [vmem:[%s165 + $0x1c] sm:$0xff]
      %v177 = vld [vmem:[%s165 + $0x24] sm:$0xf]
      %v178 = vld [vmem:[%s165 + $0x28] sm:$0xff]
      %v179 = vld [vmem:[%s165 + $0x30] sm:$0xff]
      %v180 = vld [vmem:[%s165 + $0x38] sm:$0xf]
      %v181 = vld [vmem:[%s165 + $0x3c] sm:$0xff]
      %v182 = vld [vmem:[%s165 + $0x44] sm:$0xff]
      %v183 = vld [vmem:[%s165 + $0x4c] sm:$0xf]
      %v184 = vld [vmem:[%s2] sm:$0xff]
      %v185 = vld [vmem:[%s1] sm:$0xf]
      %s186 = scalar_lea.vmem %s1, 4
      %v187 = vld [vmem:[%s186] sm:$0xf]
      %v200 = vunpack.c.h.b16 %v172
      %v201 = vunpack.c.l.b16 %v173
      %v202 = vunpack.c.h.b16 %v173
      %v203 = vunpack.c.l.b16 %v174
      %v204 = vunpack.c.h.b16 %v175
      %v205 = vunpack.c.l.b16 %v176
      %v206 = vunpack.c.h.b16 %v176
      %v207 = vunpack.c.l.b16 %v177
      %v208 = vunpack.c.h.b16 %v178
      %v209 = vunpack.c.l.b16 %v179
      %v210 = vunpack.c.h.b16 %v179
      %v211 = vunpack.c.l.b16 %v180
      %v212 = vunpack.c.h.b16 %v181
      %v213 = vunpack.c.l.b16 %v182
      %v214 = vunpack.c.h.b16 %v182
      %v215 = vunpack.c.l.b16 %v183
      %v216 = vpack.c.b16 %v204, %v200
      %v217 = vpack.c.b16 %v205, %v201
      %v218 = vpack.c.b16 %v206, %v202
      %v219 = vpack.c.b16 %v207, %v203
      %v220 = vpack.c.b16 %v212, %v208
      %v221 = vpack.c.b16 %v213, %v209
      %v222 = vpack.c.b16 %v214, %v210
      %v223 = vpack.c.b16 %v215, %v211
      %224 = vrot.lane.b32.xlu0 %v216, 109
      %v225 = vpop.permute.xlu0 %224
      %226 = vrot.lane.b32.xlu0 %v217, 109
      %v227 = vpop.permute.xlu0 %226
      %228 = vrot.lane.b32.xlu0 %v218, 109
      %v229 = vpop.permute.xlu0 %228
      %230 = vrot.lane.b32.xlu0 %v219, 109
      %v231 = vpop.permute.xlu0 %230
      %232 = vrot.lane.b32.xlu0 %v220, 109
      %v233 = vpop.permute.xlu0 %232
      %234 = vrot.lane.b32.xlu0 %v221, 109
      %v235 = vpop.permute.xlu0 %234
      %236 = vrot.lane.b32.xlu0 %v222, 109
      %v237 = vpop.permute.xlu0 %236
      %238 = vrot.lane.b32.xlu0 %v223, 109
      %v239 = vpop.permute.xlu0 %238
      %vm240 = vcmask 891904
      %v241 = vsel %vm240, %v225, %v227
      %v242 = vsel %vm240, %v227, %v229
      %v243 = vsel %vm240, %v229, %v231
      %v244 = vsel %vm240, %v233, %v235
      %v245 = vsel %vm240, %v235, %v237
      %v246 = vsel %vm240, %v237, %v239
      %vm255 = vcmask 261120
      %v257 = vsel %vm255, %v187, 0
      %259 = vmatprep.subr.bf16.mxu0 0
      %260 = vmatpush1.bf16.msra.mxu0 0
      %261 = vmatprep.subr.bf16.mxu0 0
      %262 = vmatpush1.bf16.msra.mxu0 0
      %263 = vmatprep.subr.bf16.mxu0 0
      %264 = vmatpush1.bf16.msra.mxu0 0
      %265 = vmatprep.subr.bf16.mxu0 0
      %266 = vmatpush1.bf16.msra.mxu0 0
      %267 = vmatprep.subr.bf16.mxu0 0
      %268 = vmatpush1.bf16.msra.mxu0 0
      %269 = vmatprep.subr.bf16.mxu0 0
      %270 = vmatpush1.bf16.msra.mxu0 0
      %271 = vmatprep.subr.bf16.mxu0 %v245
      %272 = vmatpush1.bf16.msra.mxu0 %v244
      %273 = vmatprep.subr.bf16.mxu0 %v242
      %274 = vmatpush1.bf16.msra.mxu0 %v241
      %275 = vmatprep.subr.bf16.mxu0 0
      %276 = vmatpush2.bf16.msra.mxu0 0
      %277 = vmatprep.subr.bf16.mxu0 0
      %278 = vmatpush2.bf16.msra.mxu0 0
      %279 = vmatprep.subr.bf16.mxu0 0
      %280 = vmatpush2.bf16.msra.mxu0 0
      %281 = vmatprep.subr.bf16.mxu0 0
      %282 = vmatpush2.bf16.msra.mxu0 0
      %283 = vmatprep.subr.bf16.mxu0 0
      %284 = vmatpush2.bf16.msra.mxu0 0
      %285 = vmatprep.subr.bf16.mxu0 0
      %286 = vmatpush2.bf16.msra.mxu0 0
      %287 = vmatprep.subr.bf16.mxu0 0
      %288 = vmatpush2.bf16.msra.mxu0 0
      %289 = vmatprep.subr.bf16.mxu0 0
      %290 = vmatpush2.bf16.msra.mxu0 0
      %291 = vmatprep.mubr.bf16.mxu0 0
      %292 = vmatmul.mubr.bf16.gmra.mxu0 %v257
      %v293 = vpop.f32.mrf.mxu0
      %v294 = vadd.f32 0.0, %v293
      %v295 = vpop.f32.mrf.mxu0
      %v296 = vadd.f32 0.0, %v295
      %v297 = vpop.f32.mrf.mxu0
      %v298 = vpop.f32.mrf.mxu0
      %299 = vdwg.mxu0
      %300 = vmatprep.subr.bf16.mxu0 0
      %301 = vmatpush1.bf16.msra.mxu0 0
      %302 = vmatprep.subr.bf16.mxu0 0
      %303 = vmatpush1.bf16.msra.mxu0 0
      %304 = vmatprep.subr.bf16.mxu0 0
      %305 = vmatpush1.bf16.msra.mxu0 0
      %306 = vmatprep.subr.bf16.mxu0 0
      %307 = vmatpush1.bf16.msra.mxu0 0
      %308 = vmatprep.subr.bf16.mxu0 0
      %309 = vmatpush1.bf16.msra.mxu0 0
      %310 = vmatprep.subr.bf16.mxu0 0
      %311 = vmatpush1.bf16.msra.mxu0 0
      %312 = vmatprep.subr.bf16.mxu0 %v239
      %313 = vmatpush1.bf16.msra.mxu0 %v246
      %314 = vmatprep.subr.bf16.mxu0 %v231
      %315 = vmatpush1.bf16.msra.mxu0 %v243
      %316 = vmatprep.subr.bf16.mxu0 0
      %317 = vmatpush2.bf16.msra.mxu0 0
      %318 = vmatprep.subr.bf16.mxu0 0
      %319 = vmatpush2.bf16.msra.mxu0 0
      %320 = vmatprep.subr.bf16.mxu0 0
      %321 = vmatpush2.bf16.msra.mxu0 0
      %322 = vmatprep.subr.bf16.mxu0 0
      %323 = vmatpush2.bf16.msra.mxu0 0
      %324 = vmatprep.subr.bf16.mxu0 0
      %325 = vmatpush2.bf16.msra.mxu0 0
      %326 = vmatprep.subr.bf16.mxu0 0
      %327 = vmatpush2.bf16.msra.mxu0 0
      %328 = vmatprep.subr.bf16.mxu0 0
      %329 = vmatpush2.bf16.msra.mxu0 0
      %330 = vmatprep.subr.bf16.mxu0 0
      %331 = vmatpush2.bf16.msra.mxu0 0
      %332 = vmatprep.mubr.bf16.mxu0 0
      %333 = vmatmul.mubr.bf16.gmra.mxu0 %v257
      %v334 = vpop.f32.mrf.mxu0
      %v335 = vadd.f32 0.0, %v334
      %v336 = vpop.f32.mrf.mxu0
      %v337 = vadd.f32 0.0, %v336
      %v338 = vpop.f32.mrf.mxu0
      %v339 = vpop.f32.mrf.mxu0
      %340 = vdwg.mxu0
      %341 = vrot.lane.b32.xlu0 %v216, 106
      %v342 = vpop.permute.xlu0 %341
      %343 = vrot.lane.b32.xlu0 %v217, 106
      %v344 = vpop.permute.xlu0 %343
      %345 = vrot.lane.b32.xlu0 %v218, 106
      %v346 = vpop.permute.xlu0 %345
      %347 = vrot.lane.b32.xlu0 %v219, 106
      %v348 = vpop.permute.xlu0 %347
      %349 = vrot.lane.b32.xlu0 %v220, 106
      %v350 = vpop.permute.xlu0 %349
      %351 = vrot.lane.b32.xlu0 %v221, 106
      %v352 = vpop.permute.xlu0 %351
      %353 = vrot.lane.b32.xlu0 %v222, 106
      %v354 = vpop.permute.xlu0 %353
      %355 = vrot.lane.b32.xlu0 %v223, 106
      %v356 = vpop.permute.xlu0 %355
      %vm357 = vcmask 867328
      %v358 = vsel %vm357, %v342, %v344
      %v359 = vsel %vm357, %v344, %v346
      %v360 = vsel %vm357, %v346, %v348
      %v361 = vsel %vm357, %v350, %v352
      %v362 = vsel %vm357, %v352, %v354
      %v363 = vsel %vm357, %v354, %v356
      %v373 = vsel %vm255, %v185, 0
      %375 = vmatprep.subr.bf16.mxu0 0
      %376 = vmatpush1.bf16.msra.mxu0 0
      %377 = vmatprep.subr.bf16.mxu0 0
      %378 = vmatpush1.bf16.msra.mxu0 0
      %379 = vmatprep.subr.bf16.mxu0 0
      %380 = vmatpush1.bf16.msra.mxu0 0
      %381 = vmatprep.subr.bf16.mxu0 0
      %382 = vmatpush1.bf16.msra.mxu0 0
      %383 = vmatprep.subr.bf16.mxu0 0
      %384 = vmatpush1.bf16.msra.mxu0 0
      %385 = vmatprep.subr.bf16.mxu0 0
      %386 = vmatpush1.bf16.msra.mxu0 0
      %387 = vmatprep.subr.bf16.mxu0 %v362
      %388 = vmatpush1.bf16.msra.mxu0 %v361
      %389 = vmatprep.subr.bf16.mxu0 %v359
      %390 = vmatpush1.bf16.msra.mxu0 %v358
      %391 = vmatprep.subr.bf16.mxu0 0
      %392 = vmatpush2.bf16.msra.mxu0 0
      %393 = vmatprep.subr.bf16.mxu0 0
      %394 = vmatpush2.bf16.msra.mxu0 0
      %395 = vmatprep.subr.bf16.mxu0 0
      %396 = vmatpush2.bf16.msra.mxu0 0
      %397 = vmatprep.subr.bf16.mxu0 0
      %398 = vmatpush2.bf16.msra.mxu0 0
      %399 = vmatprep.subr.bf16.mxu0 0
      %400 = vmatpush2.bf16.msra.mxu0 0
      %401 = vmatprep.subr.bf16.mxu0 0
      %402 = vmatpush2.bf16.msra.mxu0 0
      %403 = vmatprep.subr.bf16.mxu0 0
      %404 = vmatpush2.bf16.msra.mxu0 0
      %405 = vmatprep.subr.bf16.mxu0 0
      %406 = vmatpush2.bf16.msra.mxu0 0
      %407 = vmatprep.mubr.bf16.mxu0 0
      %408 = vmatmul.mubr.bf16.gmra.mxu0 %v373
      %v409 = vpop.f32.mrf.mxu0
      %v410 = vadd.f32 %v294, %v409
      %v411 = vpop.f32.mrf.mxu0
      %v412 = vadd.f32 %v296, %v411
      %v413 = vpop.f32.mrf.mxu0
      %v414 = vpop.f32.mrf.mxu0
      %415 = vdwg.mxu0
      %416 = vmatprep.subr.bf16.mxu0 0
      %417 = vmatpush1.bf16.msra.mxu0 0
      %418 = vmatprep.subr.bf16.mxu0 0
      %419 = vmatpush1.bf16.msra.mxu0 0
      %420 = vmatprep.subr.bf16.mxu0 0
      %421 = vmatpush1.bf16.msra.mxu0 0
      %422 = vmatprep.subr.bf16.mxu0 0
      %423 = vmatpush1.bf16.msra.mxu0 0
      %424 = vmatprep.subr.bf16.mxu0 0
      %425 = vmatpush1.bf16.msra.mxu0 0
      %426 = vmatprep.subr.bf16.mxu0 0
      %427 = vmatpush1.bf16.msra.mxu0 0
      %428 = vmatprep.subr.bf16.mxu0 %v356
      %429 = vmatpush1.bf16.msra.mxu0 %v363
      %430 = vmatprep.subr.bf16.mxu0 %v348
      %431 = vmatpush1.bf16.msra.mxu0 %v360
      %432 = vmatprep.subr.bf16.mxu0 0
      %433 = vmatpush2.bf16.msra.mxu0 0
      %434 = vmatprep.subr.bf16.mxu0 0
      %435 = vmatpush2.bf16.msra.mxu0 0
      %436 = vmatprep.subr.bf16.mxu0 0
      %437 = vmatpush2.bf16.msra.mxu0 0
      %438 = vmatprep.subr.bf16.mxu0 0
      %439 = vmatpush2.bf16.msra.mxu0 0
      %440 = vmatprep.subr.bf16.mxu0 0
      %441 = vmatpush2.bf16.msra.mxu0 0
      %442 = vmatprep.subr.bf16.mxu0 0
      %443 = vmatpush2.bf16.msra.mxu0 0
      %444 = vmatprep.subr.bf16.mxu0 0
      %445 = vmatpush2.bf16.msra.mxu0 0
      %446 = vmatprep.subr.bf16.mxu0 0
      %447 = vmatpush2.bf16.msra.mxu0 0
      %448 = vmatprep.mubr.bf16.mxu0 0
      %449 = vmatmul.mubr.bf16.gmra.mxu0 %v373
      %v450 = vpop.f32.mrf.mxu0
      %v451 = vadd.f32 %v335, %v450
      %v452 = vpop.f32.mrf.mxu0
      %v453 = vadd.f32 %v337, %v452
      %v454 = vpop.f32.mrf.mxu0
      %v455 = vpop.f32.mrf.mxu0
      %456 = vdwg.mxu0
      %s457 = scalar_lea.vmem %s1, 8
      %v458 = vld [vmem:[%s457] sm:$0xf]
      %459 = vrot.lane.b32.xlu0 %v216, 112
      %v460 = vpop.permute.xlu0 %459
      %461 = vrot.lane.b32.xlu0 %v217, 112
      %v462 = vpop.permute.xlu0 %461
      %463 = vrot.lane.b32.xlu0 %v218, 112
      %v464 = vpop.permute.xlu0 %463
      %465 = vrot.lane.b32.xlu0 %v219, 112
      %v466 = vpop.permute.xlu0 %465
      %467 = vrot.lane.b32.xlu0 %v220, 112
      %v468 = vpop.permute.xlu0 %467
      %469 = vrot.lane.b32.xlu0 %v221, 112
      %v470 = vpop.permute.xlu0 %469
      %471 = vrot.lane.b32.xlu0 %v222, 112
      %v472 = vpop.permute.xlu0 %471
      %473 = vrot.lane.b32.xlu0 %v223, 112
      %v474 = vpop.permute.xlu0 %473
      %vm475 = vcmask 916480
      %v476 = vsel %vm475, %v460, %v462
      %v477 = vsel %vm475, %v462, %v464
      %v478 = vsel %vm475, %v464, %v466
      %v479 = vsel %vm475, %v468, %v470
      %v480 = vsel %vm475, %v470, %v472
      %v481 = vsel %vm475, %v472, %v474
      %v491 = vsel %vm255, %v458, 0
      %493 = vmatprep.subr.bf16.mxu0 0
      %494 = vmatpush1.bf16.msra.mxu0 0
      %495 = vmatprep.subr.bf16.mxu0 0
      %496 = vmatpush1.bf16.msra.mxu0 0
      %497 = vmatprep.subr.bf16.mxu0 0
      %498 = vmatpush1.bf16.msra.mxu0 0
      %499 = vmatprep.subr.bf16.mxu0 0
      %500 = vmatpush1.bf16.msra.mxu0 0
      %501 = vmatprep.subr.bf16.mxu0 0
      %502 = vmatpush1.bf16.msra.mxu0 0
      %503 = vmatprep.subr.bf16.mxu0 0
      %504 = vmatpush1.bf16.msra.mxu0 0
      %505 = vmatprep.subr.bf16.mxu0 %v480
      %506 = vmatpush1.bf16.msra.mxu0 %v479
      %507 = vmatprep.subr.bf16.mxu0 %v477
      %508 = vmatpush1.bf16.msra.mxu0 %v476
      %509 = vmatprep.subr.bf16.mxu0 0
      %510 = vmatpush2.bf16.msra.mxu0 0
      %511 = vmatprep.subr.bf16.mxu0 0
      %512 = vmatpush2.bf16.msra.mxu0 0
      %513 = vmatprep.subr.bf16.mxu0 0
      %514 = vmatpush2.bf16.msra.mxu0 0
      %515 = vmatprep.subr.bf16.mxu0 0
      %516 = vmatpush2.bf16.msra.mxu0 0
      %517 = vmatprep.subr.bf16.mxu0 0
      %518 = vmatpush2.bf16.msra.mxu0 0
      %519 = vmatprep.subr.bf16.mxu0 0
      %520 = vmatpush2.bf16.msra.mxu0 0
      %521 = vmatprep.subr.bf16.mxu0 0
      %522 = vmatpush2.bf16.msra.mxu0 0
      %523 = vmatprep.subr.bf16.mxu0 0
      %524 = vmatpush2.bf16.msra.mxu0 0
      %525 = vmatprep.mubr.bf16.mxu0 0
      %526 = vmatmul.mubr.bf16.gmra.mxu0 %v491
      %v527 = vpop.f32.mrf.mxu0
      %v528 = vadd.f32 0.0, %v527
      %v529 = vpop.f32.mrf.mxu0
      %v530 = vadd.f32 0.0, %v529
      %v531 = vpop.f32.mrf.mxu0
      %v532 = vpop.f32.mrf.mxu0
      %533 = vdwg.mxu0
      %534 = vmatprep.subr.bf16.mxu0 0
      %535 = vmatpush1.bf16.msra.mxu0 0
      %536 = vmatprep.subr.bf16.mxu0 0
      %537 = vmatpush1.bf16.msra.mxu0 0
      %538 = vmatprep.subr.bf16.mxu0 0
      %539 = vmatpush1.bf16.msra.mxu0 0
      %540 = vmatprep.subr.bf16.mxu0 0
      %541 = vmatpush1.bf16.msra.mxu0 0
      %542 = vmatprep.subr.bf16.mxu0 0
      %543 = vmatpush1.bf16.msra.mxu0 0
      %544 = vmatprep.subr.bf16.mxu0 0
      %545 = vmatpush1.bf16.msra.mxu0 0
      %546 = vmatprep.subr.bf16.mxu0 %v474
      %547 = vmatpush1.bf16.msra.mxu0 %v481
      %548 = vmatprep.subr.bf16.mxu0 %v466
      %549 = vmatpush1.bf16.msra.mxu0 %v478
      %550 = vmatprep.subr.bf16.mxu0 0
      %551 = vmatpush2.bf16.msra.mxu0 0
      %552 = vmatprep.subr.bf16.mxu0 0
      %553 = vmatpush2.bf16.msra.mxu0 0
      %554 = vmatprep.subr.bf16.mxu0 0
      %555 = vmatpush2.bf16.msra.mxu0 0
      %556 = vmatprep.subr.bf16.mxu0 0
      %557 = vmatpush2.bf16.msra.mxu0 0
      %558 = vmatprep.subr.bf16.mxu0 0
      %559 = vmatpush2.bf16.msra.mxu0 0
      %560 = vmatprep.subr.bf16.mxu0 0
      %561 = vmatpush2.bf16.msra.mxu0 0
      %562 = vmatprep.subr.bf16.mxu0 0
      %563 = vmatpush2.bf16.msra.mxu0 0
      %564 = vmatprep.subr.bf16.mxu0 0
      %565 = vmatpush2.bf16.msra.mxu0 0
      %566 = vmatprep.mubr.bf16.mxu0 0
      %567 = vmatmul.mubr.bf16.gmra.mxu0 %v491
      %v568 = vpop.f32.mrf.mxu0
      %v569 = vadd.f32 0.0, %v568
      %v570 = vpop.f32.mrf.mxu0
      %v571 = vadd.f32 0.0, %v570
      %v572 = vpop.f32.mrf.mxu0
      %v573 = vpop.f32.mrf.mxu0
      %574 = vdwg.mxu0
      %v575 = vadd.f32 %v410, %v528
      %v576 = vadd.f32 %v412, %v530
      %v577 = vadd.f32 %v451, %v569
      %v578 = vadd.f32 %v453, %v571
      %s579 = scalar_lea.vmem %s1, 12
      %v580 = vld [vmem:[%s579] sm:$0xf]
      %v581 = vunpack.c.l.b16 %v172
      %v582 = vunpack.c.l.b16 %v175
      %v583 = vunpack.c.l.b16 %v178
      %v584 = vunpack.c.l.b16 %v181
      %v585 = vpack.c.b16 %v582, %v581
      %v586 = vpack.c.b16 %v584, %v583
      %587 = vrot.lane.b32.xlu0 %v585, 50
      %v588 = vpop.permute.xlu0 %587
      %589 = vrot.lane.b32.xlu0 %v216, 50
      %v590 = vpop.permute.xlu0 %589
      %591 = vrot.lane.b32.xlu0 %v217, 50
      %v592 = vpop.permute.xlu0 %591
      %593 = vrot.lane.b32.xlu0 %v218, 50
      %v594 = vpop.permute.xlu0 %593
      %595 = vrot.lane.b32.xlu0 %v586, 50
      %v596 = vpop.permute.xlu0 %595
      %597 = vrot.lane.b32.xlu0 %v220, 50
      %v598 = vpop.permute.xlu0 %597
      %599 = vrot.lane.b32.xlu0 %v221, 50
      %v600 = vpop.permute.xlu0 %599
      %601 = vrot.lane.b32.xlu0 %v222, 50
      %v602 = vpop.permute.xlu0 %601
      %vm603 = vcmask 408576
      %v604 = vsel %vm603, %v588, %v590
      %v605 = vsel %vm603, %v590, %v592
      %v606 = vsel %vm603, %v592, %v594
      %v607 = vsel %vm603, %v596, %v598
      %v608 = vsel %vm603, %v598, %v600
      %v609 = vsel %vm603, %v600, %v602
      %v619 = vsel %vm255, %v580, 0
      %621 = vmatprep.subr.bf16.mxu0 0
      %622 = vmatpush1.bf16.msra.mxu0 0
      %623 = vmatprep.subr.bf16.mxu0 0
      %624 = vmatpush1.bf16.msra.mxu0 0
      %625 = vmatprep.subr.bf16.mxu0 0
      %626 = vmatpush1.bf16.msra.mxu0 0
      %627 = vmatprep.subr.bf16.mxu0 0
      %628 = vmatpush1.bf16.msra.mxu0 0
      %629 = vmatprep.subr.bf16.mxu0 0
      %630 = vmatpush1.bf16.msra.mxu0 0
      %631 = vmatprep.subr.bf16.mxu0 0
      %632 = vmatpush1.bf16.msra.mxu0 0
      %633 = vmatprep.subr.bf16.mxu0 %v608
      %634 = vmatpush1.bf16.msra.mxu0 %v607
      %635 = vmatprep.subr.bf16.mxu0 %v605
      %636 = vmatpush1.bf16.msra.mxu0 %v604
      %637 = vmatprep.subr.bf16.mxu0 0
      %638 = vmatpush2.bf16.msra.mxu0 0
      %639 = vmatprep.subr.bf16.mxu0 0
      %640 = vmatpush2.bf16.msra.mxu0 0
      %641 = vmatprep.subr.bf16.mxu0 0
      %642 = vmatpush2.bf16.msra.mxu0 0
      %643 = vmatprep.subr.bf16.mxu0 0
      %644 = vmatpush2.bf16.msra.mxu0 0
      %645 = vmatprep.subr.bf16.mxu0 0
      %646 = vmatpush2.bf16.msra.mxu0 0
      %647 = vmatprep.subr.bf16.mxu0 0
      %648 = vmatpush2.bf16.msra.mxu0 0
      %649 = vmatprep.subr.bf16.mxu0 0
      %650 = vmatpush2.bf16.msra.mxu0 0
      %651 = vmatprep.subr.bf16.mxu0 0
      %652 = vmatpush2.bf16.msra.mxu0 0
      %653 = vmatprep.mubr.bf16.mxu0 0
      %654 = vmatmul.mubr.bf16.gmra.mxu0 %v619
      %v655 = vpop.f32.mrf.mxu0
      %v656 = vadd.f32 0.0, %v655
      %v657 = vpop.f32.mrf.mxu0
      %v658 = vadd.f32 0.0, %v657
      %v659 = vpop.f32.mrf.mxu0
      %v660 = vpop.f32.mrf.mxu0
      %661 = vdwg.mxu0
      %662 = vmatprep.subr.bf16.mxu0 0
      %663 = vmatpush1.bf16.msra.mxu0 0
      %664 = vmatprep.subr.bf16.mxu0 0
      %665 = vmatpush1.bf16.msra.mxu0 0
      %666 = vmatprep.subr.bf16.mxu0 0
      %667 = vmatpush1.bf16.msra.mxu0 0
      %668 = vmatprep.subr.bf16.mxu0 0
      %669 = vmatpush1.bf16.msra.mxu0 0
      %670 = vmatprep.subr.bf16.mxu0 0
      %671 = vmatpush1.bf16.msra.mxu0 0
      %672 = vmatprep.subr.bf16.mxu0 0
      %673 = vmatpush1.bf16.msra.mxu0 0
      %674 = vmatprep.subr.bf16.mxu0 %v602
      %675 = vmatpush1.bf16.msra.mxu0 %v609
      %676 = vmatprep.subr.bf16.mxu0 %v594
      %677 = vmatpush1.bf16.msra.mxu0 %v606
      %678 = vmatprep.subr.bf16.mxu0 0
      %679 = vmatpush2.bf16.msra.mxu0 0
      %680 = vmatprep.subr.bf16.mxu0 0
      %681 = vmatpush2.bf16.msra.mxu0 0
      %682 = vmatprep.subr.bf16.mxu0 0
      %683 = vmatpush2.bf16.msra.mxu0 0
      %684 = vmatprep.subr.bf16.mxu0 0
      %685 = vmatpush2.bf16.msra.mxu0 0
      %686 = vmatprep.subr.bf16.mxu0 0
      %687 = vmatpush2.bf16.msra.mxu0 0
      %688 = vmatprep.subr.bf16.mxu0 0
      %689 = vmatpush2.bf16.msra.mxu0 0
      %690 = vmatprep.subr.bf16.mxu0 0
      %691 = vmatpush2.bf16.msra.mxu0 0
      %692 = vmatprep.subr.bf16.mxu0 0
      %693 = vmatpush2.bf16.msra.mxu0 0
      %694 = vmatprep.mubr.bf16.mxu0 0
      %695 = vmatmul.mubr.bf16.gmra.mxu0 %v619
      %v696 = vpop.f32.mrf.mxu0
      %v697 = vadd.f32 0.0, %v696
      %v698 = vpop.f32.mrf.mxu0
      %v699 = vadd.f32 0.0, %v698
      %v700 = vpop.f32.mrf.mxu0
      %v701 = vpop.f32.mrf.mxu0
      %702 = vdwg.mxu0
      %v703 = vadd.f32 %v575, %v656
      %v704 = vadd.f32 %v576, %v658
      %v705 = vadd.f32 %v577, %v697
      %v706 = vadd.f32 %v578, %v699
      %s707 = scalar_lea.vmem %s1, 16
      %v708 = vld [vmem:[%s707] sm:$0xf]
      %709 = vrot.lane.b32.xlu0 %v585, 53
      %v710 = vpop.permute.xlu0 %709
      %711 = vrot.lane.b32.xlu0 %v216, 53
      %v712 = vpop.permute.xlu0 %711
      %713 = vrot.lane.b32.xlu0 %v217, 53
      %v714 = vpop.permute.xlu0 %713
      %715 = vrot.lane.b32.xlu0 %v218, 53
      %v716 = vpop.permute.xlu0 %715
      %717 = vrot.lane.b32.xlu0 %v586, 53
      %v718 = vpop.permute.xlu0 %717
      %719 = vrot.lane.b32.xlu0 %v220, 53
      %v720 = vpop.permute.xlu0 %719
      %721 = vrot.lane.b32.xlu0 %v221, 53
      %v722 = vpop.permute.xlu0 %721
      %723 = vrot.lane.b32.xlu0 %v222, 53
      %v724 = vpop.permute.xlu0 %723
      %vm725 = vcmask 433152
      %v726 = vsel %vm725, %v710, %v712
      %v727 = vsel %vm725, %v712, %v714
      %v728 = vsel %vm725, %v714, %v716
      %v729 = vsel %vm725, %v718, %v720
      %v730 = vsel %vm725, %v720, %v722
      %v731 = vsel %vm725, %v722, %v724
      %v741 = vsel %vm255, %v708, 0
      %743 = vmatprep.subr.bf16.mxu0 0
      %744 = vmatpush1.bf16.msra.mxu0 0
      %745 = vmatprep.subr.bf16.mxu0 0
      %746 = vmatpush1.bf16.msra.mxu0 0
      %747 = vmatprep.subr.bf16.mxu0 0
      %748 = vmatpush1.bf16.msra.mxu0 0
      %749 = vmatprep.subr.bf16.mxu0 0
      %750 = vmatpush1.bf16.msra.mxu0 0
      %751 = vmatprep.subr.bf16.mxu0 0
      %752 = vmatpush1.bf16.msra.mxu0 0
      %753 = vmatprep.subr.bf16.mxu0 0
      %754 = vmatpush1.bf16.msra.mxu0 0
      %755 = vmatprep.subr.bf16.mxu0 %v730
      %756 = vmatpush1.bf16.msra.mxu0 %v729
      %757 = vmatprep.subr.bf16.mxu0 %v727
      %758 = vmatpush1.bf16.msra.mxu0 %v726
      %759 = vmatprep.subr.bf16.mxu0 0
      %760 = vmatpush2.bf16.msra.mxu0 0
      %761 = vmatprep.subr.bf16.mxu0 0
      %762 = vmatpush2.bf16.msra.mxu0 0
      %763 = vmatprep.subr.bf16.mxu0 0
      %764 = vmatpush2.bf16.msra.mxu0 0
      %765 = vmatprep.subr.bf16.mxu0 0
      %766 = vmatpush2.bf16.msra.mxu0 0
      %767 = vmatprep.subr.bf16.mxu0 0
      %768 = vmatpush2.bf16.msra.mxu0 0
      %769 = vmatprep.subr.bf16.mxu0 0
      %770 = vmatpush2.bf16.msra.mxu0 0
      %771 = vmatprep.subr.bf16.mxu0 0
      %772 = vmatpush2.bf16.msra.mxu0 0
      %773 = vmatprep.subr.bf16.mxu0 0
      %774 = vmatpush2.bf16.msra.mxu0 0
      %775 = vmatprep.mubr.bf16.mxu0 0
      %776 = vmatmul.mubr.bf16.gmra.mxu0 %v741
      %v777 = vpop.f32.mrf.mxu0
      %v778 = vadd.f32 0.0, %v777
      %v779 = vpop.f32.mrf.mxu0
      %v780 = vadd.f32 0.0, %v779
      %v781 = vpop.f32.mrf.mxu0
      %v782 = vpop.f32.mrf.mxu0
      %783 = vdwg.mxu0
      %784 = vmatprep.subr.bf16.mxu0 0
      %785 = vmatpush1.bf16.msra.mxu0 0
      %786 = vmatprep.subr.bf16.mxu0 0
      %787 = vmatpush1.bf16.msra.mxu0 0
      %788 = vmatprep.subr.bf16.mxu0 0
      %789 = vmatpush1.bf16.msra.mxu0 0
      %790 = vmatprep.subr.bf16.mxu0 0
      %791 = vmatpush1.bf16.msra.mxu0 0
      %792 = vmatprep.subr.bf16.mxu0 0
      %793 = vmatpush1.bf16.msra.mxu0 0
      %794 = vmatprep.subr.bf16.mxu0 0
      %795 = vmatpush1.bf16.msra.mxu0 0
      %796 = vmatprep.subr.bf16.mxu0 %v724
      %797 = vmatpush1.bf16.msra.mxu0 %v731
      %798 = vmatprep.subr.bf16.mxu0 %v716
      %799 = vmatpush1.bf16.msra.mxu0 %v728
      %800 = vmatprep.subr.bf16.mxu0 0
      %801 = vmatpush2.bf16.msra.mxu0 0
      %802 = vmatprep.subr.bf16.mxu0 0
      %803 = vmatpush2.bf16.msra.mxu0 0
      %804 = vmatprep.subr.bf16.mxu0 0
      %805 = vmatpush2.bf16.msra.mxu0 0
      %806 = vmatprep.subr.bf16.mxu0 0
      %807 = vmatpush2.bf16.msra.mxu0 0
      %808 = vmatprep.subr.bf16.mxu0 0
      %809 = vmatpush2.bf16.msra.mxu0 0
      %810 = vmatprep.subr.bf16.mxu0 0
      %811 = vmatpush2.bf16.msra.mxu0 0
      %812 = vmatprep.subr.bf16.mxu0 0
      %813 = vmatpush2.bf16.msra.mxu0 0
      %814 = vmatprep.subr.bf16.mxu0 0
      %815 = vmatpush2.bf16.msra.mxu0 0
      %816 = vmatprep.mubr.bf16.mxu0 0
      %817 = vmatmul.mubr.bf16.gmra.mxu0 %v741
      %v818 = vpop.f32.mrf.mxu0
      %v819 = vadd.f32 0.0, %v818
      %v820 = vpop.f32.mrf.mxu0
      %v821 = vadd.f32 0.0, %v820
      %v822 = vpop.f32.mrf.mxu0
      %v823 = vpop.f32.mrf.mxu0
      %824 = vdwg.mxu0
      %v825 = vadd.f32 %v703, %v778
      %v826 = vadd.f32 %v704, %v780
      %v827 = vadd.f32 %v705, %v819
      %v828 = vadd.f32 %v706, %v821
      %s829 = scalar_lea.vmem %s1, 20
      %v830 = vld [vmem:[%s829] sm:$0xf]
      %831 = vrot.lane.b32.xlu0 %v585, 56
      %v832 = vpop.permute.xlu0 %831
      %833 = vrot.lane.b32.xlu0 %v216, 56
      %v834 = vpop.permute.xlu0 %833
      %835 = vrot.lane.b32.xlu0 %v217, 56
      %v836 = vpop.permute.xlu0 %835
      %837 = vrot.lane.b32.xlu0 %v218, 56
      %v838 = vpop.permute.xlu0 %837
      %839 = vrot.lane.b32.xlu0 %v586, 56
      %v840 = vpop.permute.xlu0 %839
      %841 = vrot.lane.b32.xlu0 %v220, 56
      %v842 = vpop.permute.xlu0 %841
      %843 = vrot.lane.b32.xlu0 %v221, 56
      %v844 = vpop.permute.xlu0 %843
      %845 = vrot.lane.b32.xlu0 %v222, 56
      %v846 = vpop.permute.xlu0 %845
      %vm847 = vcmask 457728
      %v848 = vsel %vm847, %v832, %v834
      %v849 = vsel %vm847, %v834, %v836
      %v850 = vsel %vm847, %v836, %v838
      %v851 = vsel %vm847, %v840, %v842
      %v852 = vsel %vm847, %v842, %v844
      %v853 = vsel %vm847, %v844, %v846
      %v863 = vsel %vm255, %v830, 0
      %865 = vmatprep.subr.bf16.mxu0 0
      %866 = vmatpush1.bf16.msra.mxu0 0
      %867 = vmatprep.subr.bf16.mxu0 0
      %868 = vmatpush1.bf16.msra.mxu0 0
      %869 = vmatprep.subr.bf16.mxu0 0
      %870 = vmatpush1.bf16.msra.mxu0 0
      %871 = vmatprep.subr.bf16.mxu0 0
      %872 = vmatpush1.bf16.msra.mxu0 0
      %873 = vmatprep.subr.bf16.mxu0 0
      %874 = vmatpush1.bf16.msra.mxu0 0
      %875 = vmatprep.subr.bf16.mxu0 0
      %876 = vmatpush1.bf16.msra.mxu0 0
      %877 = vmatprep.subr.bf16.mxu0 %v852
      %878 = vmatpush1.bf16.msra.mxu0 %v851
      %879 = vmatprep.subr.bf16.mxu0 %v849
      %880 = vmatpush1.bf16.msra.mxu0 %v848
      %881 = vmatprep.subr.bf16.mxu0 0
      %882 = vmatpush2.bf16.msra.mxu0 0
      %883 = vmatprep.subr.bf16.mxu0 0
      %884 = vmatpush2.bf16.msra.mxu0 0
      %885 = vmatprep.subr.bf16.mxu0 0
      %886 = vmatpush2.bf16.msra.mxu0 0
      %887 = vmatprep.subr.bf16.mxu0 0
      %888 = vmatpush2.bf16.msra.mxu0 0
      %889 = vmatprep.subr.bf16.mxu0 0
      %890 = vmatpush2.bf16.msra.mxu0 0
      %891 = vmatprep.subr.bf16.mxu0 0
      %892 = vmatpush2.bf16.msra.mxu0 0
      %893 = vmatprep.subr.bf16.mxu0 0
      %894 = vmatpush2.bf16.msra.mxu0 0
      %895 = vmatprep.subr.bf16.mxu0 0
      %896 = vmatpush2.bf16.msra.mxu0 0
      %897 = vmatprep.mubr.bf16.mxu0 0
      %898 = vmatmul.mubr.bf16.gmra.mxu0 %v863
      %v899 = vpop.f32.mrf.mxu0
      %v900 = vadd.f32 0.0, %v899
      %v901 = vpop.f32.mrf.mxu0
      %v902 = vadd.f32 0.0, %v901
      %v903 = vpop.f32.mrf.mxu0
      %v904 = vpop.f32.mrf.mxu0
      %905 = vdwg.mxu0
      %906 = vmatprep.subr.bf16.mxu0 0
      %907 = vmatpush1.bf16.msra.mxu0 0
      %908 = vmatprep.subr.bf16.mxu0 0
      %909 = vmatpush1.bf16.msra.mxu0 0
      %910 = vmatprep.subr.bf16.mxu0 0
      %911 = vmatpush1.bf16.msra.mxu0 0
      %912 = vmatprep.subr.bf16.mxu0 0
      %913 = vmatpush1.bf16.msra.mxu0 0
      %914 = vmatprep.subr.bf16.mxu0 0
      %915 = vmatpush1.bf16.msra.mxu0 0
      %916 = vmatprep.subr.bf16.mxu0 0
      %917 = vmatpush1.bf16.msra.mxu0 0
      %918 = vmatprep.subr.bf16.mxu0 %v846
      %919 = vmatpush1.bf16.msra.mxu0 %v853
      %920 = vmatprep.subr.bf16.mxu0 %v838
      %921 = vmatpush1.bf16.msra.mxu0 %v850
      %922 = vmatprep.subr.bf16.mxu0 0
      %923 = vmatpush2.bf16.msra.mxu0 0
      %924 = vmatprep.subr.bf16.mxu0 0
      %925 = vmatpush2.bf16.msra.mxu0 0
      %926 = vmatprep.subr.bf16.mxu0 0
      %927 = vmatpush2.bf16.msra.mxu0 0
      %928 = vmatprep.subr.bf16.mxu0 0
      %929 = vmatpush2.bf16.msra.mxu0 0
      %930 = vmatprep.subr.bf16.mxu0 0
      %931 = vmatpush2.bf16.msra.mxu0 0
      %932 = vmatprep.subr.bf16.mxu0 0
      %933 = vmatpush2.bf16.msra.mxu0 0
      %934 = vmatprep.subr.bf16.mxu0 0
      %935 = vmatpush2.bf16.msra.mxu0 0
      %936 = vmatprep.subr.bf16.mxu0 0
      %937 = vmatpush2.bf16.msra.mxu0 0
      %938 = vmatprep.mubr.bf16.mxu0 0
      %939 = vmatmul.mubr.bf16.gmra.mxu0 %v863
      %v940 = vpop.f32.mrf.mxu0
      %v941 = vadd.f32 0.0, %v940
      %v942 = vpop.f32.mrf.mxu0
      %v943 = vadd.f32 0.0, %v942
      %v944 = vpop.f32.mrf.mxu0
      %v945 = vpop.f32.mrf.mxu0
      %946 = vdwg.mxu0
      %v947 = vadd.f32 %v825, %v900
      %v948 = vadd.f32 %v826, %v902
      %v949 = vadd.f32 %v827, %v941
      %v950 = vadd.f32 %v828, %v943
      %s951 = scalar_lea.vmem %s1, 24
      %v952 = vld [vmem:[%s951] sm:$0xf]
      %953 = vrot.lane.b32.xlu0 %v585, 122
      %v954 = vpop.permute.xlu0 %953
      %955 = vrot.lane.b32.xlu0 %v216, 122
      %v956 = vpop.permute.xlu0 %955
      %957 = vrot.lane.b32.xlu0 %v217, 122
      %v958 = vpop.permute.xlu0 %957
      %959 = vrot.lane.b32.xlu0 %v218, 122
      %v960 = vpop.permute.xlu0 %959
      %961 = vrot.lane.b32.xlu0 %v586, 122
      %v962 = vpop.permute.xlu0 %961
      %963 = vrot.lane.b32.xlu0 %v220, 122
      %v964 = vpop.permute.xlu0 %963
      %965 = vrot.lane.b32.xlu0 %v221, 122
      %v966 = vpop.permute.xlu0 %965
      %967 = vrot.lane.b32.xlu0 %v222, 122
      %v968 = vpop.permute.xlu0 %967
      %vm969 = vcmask 998400
      %v970 = vsel %vm969, %v954, %v956
      %v971 = vsel %vm969, %v956, %v958
      %v972 = vsel %vm969, %v958, %v960
      %v973 = vsel %vm969, %v962, %v964
      %v974 = vsel %vm969, %v964, %v966
      %v975 = vsel %vm969, %v966, %v968
      %v985 = vsel %vm255, %v952, 0
      %987 = vmatprep.subr.bf16.mxu0 0
      %988 = vmatpush1.bf16.msra.mxu0 0
      %989 = vmatprep.subr.bf16.mxu0 0
      %990 = vmatpush1.bf16.msra.mxu0 0
      %991 = vmatprep.subr.bf16.mxu0 0
      %992 = vmatpush1.bf16.msra.mxu0 0
      %993 = vmatprep.subr.bf16.mxu0 0
      %994 = vmatpush1.bf16.msra.mxu0 0
      %995 = vmatprep.subr.bf16.mxu0 0
      %996 = vmatpush1.bf16.msra.mxu0 0
      %997 = vmatprep.subr.bf16.mxu0 0
      %998 = vmatpush1.bf16.msra.mxu0 0
      %999 = vmatprep.subr.bf16.mxu0 %v974
      %1000 = vmatpush1.bf16.msra.mxu0 %v973
      %1001 = vmatprep.subr.bf16.mxu0 %v971
      %1002 = vmatpush1.bf16.msra.mxu0 %v970
      %1003 = vmatprep.subr.bf16.mxu0 0
      %1004 = vmatpush2.bf16.msra.mxu0 0
      %1005 = vmatprep.subr.bf16.mxu0 0
      %1006 = vmatpush2.bf16.msra.mxu0 0
      %1007 = vmatprep.subr.bf16.mxu0 0
      %1008 = vmatpush2.bf16.msra.mxu0 0
      %1009 = vmatprep.subr.bf16.mxu0 0
      %1010 = vmatpush2.bf16.msra.mxu0 0
      %1011 = vmatprep.subr.bf16.mxu0 0
      %1012 = vmatpush2.bf16.msra.mxu0 0
      %1013 = vmatprep.subr.bf16.mxu0 0
      %1014 = vmatpush2.bf16.msra.mxu0 0
      %1015 = vmatprep.subr.bf16.mxu0 0
      %1016 = vmatpush2.bf16.msra.mxu0 0
      %1017 = vmatprep.subr.bf16.mxu0 0
      %1018 = vmatpush2.bf16.msra.mxu0 0
      %1019 = vmatprep.mubr.bf16.mxu0 0
      %1020 = vmatmul.mubr.bf16.gmra.mxu0 %v985
      %v1021 = vpop.f32.mrf.mxu0
      %v1022 = vadd.f32 0.0, %v1021
      %v1023 = vpop.f32.mrf.mxu0
      %v1024 = vadd.f32 0.0, %v1023
      %v1025 = vpop.f32.mrf.mxu0
      %v1026 = vpop.f32.mrf.mxu0
      %1027 = vdwg.mxu0
      %1028 = vmatprep.subr.bf16.mxu0 0
      %1029 = vmatpush1.bf16.msra.mxu0 0
      %1030 = vmatprep.subr.bf16.mxu0 0
      %1031 = vmatpush1.bf16.msra.mxu0 0
      %1032 = vmatprep.subr.bf16.mxu0 0
      %1033 = vmatpush1.bf16.msra.mxu0 0
      %1034 = vmatprep.subr.bf16.mxu0 0
      %1035 = vmatpush1.bf16.msra.mxu0 0
      %1036 = vmatprep.subr.bf16.mxu0 0
      %1037 = vmatpush1.bf16.msra.mxu0 0
      %1038 = vmatprep.subr.bf16.mxu0 0
      %1039 = vmatpush1.bf16.msra.mxu0 0
      %1040 = vmatprep.subr.bf16.mxu0 %v968
      %1041 = vmatpush1.bf16.msra.mxu0 %v975
      %1042 = vmatprep.subr.bf16.mxu0 %v960
      %1043 = vmatpush1.bf16.msra.mxu0 %v972
      %1044 = vmatprep.subr.bf16.mxu0 0
      %1045 = vmatpush2.bf16.msra.mxu0 0
      %1046 = vmatprep.subr.bf16.mxu0 0
      %1047 = vmatpush2.bf16.msra.mxu0 0
      %1048 = vmatprep.subr.bf16.mxu0 0
      %1049 = vmatpush2.bf16.msra.mxu0 0
      %1050 = vmatprep.subr.bf16.mxu0 0
      %1051 = vmatpush2.bf16.msra.mxu0 0
      %1052 = vmatprep.subr.bf16.mxu0 0
      %1053 = vmatpush2.bf16.msra.mxu0 0
      %1054 = vmatprep.subr.bf16.mxu0 0
      %1055 = vmatpush2.bf16.msra.mxu0 0
      %1056 = vmatprep.subr.bf16.mxu0 0
      %1057 = vmatpush2.bf16.msra.mxu0 0
      %1058 = vmatprep.subr.bf16.mxu0 0
      %1059 = vmatpush2.bf16.msra.mxu0 0
      %1060 = vmatprep.mubr.bf16.mxu0 0
      %1061 = vmatmul.mubr.bf16.gmra.mxu0 %v985
      %v1062 = vpop.f32.mrf.mxu0
      %v1063 = vadd.f32 0.0, %v1062
      %v1064 = vpop.f32.mrf.mxu0
      %v1065 = vadd.f32 0.0, %v1064
      %v1066 = vpop.f32.mrf.mxu0
      %v1067 = vpop.f32.mrf.mxu0
      %1068 = vdwg.mxu0
      %v1069 = vadd.f32 %v947, %v1022
      %v1070 = vadd.f32 %v948, %v1024
      %v1071 = vadd.f32 %v949, %v1063
      %v1072 = vadd.f32 %v950, %v1065
      %s1073 = scalar_lea.vmem %s1, 28
      %v1074 = vld [vmem:[%s1073] sm:$0xf]
      %1075 = vrot.lane.b32.xlu0 %v585, 125
      %v1076 = vpop.permute.xlu0 %1075
      %1077 = vrot.lane.b32.xlu0 %v216, 125
      %v1078 = vpop.permute.xlu0 %1077
      %1079 = vrot.lane.b32.xlu0 %v217, 125
      %v1080 = vpop.permute.xlu0 %1079
      %1081 = vrot.lane.b32.xlu0 %v218, 125
      %v1082 = vpop.permute.xlu0 %1081
      %1083 = vrot.lane.b32.xlu0 %v586, 125
      %v1084 = vpop.permute.xlu0 %1083
      %1085 = vrot.lane.b32.xlu0 %v220, 125
      %v1086 = vpop.permute.xlu0 %1085
      %1087 = vrot.lane.b32.xlu0 %v221, 125
      %v1088 = vpop.permute.xlu0 %1087
      %1089 = vrot.lane.b32.xlu0 %v222, 125
      %v1090 = vpop.permute.xlu0 %1089
      %vm1091 = vcmask 1022976
      %v1092 = vsel %vm1091, %v1076, %v1078
      %v1093 = vsel %vm1091, %v1078, %v1080
      %v1094 = vsel %vm1091, %v1080, %v1082
      %v1095 = vsel %vm1091, %v1084, %v1086
      %v1096 = vsel %vm1091, %v1086, %v1088
      %v1097 = vsel %vm1091, %v1088, %v1090
      %v1107 = vsel %vm255, %v1074, 0
      %1109 = vmatprep.subr.bf16.mxu0 0
      %1110 = vmatpush1.bf16.msra.mxu0 0
      %1111 = vmatprep.subr.bf16.mxu0 0
      %1112 = vmatpush1.bf16.msra.mxu0 0
      %1113 = vmatprep.subr.bf16.mxu0 0
      %1114 = vmatpush1.bf16.msra.mxu0 0
      %1115 = vmatprep.subr.bf16.mxu0 0
      %1116 = vmatpush1.bf16.msra.mxu0 0
      %1117 = vmatprep.subr.bf16.mxu0 0
      %1118 = vmatpush1.bf16.msra.mxu0 0
      %1119 = vmatprep.subr.bf16.mxu0 0
      %1120 = vmatpush1.bf16.msra.mxu0 0
      %1121 = vmatprep.subr.bf16.mxu0 %v1096
      %1122 = vmatpush1.bf16.msra.mxu0 %v1095
      %1123 = vmatprep.subr.bf16.mxu0 %v1093
      %1124 = vmatpush1.bf16.msra.mxu0 %v1092
      %1125 = vmatprep.subr.bf16.mxu0 0
      %1126 = vmatpush2.bf16.msra.mxu0 0
      %1127 = vmatprep.subr.bf16.mxu0 0
      %1128 = vmatpush2.bf16.msra.mxu0 0
      %1129 = vmatprep.subr.bf16.mxu0 0
      %1130 = vmatpush2.bf16.msra.mxu0 0
      %1131 = vmatprep.subr.bf16.mxu0 0
      %1132 = vmatpush2.bf16.msra.mxu0 0
      %1133 = vmatprep.subr.bf16.mxu0 0
      %1134 = vmatpush2.bf16.msra.mxu0 0
      %1135 = vmatprep.subr.bf16.mxu0 0
      %1136 = vmatpush2.bf16.msra.mxu0 0
      %1137 = vmatprep.subr.bf16.mxu0 0
      %1138 = vmatpush2.bf16.msra.mxu0 0
      %1139 = vmatprep.subr.bf16.mxu0 0
      %1140 = vmatpush2.bf16.msra.mxu0 0
      %1141 = vmatprep.mubr.bf16.mxu0 0
      %1142 = vmatmul.mubr.bf16.gmra.mxu0 %v1107
      %v1143 = vpop.f32.mrf.mxu0
      %v1144 = vadd.f32 0.0, %v1143
      %v1145 = vpop.f32.mrf.mxu0
      %v1146 = vadd.f32 0.0, %v1145
      %v1147 = vpop.f32.mrf.mxu0
      %v1148 = vpop.f32.mrf.mxu0
      %1149 = vdwg.mxu0
      %1150 = vmatprep.subr.bf16.mxu0 0
      %1151 = vmatpush1.bf16.msra.mxu0 0
      %1152 = vmatprep.subr.bf16.mxu0 0
      %1153 = vmatpush1.bf16.msra.mxu0 0
      %1154 = vmatprep.subr.bf16.mxu0 0
      %1155 = vmatpush1.bf16.msra.mxu0 0
      %1156 = vmatprep.subr.bf16.mxu0 0
      %1157 = vmatpush1.bf16.msra.mxu0 0
      %1158 = vmatprep.subr.bf16.mxu0 0
      %1159 = vmatpush1.bf16.msra.mxu0 0
      %1160 = vmatprep.subr.bf16.mxu0 0
      %1161 = vmatpush1.bf16.msra.mxu0 0
      %1162 = vmatprep.subr.bf16.mxu0 %v1090
      %1163 = vmatpush1.bf16.msra.mxu0 %v1097
      %1164 = vmatprep.subr.bf16.mxu0 %v1082
      %1165 = vmatpush1.bf16.msra.mxu0 %v1094
      %1166 = vmatprep.subr.bf16.mxu0 0
      %1167 = vmatpush2.bf16.msra.mxu0 0
      %1168 = vmatprep.subr.bf16.mxu0 0
      %1169 = vmatpush2.bf16.msra.mxu0 0
      %1170 = vmatprep.subr.bf16.mxu0 0
      %1171 = vmatpush2.bf16.msra.mxu0 0
      %1172 = vmatprep.subr.bf16.mxu0 0
      %1173 = vmatpush2.bf16.msra.mxu0 0
      %1174 = vmatprep.subr.bf16.mxu0 0
      %1175 = vmatpush2.bf16.msra.mxu0 0
      %1176 = vmatprep.subr.bf16.mxu0 0
      %1177 = vmatpush2.bf16.msra.mxu0 0
      %1178 = vmatprep.subr.bf16.mxu0 0
      %1179 = vmatpush2.bf16.msra.mxu0 0
      %1180 = vmatprep.subr.bf16.mxu0 0
      %1181 = vmatpush2.bf16.msra.mxu0 0
      %1182 = vmatprep.mubr.bf16.mxu0 0
      %1183 = vmatmul.mubr.bf16.gmra.mxu0 %v1107
      %v1184 = vpop.f32.mrf.mxu0
      %v1185 = vadd.f32 0.0, %v1184
      %v1186 = vpop.f32.mrf.mxu0
      %v1187 = vadd.f32 0.0, %v1186
      %v1188 = vpop.f32.mrf.mxu0
      %v1189 = vpop.f32.mrf.mxu0
      %1190 = vdwg.mxu0
      %v1191 = vadd.f32 %v1069, %v1144
      %v1192 = vadd.f32 %v1070, %v1146
      %v1193 = vadd.f32 %v1071, %v1185
      %v1194 = vadd.f32 %v1072, %v1187
      %s1195 = scalar_lea.vmem %s1, 32
      %v1196 = vld [vmem:[%s1195] sm:$0xf]
      %v1206 = vsel %vm255, %v1196, 0
      %1208 = vmatprep.subr.bf16.mxu0 0
      %1209 = vmatpush1.bf16.msra.mxu0 0
      %1210 = vmatprep.subr.bf16.mxu0 0
      %1211 = vmatpush1.bf16.msra.mxu0 0
      %1212 = vmatprep.subr.bf16.mxu0 0
      %1213 = vmatpush1.bf16.msra.mxu0 0
      %1214 = vmatprep.subr.bf16.mxu0 0
      %1215 = vmatpush1.bf16.msra.mxu0 0
      %1216 = vmatprep.subr.bf16.mxu0 0
      %1217 = vmatpush1.bf16.msra.mxu0 0
      %1218 = vmatprep.subr.bf16.mxu0 0
      %1219 = vmatpush1.bf16.msra.mxu0 0
      %1220 = vmatprep.subr.bf16.mxu0 %v220
      %1221 = vmatpush1.bf16.msra.mxu0 %v586
      %1222 = vmatprep.subr.bf16.mxu0 %v216
      %1223 = vmatpush1.bf16.msra.mxu0 %v585
      %1224 = vmatprep.subr.bf16.mxu0 0
      %1225 = vmatpush2.bf16.msra.mxu0 0
      %1226 = vmatprep.subr.bf16.mxu0 0
      %1227 = vmatpush2.bf16.msra.mxu0 0
      %1228 = vmatprep.subr.bf16.mxu0 0
      %1229 = vmatpush2.bf16.msra.mxu0 0
      %1230 = vmatprep.subr.bf16.mxu0 0
      %1231 = vmatpush2.bf16.msra.mxu0 0
      %1232 = vmatprep.subr.bf16.mxu0 0
      %1233 = vmatpush2.bf16.msra.mxu0 0
      %1234 = vmatprep.subr.bf16.mxu0 0
      %1235 = vmatpush2.bf16.msra.mxu0 0
      %1236 = vmatprep.subr.bf16.mxu0 0
      %1237 = vmatpush2.bf16.msra.mxu0 0
      %1238 = vmatprep.subr.bf16.mxu0 0
      %1239 = vmatpush2.bf16.msra.mxu0 0
      %1240 = vmatprep.mubr.bf16.mxu0 0
      %1241 = vmatmul.mubr.bf16.gmra.mxu0 %v1206
      %v1242 = vpop.f32.mrf.mxu0
      %v1243 = vadd.f32 0.0, %v1242
      %v1244 = vpop.f32.mrf.mxu0
      %v1245 = vadd.f32 0.0, %v1244
      %v1246 = vpop.f32.mrf.mxu0
      %v1247 = vpop.f32.mrf.mxu0
      %1248 = vdwg.mxu0
      %1249 = vmatprep.subr.bf16.mxu0 0
      %1250 = vmatpush1.bf16.msra.mxu0 0
      %1251 = vmatprep.subr.bf16.mxu0 0
      %1252 = vmatpush1.bf16.msra.mxu0 0
      %1253 = vmatprep.subr.bf16.mxu0 0
      %1254 = vmatpush1.bf16.msra.mxu0 0
      %1255 = vmatprep.subr.bf16.mxu0 0
      %1256 = vmatpush1.bf16.msra.mxu0 0
      %1257 = vmatprep.subr.bf16.mxu0 0
      %1258 = vmatpush1.bf16.msra.mxu0 0
      %1259 = vmatprep.subr.bf16.mxu0 0
      %1260 = vmatpush1.bf16.msra.mxu0 0
      %1261 = vmatprep.subr.bf16.mxu0 %v222
      %1262 = vmatpush1.bf16.msra.mxu0 %v221
      %1263 = vmatprep.subr.bf16.mxu0 %v218
      %1264 = vmatpush1.bf16.msra.mxu0 %v217
      %1265 = vmatprep.subr.bf16.mxu0 0
      %1266 = vmatpush2.bf16.msra.mxu0 0
      %1267 = vmatprep.subr.bf16.mxu0 0
      %1268 = vmatpush2.bf16.msra.mxu0 0
      %1269 = vmatprep.subr.bf16.mxu0 0
      %1270 = vmatpush2.bf16.msra.mxu0 0
      %1271 = vmatprep.subr.bf16.mxu0 0
      %1272 = vmatpush2.bf16.msra.mxu0 0
      %1273 = vmatprep.subr.bf16.mxu0 0
      %1274 = vmatpush2.bf16.msra.mxu0 0
      %1275 = vmatprep.subr.bf16.mxu0 0
      %1276 = vmatpush2.bf16.msra.mxu0 0
      %1277 = vmatprep.subr.bf16.mxu0 0
      %1278 = vmatpush2.bf16.msra.mxu0 0
      %1279 = vmatprep.subr.bf16.mxu0 0
      %1280 = vmatpush2.bf16.msra.mxu0 0
      %1281 = vmatprep.mubr.bf16.mxu0 0
      %1282 = vmatmul.mubr.bf16.gmra.mxu0 %v1206
      %v1283 = vpop.f32.mrf.mxu0
      %v1284 = vadd.f32 0.0, %v1283
      %v1285 = vpop.f32.mrf.mxu0
      %v1286 = vadd.f32 0.0, %v1285
      %v1287 = vpop.f32.mrf.mxu0
      %v1288 = vpop.f32.mrf.mxu0
      %1289 = vdwg.mxu0
      %v1290 = vadd.f32 %v1191, %v1243
      %v1291 = vadd.f32 %v1192, %v1245
      %v1292 = vadd.f32 %v1193, %v1284
      %v1293 = vadd.f32 %v1194, %v1286
      %1295 = vset.pattern.permute.xlu0 0
      %1296 = vperm.xlu0 %1295, %v184
      %v1297 = vpop.permute.xlu0 %1296
      %v1299 = vadd.f32 %v1290, %v1297
      %v1300 = vadd.f32 %v1291, %v1297
      %v1301 = vadd.f32 %v1292, %v1297
      %v1302 = vadd.f32 %v1293, %v1297
      %1303 = vst [vmem:[%s170] sm:$0xff] %v1299
      %1304 = vst [vmem:[%s170 + $0x8] sm:$0xff] %v1300
      %1305 = vst [vmem:[%s170 + $0x10] sm:$0xff] %v1301
      %vm1306 = vcmask 392192
      %1307 = vst.msk [vmem:[%s170 + $0x18] sm:$0xff] %vm1306, %v1302
      %s1308 = scalar_lea.vmem %s1, 36
      %v1309 = vld [vmem:[%s1308] sm:$0xf]
      %s1310 = scalar_lea.vmem %s1, 40
      %v1311 = vld [vmem:[%s1310] sm:$0xf]
      %1312 = vrot.lane.b32.xlu0 %v216, 110
      %v1313 = vpop.permute.xlu0 %1312
      %1314 = vrot.lane.b32.xlu0 %v217, 110
      %v1315 = vpop.permute.xlu0 %1314
      %1316 = vrot.lane.b32.xlu0 %v218, 110
      %v1317 = vpop.permute.xlu0 %1316
      %1318 = vrot.lane.b32.xlu0 %v219, 110
      %v1319 = vpop.permute.xlu0 %1318
      %1320 = vrot.lane.b32.xlu0 %v220, 110
      %v1321 = vpop.permute.xlu0 %1320
      %1322 = vrot.lane.b32.xlu0 %v221, 110
      %v1323 = vpop.permute.xlu0 %1322
      %1324 = vrot.lane.b32.xlu0 %v222, 110
      %v1325 = vpop.permute.xlu0 %1324
      %1326 = vrot.lane.b32.xlu0 %v223, 110
      %v1327 = vpop.permute.xlu0 %1326
      %vm1328 = vcmask 900096
      %v1329 = vsel %vm1328, %v1313, %v1315
      %v1330 = vsel %vm1328, %v1315, %v1317
      %v1331 = vsel %vm1328, %v1317, %v1319
      %v1332 = vsel %vm1328, %v1321, %v1323
      %v1333 = vsel %vm1328, %v1323, %v1325
      %v1334 = vsel %vm1328, %v1325, %v1327
      %v1344 = vsel %vm255, %v1311, 0
      %1346 = vmatprep.subr.bf16.mxu0 0
      %1347 = vmatpush1.bf16.msra.mxu0 0
      %1348 = vmatprep.subr.bf16.mxu0 0
      %1349 = vmatpush1.bf16.msra.mxu0 0
      %1350 = vmatprep.subr.bf16.mxu0 0
      %1351 = vmatpush1.bf16.msra.mxu0 0
      %1352 = vmatprep.subr.bf16.mxu0 0
      %1353 = vmatpush1.bf16.msra.mxu0 0
      %1354 = vmatprep.subr.bf16.mxu0 0
      %1355 = vmatpush1.bf16.msra.mxu0 0
      %1356 = vmatprep.subr.bf16.mxu0 0
      %1357 = vmatpush1.bf16.msra.mxu0 0
      %1358 = vmatprep.subr.bf16.mxu0 %v1333
      %1359 = vmatpush1.bf16.msra.mxu0 %v1332
      %1360 = vmatprep.subr.bf16.mxu0 %v1330
      %1361 = vmatpush1.bf16.msra.mxu0 %v1329
      %1362 = vmatprep.subr.bf16.mxu0 0
      %1363 = vmatpush2.bf16.msra.mxu0 0
      %1364 = vmatprep.subr.bf16.mxu0 0
      %1365 = vmatpush2.bf16.msra.mxu0 0
      %1366 = vmatprep.subr.bf16.mxu0 0
      %1367 = vmatpush2.bf16.msra.mxu0 0
      %1368 = vmatprep.subr.bf16.mxu0 0
      %1369 = vmatpush2.bf16.msra.mxu0 0
      %1370 = vmatprep.subr.bf16.mxu0 0
      %1371 = vmatpush2.bf16.msra.mxu0 0
      %1372 = vmatprep.subr.bf16.mxu0 0
      %1373 = vmatpush2.bf16.msra.mxu0 0
      %1374 = vmatprep.subr.bf16.mxu0 0
      %1375 = vmatpush2.bf16.msra.mxu0 0
      %1376 = vmatprep.subr.bf16.mxu0 0
      %1377 = vmatpush2.bf16.msra.mxu0 0
      %1378 = vmatprep.mubr.bf16.mxu0 0
      %1379 = vmatmul.mubr.bf16.gmra.mxu0 %v1344
      %v1380 = vpop.f32.mrf.mxu0
      %v1381 = vadd.f32 0.0, %v1380
      %v1382 = vpop.f32.mrf.mxu0
      %v1383 = vadd.f32 0.0, %v1382
      %v1384 = vpop.f32.mrf.mxu0
      %v1385 = vpop.f32.mrf.mxu0
      %1386 = vdwg.mxu0
      %1387 = vmatprep.subr.bf16.mxu0 0
      %1388 = vmatpush1.bf16.msra.mxu0 0
      %1389 = vmatprep.subr.bf16.mxu0 0
      %1390 = vmatpush1.bf16.msra.mxu0 0
      %1391 = vmatprep.subr.bf16.mxu0 0
      %1392 = vmatpush1.bf16.msra.mxu0 0
      %1393 = vmatprep.subr.bf16.mxu0 0
      %1394 = vmatpush1.bf16.msra.mxu0 0
      %1395 = vmatprep.subr.bf16.mxu0 0
      %1396 = vmatpush1.bf16.msra.mxu0 0
      %1397 = vmatprep.subr.bf16.mxu0 0
      %1398 = vmatpush1.bf16.msra.mxu0 0
      %1399 = vmatprep.subr.bf16.mxu0 %v1327
      %1400 = vmatpush1.bf16.msra.mxu0 %v1334
      %1401 = vmatprep.subr.bf16.mxu0 %v1319
      %1402 = vmatpush1.bf16.msra.mxu0 %v1331
      %1403 = vmatprep.subr.bf16.mxu0 0
      %1404 = vmatpush2.bf16.msra.mxu0 0
      %1405 = vmatprep.subr.bf16.mxu0 0
      %1406 = vmatpush2.bf16.msra.mxu0 0
      %1407 = vmatprep.subr.bf16.mxu0 0
      %1408 = vmatpush2.bf16.msra.mxu0 0
      %1409 = vmatprep.subr.bf16.mxu0 0
      %1410 = vmatpush2.bf16.msra.mxu0 0
      %1411 = vmatprep.subr.bf16.mxu0 0
      %1412 = vmatpush2.bf16.msra.mxu0 0
      %1413 = vmatprep.subr.bf16.mxu0 0
      %1414 = vmatpush2.bf16.msra.mxu0 0
      %1415 = vmatprep.subr.bf16.mxu0 0
      %1416 = vmatpush2.bf16.msra.mxu0 0
      %1417 = vmatprep.subr.bf16.mxu0 0
      %1418 = vmatpush2.bf16.msra.mxu0 0
      %1419 = vmatprep.mubr.bf16.mxu0 0
      %1420 = vmatmul.mubr.bf16.gmra.mxu0 %v1344
      %v1421 = vpop.f32.mrf.mxu0
      %v1422 = vadd.f32 0.0, %v1421
      %v1423 = vpop.f32.mrf.mxu0
      %v1424 = vadd.f32 0.0, %v1423
      %v1425 = vpop.f32.mrf.mxu0
      %v1426 = vpop.f32.mrf.mxu0
      %1427 = vdwg.mxu0
      %1428 = vrot.lane.b32.xlu0 %v216, 107
      %v1429 = vpop.permute.xlu0 %1428
      %1430 = vrot.lane.b32.xlu0 %v217, 107
      %v1431 = vpop.permute.xlu0 %1430
      %1432 = vrot.lane.b32.xlu0 %v218, 107
      %v1433 = vpop.permute.xlu0 %1432
      %1434 = vrot.lane.b32.xlu0 %v219, 107
      %v1435 = vpop.permute.xlu0 %1434
      %1436 = vrot.lane.b32.xlu0 %v220, 107
      %v1437 = vpop.permute.xlu0 %1436
      %1438 = vrot.lane.b32.xlu0 %v221, 107
      %v1439 = vpop.permute.xlu0 %1438
      %1440 = vrot.lane.b32.xlu0 %v222, 107
      %v1441 = vpop.permute.xlu0 %1440
      %1442 = vrot.lane.b32.xlu0 %v223, 107
      %v1443 = vpop.permute.xlu0 %1442
      %vm1444 = vcmask 875520
      %v1445 = vsel %vm1444, %v1429, %v1431
      %v1446 = vsel %vm1444, %v1431, %v1433
      %v1447 = vsel %vm1444, %v1433, %v1435
      %v1448 = vsel %vm1444, %v1437, %v1439
      %v1449 = vsel %vm1444, %v1439, %v1441
      %v1450 = vsel %vm1444, %v1441, %v1443
      %v1460 = vsel %vm255, %v1309, 0
      %1462 = vmatprep.subr.bf16.mxu0 0
      %1463 = vmatpush1.bf16.msra.mxu0 0
      %1464 = vmatprep.subr.bf16.mxu0 0
      %1465 = vmatpush1.bf16.msra.mxu0 0
      %1466 = vmatprep.subr.bf16.mxu0 0
      %1467 = vmatpush1.bf16.msra.mxu0 0
      %1468 = vmatprep.subr.bf16.mxu0 0
      %1469 = vmatpush1.bf16.msra.mxu0 0
      %1470 = vmatprep.subr.bf16.mxu0 0
      %1471 = vmatpush1.bf16.msra.mxu0 0
      %1472 = vmatprep.subr.bf16.mxu0 0
      %1473 = vmatpush1.bf16.msra.mxu0 0
      %1474 = vmatprep.subr.bf16.mxu0 %v1449
      %1475 = vmatpush1.bf16.msra.mxu0 %v1448
      %1476 = vmatprep.subr.bf16.mxu0 %v1446
      %1477 = vmatpush1.bf16.msra.mxu0 %v1445
      %1478 = vmatprep.subr.bf16.mxu0 0
      %1479 = vmatpush2.bf16.msra.mxu0 0
      %1480 = vmatprep.subr.bf16.mxu0 0
      %1481 = vmatpush2.bf16.msra.mxu0 0
      %1482 = vmatprep.subr.bf16.mxu0 0
      %1483 = vmatpush2.bf16.msra.mxu0 0
      %1484 = vmatprep.subr.bf16.mxu0 0
      %1485 = vmatpush2.bf16.msra.mxu0 0
      %1486 = vmatprep.subr.bf16.mxu0 0
      %1487 = vmatpush2.bf16.msra.mxu0 0
      %1488 = vmatprep.subr.bf16.mxu0 0
      %1489 = vmatpush2.bf16.msra.mxu0 0
      %1490 = vmatprep.subr.bf16.mxu0 0
      %1491 = vmatpush2.bf16.msra.mxu0 0
      %1492 = vmatprep.subr.bf16.mxu0 0
      %1493 = vmatpush2.bf16.msra.mxu0 0
      %1494 = vmatprep.mubr.bf16.mxu0 0
      %1495 = vmatmul.mubr.bf16.gmra.mxu0 %v1460
      %v1496 = vpop.f32.mrf.mxu0
      %v1497 = vadd.f32 %v1381, %v1496
      %v1498 = vpop.f32.mrf.mxu0
      %v1499 = vadd.f32 %v1383, %v1498
      %v1500 = vpop.f32.mrf.mxu0
      %v1501 = vpop.f32.mrf.mxu0
      %1502 = vdwg.mxu0
      %1503 = vmatprep.subr.bf16.mxu0 0
      %1504 = vmatpush1.bf16.msra.mxu0 0
      %1505 = vmatprep.subr.bf16.mxu0 0
      %1506 = vmatpush1.bf16.msra.mxu0 0
      %1507 = vmatprep.subr.bf16.mxu0 0
      %1508 = vmatpush1.bf16.msra.mxu0 0
      %1509 = vmatprep.subr.bf16.mxu0 0
      %1510 = vmatpush1.bf16.msra.mxu0 0
      %1511 = vmatprep.subr.bf16.mxu0 0
      %1512 = vmatpush1.bf16.msra.mxu0 0
      %1513 = vmatprep.subr.bf16.mxu0 0
      %1514 = vmatpush1.bf16.msra.mxu0 0
      %1515 = vmatprep.subr.bf16.mxu0 %v1443
      %1516 = vmatpush1.bf16.msra.mxu0 %v1450
      %1517 = vmatprep.subr.bf16.mxu0 %v1435
      %1518 = vmatpush1.bf16.msra.mxu0 %v1447
      %1519 = vmatprep.subr.bf16.mxu0 0
      %1520 = vmatpush2.bf16.msra.mxu0 0
      %1521 = vmatprep.subr.bf16.mxu0 0
      %1522 = vmatpush2.bf16.msra.mxu0 0
      %1523 = vmatprep.subr.bf16.mxu0 0
      %1524 = vmatpush2.bf16.msra.mxu0 0
      %1525 = vmatprep.subr.bf16.mxu0 0
      %1526 = vmatpush2.bf16.msra.mxu0 0
      %1527 = vmatprep.subr.bf16.mxu0 0
      %1528 = vmatpush2.bf16.msra.mxu0 0
      %1529 = vmatprep.subr.bf16.mxu0 0
      %1530 = vmatpush2.bf16.msra.mxu0 0
      %1531 = vmatprep.subr.bf16.mxu0 0
      %1532 = vmatpush2.bf16.msra.mxu0 0
      %1533 = vmatprep.subr.bf16.mxu0 0
      %1534 = vmatpush2.bf16.msra.mxu0 0
      %1535 = vmatprep.mubr.bf16.mxu0 0
      %1536 = vmatmul.mubr.bf16.gmra.mxu0 %v1460
      %v1537 = vpop.f32.mrf.mxu0
      %v1538 = vadd.f32 %v1422, %v1537
      %v1539 = vpop.f32.mrf.mxu0
      %v1540 = vadd.f32 %v1424, %v1539
      %v1541 = vpop.f32.mrf.mxu0
      %v1542 = vpop.f32.mrf.mxu0
      %1543 = vdwg.mxu0
      %s1544 = scalar_lea.vmem %s1, 44
      %v1545 = vld [vmem:[%s1544] sm:$0xf]
      %1546 = vrot.lane.b32.xlu0 %v585, 51
      %v1547 = vpop.permute.xlu0 %1546
      %1548 = vrot.lane.b32.xlu0 %v216, 51
      %v1549 = vpop.permute.xlu0 %1548
      %1550 = vrot.lane.b32.xlu0 %v217, 51
      %v1551 = vpop.permute.xlu0 %1550
      %1552 = vrot.lane.b32.xlu0 %v218, 51
      %v1553 = vpop.permute.xlu0 %1552
      %1554 = vrot.lane.b32.xlu0 %v586, 51
      %v1555 = vpop.permute.xlu0 %1554
      %1556 = vrot.lane.b32.xlu0 %v220, 51
      %v1557 = vpop.permute.xlu0 %1556
      %1558 = vrot.lane.b32.xlu0 %v221, 51
      %v1559 = vpop.permute.xlu0 %1558
      %1560 = vrot.lane.b32.xlu0 %v222, 51
      %v1561 = vpop.permute.xlu0 %1560
      %vm1562 = vcmask 416768
      %v1563 = vsel %vm1562, %v1547, %v1549
      %v1564 = vsel %vm1562, %v1549, %v1551
      %v1565 = vsel %vm1562, %v1551, %v1553
      %v1566 = vsel %vm1562, %v1555, %v1557
      %v1567 = vsel %vm1562, %v1557, %v1559
      %v1568 = vsel %vm1562, %v1559, %v1561
      %v1578 = vsel %vm255, %v1545, 0
      %1580 = vmatprep.subr.bf16.mxu0 0
      %1581 = vmatpush1.bf16.msra.mxu0 0
      %1582 = vmatprep.subr.bf16.mxu0 0
      %1583 = vmatpush1.bf16.msra.mxu0 0
      %1584 = vmatprep.subr.bf16.mxu0 0
      %1585 = vmatpush1.bf16.msra.mxu0 0
      %1586 = vmatprep.subr.bf16.mxu0 0
      %1587 = vmatpush1.bf16.msra.mxu0 0
      %1588 = vmatprep.subr.bf16.mxu0 0
      %1589 = vmatpush1.bf16.msra.mxu0 0
      %1590 = vmatprep.subr.bf16.mxu0 0
      %1591 = vmatpush1.bf16.msra.mxu0 0
      %1592 = vmatprep.subr.bf16.mxu0 %v1567
      %1593 = vmatpush1.bf16.msra.mxu0 %v1566
      %1594 = vmatprep.subr.bf16.mxu0 %v1564
      %1595 = vmatpush1.bf16.msra.mxu0 %v1563
      %1596 = vmatprep.subr.bf16.mxu0 0
      %1597 = vmatpush2.bf16.msra.mxu0 0
      %1598 = vmatprep.subr.bf16.mxu0 0
      %1599 = vmatpush2.bf16.msra.mxu0 0
      %1600 = vmatprep.subr.bf16.mxu0 0
      %1601 = vmatpush2.bf16.msra.mxu0 0
      %1602 = vmatprep.subr.bf16.mxu0 0
      %1603 = vmatpush2.bf16.msra.mxu0 0
      %1604 = vmatprep.subr.bf16.mxu0 0
      %1605 = vmatpush2.bf16.msra.mxu0 0
      %1606 = vmatprep.subr.bf16.mxu0 0
      %1607 = vmatpush2.bf16.msra.mxu0 0
      %1608 = vmatprep.subr.bf16.mxu0 0
      %1609 = vmatpush2.bf16.msra.mxu0 0
      %1610 = vmatprep.subr.bf16.mxu0 0
      %1611 = vmatpush2.bf16.msra.mxu0 0
      %1612 = vmatprep.mubr.bf16.mxu0 0
      %1613 = vmatmul.mubr.bf16.gmra.mxu0 %v1578
      %v1614 = vpop.f32.mrf.mxu0
      %v1615 = vadd.f32 0.0, %v1614
      %v1616 = vpop.f32.mrf.mxu0
      %v1617 = vadd.f32 0.0, %v1616
      %v1618 = vpop.f32.mrf.mxu0
      %v1619 = vpop.f32.mrf.mxu0
      %1620 = vdwg.mxu0
      %1621 = vmatprep.subr.bf16.mxu0 0
      %1622 = vmatpush1.bf16.msra.mxu0 0
      %1623 = vmatprep.subr.bf16.mxu0 0
      %1624 = vmatpush1.bf16.msra.mxu0 0
      %1625 = vmatprep.subr.bf16.mxu0 0
      %1626 = vmatpush1.bf16.msra.mxu0 0
      %1627 = vmatprep.subr.bf16.mxu0 0
      %1628 = vmatpush1.bf16.msra.mxu0 0
      %1629 = vmatprep.subr.bf16.mxu0 0
      %1630 = vmatpush1.bf16.msra.mxu0 0
      %1631 = vmatprep.subr.bf16.mxu0 0
      %1632 = vmatpush1.bf16.msra.mxu0 0
      %1633 = vmatprep.subr.bf16.mxu0 %v1561
      %1634 = vmatpush1.bf16.msra.mxu0 %v1568
      %1635 = vmatprep.subr.bf16.mxu0 %v1553
      %1636 = vmatpush1.bf16.msra.mxu0 %v1565
      %1637 = vmatprep.subr.bf16.mxu0 0
      %1638 = vmatpush2.bf16.msra.mxu0 0
      %1639 = vmatprep.subr.bf16.mxu0 0
      %1640 = vmatpush2.bf16.msra.mxu0 0
      %1641 = vmatprep.subr.bf16.mxu0 0
      %1642 = vmatpush2.bf16.msra.mxu0 0
      %1643 = vmatprep.subr.bf16.mxu0 0
      %1644 = vmatpush2.bf16.msra.mxu0 0
      %1645 = vmatprep.subr.bf16.mxu0 0
      %1646 = vmatpush2.bf16.msra.mxu0 0
      %1647 = vmatprep.subr.bf16.mxu0 0
      %1648 = vmatpush2.bf16.msra.mxu0 0
      %1649 = vmatprep.subr.bf16.mxu0 0
      %1650 = vmatpush2.bf16.msra.mxu0 0
      %1651 = vmatprep.subr.bf16.mxu0 0
      %1652 = vmatpush2.bf16.msra.mxu0 0
      %1653 = vmatprep.mubr.bf16.mxu0 0
      %1654 = vmatmul.mubr.bf16.gmra.mxu0 %v1578
      %v1655 = vpop.f32.mrf.mxu0
      %v1656 = vadd.f32 0.0, %v1655
      %v1657 = vpop.f32.mrf.mxu0
      %v1658 = vadd.f32 0.0, %v1657
      %v1659 = vpop.f32.mrf.mxu0
      %v1660 = vpop.f32.mrf.mxu0
      %1661 = vdwg.mxu0
      %v1662 = vadd.f32 %v1497, %v1615
      %v1663 = vadd.f32 %v1499, %v1617
      %v1664 = vadd.f32 %v1538, %v1656
      %v1665 = vadd.f32 %v1540, %v1658
      %s1666 = scalar_lea.vmem %s1, 48
      %v1667 = vld [vmem:[%s1666] sm:$0xf]
      %1668 = vrot.lane.b32.xlu0 %v585, 54
      %v1669 = vpop.permute.xlu0 %1668
      %1670 = vrot.lane.b32.xlu0 %v216, 54
      %v1671 = vpop.permute.xlu0 %1670
      %1672 = vrot.lane.b32.xlu0 %v217, 54
      %v1673 = vpop.permute.xlu0 %1672
      %1674 = vrot.lane.b32.xlu0 %v218, 54
      %v1675 = vpop.permute.xlu0 %1674
      %1676 = vrot.lane.b32.xlu0 %v586, 54
      %v1677 = vpop.permute.xlu0 %1676
      %1678 = vrot.lane.b32.xlu0 %v220, 54
      %v1679 = vpop.permute.xlu0 %1678
      %1680 = vrot.lane.b32.xlu0 %v221, 54
      %v1681 = vpop.permute.xlu0 %1680
      %1682 = vrot.lane.b32.xlu0 %v222, 54
      %v1683 = vpop.permute.xlu0 %1682
      %vm1684 = vcmask 441344
      %v1685 = vsel %vm1684, %v1669, %v1671
      %v1686 = vsel %vm1684, %v1671, %v1673
      %v1687 = vsel %vm1684, %v1673, %v1675
      %v1688 = vsel %vm1684, %v1677, %v1679
      %v1689 = vsel %vm1684, %v1679, %v1681
      %v1690 = vsel %vm1684, %v1681, %v1683
      %v1700 = vsel %vm255, %v1667, 0
      %1702 = vmatprep.subr.bf16.mxu0 0
      %1703 = vmatpush1.bf16.msra.mxu0 0
      %1704 = vmatprep.subr.bf16.mxu0 0
      %1705 = vmatpush1.bf16.msra.mxu0 0
      %1706 = vmatprep.subr.bf16.mxu0 0
      %1707 = vmatpush1.bf16.msra.mxu0 0
      %1708 = vmatprep.subr.bf16.mxu0 0
      %1709 = vmatpush1.bf16.msra.mxu0 0
      %1710 = vmatprep.subr.bf16.mxu0 0
      %1711 = vmatpush1.bf16.msra.mxu0 0
      %1712 = vmatprep.subr.bf16.mxu0 0
      %1713 = vmatpush1.bf16.msra.mxu0 0
      %1714 = vmatprep.subr.bf16.mxu0 %v1689
      %1715 = vmatpush1.bf16.msra.mxu0 %v1688
      %1716 = vmatprep.subr.bf16.mxu0 %v1686
      %1717 = vmatpush1.bf16.msra.mxu0 %v1685
      %1718 = vmatprep.subr.bf16.mxu0 0
      %1719 = vmatpush2.bf16.msra.mxu0 0
      %1720 = vmatprep.subr.bf16.mxu0 0
      %1721 = vmatpush2.bf16.msra.mxu0 0
      %1722 = vmatprep.subr.bf16.mxu0 0
      %1723 = vmatpush2.bf16.msra.mxu0 0
      %1724 = vmatprep.subr.bf16.mxu0 0
      %1725 = vmatpush2.bf16.msra.mxu0 0
      %1726 = vmatprep.subr.bf16.mxu0 0
      %1727 = vmatpush2.bf16.msra.mxu0 0
      %1728 = vmatprep.subr.bf16.mxu0 0
      %1729 = vmatpush2.bf16.msra.mxu0 0
      %1730 = vmatprep.subr.bf16.mxu0 0
      %1731 = vmatpush2.bf16.msra.mxu0 0
      %1732 = vmatprep.subr.bf16.mxu0 0
      %1733 = vmatpush2.bf16.msra.mxu0 0
      %1734 = vmatprep.mubr.bf16.mxu0 0
      %1735 = vmatmul.mubr.bf16.gmra.mxu0 %v1700
      %v1736 = vpop.f32.mrf.mxu0
      %v1737 = vadd.f32 0.0, %v1736
      %v1738 = vpop.f32.mrf.mxu0
      %v1739 = vadd.f32 0.0, %v1738
      %v1740 = vpop.f32.mrf.mxu0
      %v1741 = vpop.f32.mrf.mxu0
      %1742 = vdwg.mxu0
      %1743 = vmatprep.subr.bf16.mxu0 0
      %1744 = vmatpush1.bf16.msra.mxu0 0
      %1745 = vmatprep.subr.bf16.mxu0 0
      %1746 = vmatpush1.bf16.msra.mxu0 0
      %1747 = vmatprep.subr.bf16.mxu0 0
      %1748 = vmatpush1.bf16.msra.mxu0 0
      %1749 = vmatprep.subr.bf16.mxu0 0
      %1750 = vmatpush1.bf16.msra.mxu0 0
      %1751 = vmatprep.subr.bf16.mxu0 0
      %1752 = vmatpush1.bf16.msra.mxu0 0
      %1753 = vmatprep.subr.bf16.mxu0 0
      %1754 = vmatpush1.bf16.msra.mxu0 0
      %1755 = vmatprep.subr.bf16.mxu0 %v1683
      %1756 = vmatpush1.bf16.msra.mxu0 %v1690
      %1757 = vmatprep.subr.bf16.mxu0 %v1675
      %1758 = vmatpush1.bf16.msra.mxu0 %v1687
      %1759 = vmatprep.subr.bf16.mxu0 0
      %1760 = vmatpush2.bf16.msra.mxu0 0
      %1761 = vmatprep.subr.bf16.mxu0 0
      %1762 = vmatpush2.bf16.msra.mxu0 0
      %1763 = vmatprep.subr.bf16.mxu0 0
      %1764 = vmatpush2.bf16.msra.mxu0 0
      %1765 = vmatprep.subr.bf16.mxu0 0
      %1766 = vmatpush2.bf16.msra.mxu0 0
      %1767 = vmatprep.subr.bf16.mxu0 0
      %1768 = vmatpush2.bf16.msra.mxu0 0
      %1769 = vmatprep.subr.bf16.mxu0 0
      %1770 = vmatpush2.bf16.msra.mxu0 0
      %1771 = vmatprep.subr.bf16.mxu0 0
      %1772 = vmatpush2.bf16.msra.mxu0 0
      %1773 = vmatprep.subr.bf16.mxu0 0
      %1774 = vmatpush2.bf16.msra.mxu0 0
      %1775 = vmatprep.mubr.bf16.mxu0 0
      %1776 = vmatmul.mubr.bf16.gmra.mxu0 %v1700
      %v1777 = vpop.f32.mrf.mxu0
      %v1778 = vadd.f32 0.0, %v1777
      %v1779 = vpop.f32.mrf.mxu0
      %v1780 = vadd.f32 0.0, %v1779
      %v1781 = vpop.f32.mrf.mxu0
      %v1782 = vpop.f32.mrf.mxu0
      %1783 = vdwg.mxu0
      %v1784 = vadd.f32 %v1662, %v1737
      %v1785 = vadd.f32 %v1663, %v1739
      %v1786 = vadd.f32 %v1664, %v1778
      %v1787 = vadd.f32 %v1665, %v1780
      %s1788 = scalar_lea.vmem %s1, 52
      %v1789 = vld [vmem:[%s1788] sm:$0xf]
      %1790 = vrot.lane.b32.xlu0 %v585, 123
      %v1791 = vpop.permute.xlu0 %1790
      %1792 = vrot.lane.b32.xlu0 %v216, 123
      %v1793 = vpop.permute.xlu0 %1792
      %1794 = vrot.lane.b32.xlu0 %v217, 123
      %v1795 = vpop.permute.xlu0 %1794
      %1796 = vrot.lane.b32.xlu0 %v218, 123
      %v1797 = vpop.permute.xlu0 %1796
      %1798 = vrot.lane.b32.xlu0 %v586, 123
      %v1799 = vpop.permute.xlu0 %1798
      %1800 = vrot.lane.b32.xlu0 %v220, 123
      %v1801 = vpop.permute.xlu0 %1800
      %1802 = vrot.lane.b32.xlu0 %v221, 123
      %v1803 = vpop.permute.xlu0 %1802
      %1804 = vrot.lane.b32.xlu0 %v222, 123
      %v1805 = vpop.permute.xlu0 %1804
      %vm1806 = vcmask 1006592
      %v1807 = vsel %vm1806, %v1791, %v1793
      %v1808 = vsel %vm1806, %v1793, %v1795
      %v1809 = vsel %vm1806, %v1795, %v1797
      %v1810 = vsel %vm1806, %v1799, %v1801
      %v1811 = vsel %vm1806, %v1801, %v1803
      %v1812 = vsel %vm1806, %v1803, %v1805
      %v1822 = vsel %vm255, %v1789, 0
      %1824 = vmatprep.subr.bf16.mxu0 0
      %1825 = vmatpush1.bf16.msra.mxu0 0
      %1826 = vmatprep.subr.bf16.mxu0 0
      %1827 = vmatpush1.bf16.msra.mxu0 0
      %1828 = vmatprep.subr.bf16.mxu0 0
      %1829 = vmatpush1.bf16.msra.mxu0 0
      %1830 = vmatprep.subr.bf16.mxu0 0
      %1831 = vmatpush1.bf16.msra.mxu0 0
      %1832 = vmatprep.subr.bf16.mxu0 0
      %1833 = vmatpush1.bf16.msra.mxu0 0
      %1834 = vmatprep.subr.bf16.mxu0 0
      %1835 = vmatpush1.bf16.msra.mxu0 0
      %1836 = vmatprep.subr.bf16.mxu0 %v1811
      %1837 = vmatpush1.bf16.msra.mxu0 %v1810
      %1838 = vmatprep.subr.bf16.mxu0 %v1808
      %1839 = vmatpush1.bf16.msra.mxu0 %v1807
      %1840 = vmatprep.subr.bf16.mxu0 0
      %1841 = vmatpush2.bf16.msra.mxu0 0
      %1842 = vmatprep.subr.bf16.mxu0 0
      %1843 = vmatpush2.bf16.msra.mxu0 0
      %1844 = vmatprep.subr.bf16.mxu0 0
      %1845 = vmatpush2.bf16.msra.mxu0 0
      %1846 = vmatprep.subr.bf16.mxu0 0
      %1847 = vmatpush2.bf16.msra.mxu0 0
      %1848 = vmatprep.subr.bf16.mxu0 0
      %1849 = vmatpush2.bf16.msra.mxu0 0
      %1850 = vmatprep.subr.bf16.mxu0 0
      %1851 = vmatpush2.bf16.msra.mxu0 0
      %1852 = vmatprep.subr.bf16.mxu0 0
      %1853 = vmatpush2.bf16.msra.mxu0 0
      %1854 = vmatprep.subr.bf16.mxu0 0
      %1855 = vmatpush2.bf16.msra.mxu0 0
      %1856 = vmatprep.mubr.bf16.mxu0 0
      %1857 = vmatmul.mubr.bf16.gmra.mxu0 %v1822
      %v1858 = vpop.f32.mrf.mxu0
      %v1859 = vadd.f32 0.0, %v1858
      %v1860 = vpop.f32.mrf.mxu0
      %v1861 = vadd.f32 0.0, %v1860
      %v1862 = vpop.f32.mrf.mxu0
      %v1863 = vpop.f32.mrf.mxu0
      %1864 = vdwg.mxu0
      %1865 = vmatprep.subr.bf16.mxu0 0
      %1866 = vmatpush1.bf16.msra.mxu0 0
      %1867 = vmatprep.subr.bf16.mxu0 0
      %1868 = vmatpush1.bf16.msra.mxu0 0
      %1869 = vmatprep.subr.bf16.mxu0 0
      %1870 = vmatpush1.bf16.msra.mxu0 0
      %1871 = vmatprep.subr.bf16.mxu0 0
      %1872 = vmatpush1.bf16.msra.mxu0 0
      %1873 = vmatprep.subr.bf16.mxu0 0
      %1874 = vmatpush1.bf16.msra.mxu0 0
      %1875 = vmatprep.subr.bf16.mxu0 0
      %1876 = vmatpush1.bf16.msra.mxu0 0
      %1877 = vmatprep.subr.bf16.mxu0 %v1805
      %1878 = vmatpush1.bf16.msra.mxu0 %v1812
      %1879 = vmatprep.subr.bf16.mxu0 %v1797
      %1880 = vmatpush1.bf16.msra.mxu0 %v1809
      %1881 = vmatprep.subr.bf16.mxu0 0
      %1882 = vmatpush2.bf16.msra.mxu0 0
      %1883 = vmatprep.subr.bf16.mxu0 0
      %1884 = vmatpush2.bf16.msra.mxu0 0
      %1885 = vmatprep.subr.bf16.mxu0 0
      %1886 = vmatpush2.bf16.msra.mxu0 0
      %1887 = vmatprep.subr.bf16.mxu0 0
      %1888 = vmatpush2.bf16.msra.mxu0 0
      %1889 = vmatprep.subr.bf16.mxu0 0
      %1890 = vmatpush2.bf16.msra.mxu0 0
      %1891 = vmatprep.subr.bf16.mxu0 0
      %1892 = vmatpush2.bf16.msra.mxu0 0
      %1893 = vmatprep.subr.bf16.mxu0 0
      %1894 = vmatpush2.bf16.msra.mxu0 0
      %1895 = vmatprep.subr.bf16.mxu0 0
      %1896 = vmatpush2.bf16.msra.mxu0 0
      %1897 = vmatprep.mubr.bf16.mxu0 0
      %1898 = vmatmul.mubr.bf16.gmra.mxu0 %v1822
      %v1899 = vpop.f32.mrf.mxu0
      %v1900 = vadd.f32 0.0, %v1899
      %v1901 = vpop.f32.mrf.mxu0
      %v1902 = vadd.f32 0.0, %v1901
      %v1903 = vpop.f32.mrf.mxu0
      %v1904 = vpop.f32.mrf.mxu0
      %1905 = vdwg.mxu0
      %v1906 = vadd.f32 %v1784, %v1859
      %v1907 = vadd.f32 %v1785, %v1861
      %v1908 = vadd.f32 %v1786, %v1900
      %v1909 = vadd.f32 %v1787, %v1902
      %s1910 = scalar_lea.vmem %s1, 56
      %v1911 = vld [vmem:[%s1910] sm:$0xf]
      %1912 = vrot.lane.b32.xlu0 %v585, 126
      %v1913 = vpop.permute.xlu0 %1912
      %1914 = vrot.lane.b32.xlu0 %v216, 126
      %v1915 = vpop.permute.xlu0 %1914
      %1916 = vrot.lane.b32.xlu0 %v217, 126
      %v1917 = vpop.permute.xlu0 %1916
      %1918 = vrot.lane.b32.xlu0 %v218, 126
      %v1919 = vpop.permute.xlu0 %1918
      %1920 = vrot.lane.b32.xlu0 %v586, 126
      %v1921 = vpop.permute.xlu0 %1920
      %1922 = vrot.lane.b32.xlu0 %v220, 126
      %v1923 = vpop.permute.xlu0 %1922
      %1924 = vrot.lane.b32.xlu0 %v221, 126
      %v1925 = vpop.permute.xlu0 %1924
      %1926 = vrot.lane.b32.xlu0 %v222, 126
      %v1927 = vpop.permute.xlu0 %1926
      %vm1928 = vcmask 1031168
      %v1929 = vsel %vm1928, %v1913, %v1915
      %v1930 = vsel %vm1928, %v1915, %v1917
      %v1931 = vsel %vm1928, %v1917, %v1919
      %v1932 = vsel %vm1928, %v1921, %v1923
      %v1933 = vsel %vm1928, %v1923, %v1925
      %v1934 = vsel %vm1928, %v1925, %v1927
      %v1944 = vsel %vm255, %v1911, 0
      %1946 = vmatprep.subr.bf16.mxu0 0
      %1947 = vmatpush1.bf16.msra.mxu0 0
      %1948 = vmatprep.subr.bf16.mxu0 0
      %1949 = vmatpush1.bf16.msra.mxu0 0
      %1950 = vmatprep.subr.bf16.mxu0 0
      %1951 = vmatpush1.bf16.msra.mxu0 0
      %1952 = vmatprep.subr.bf16.mxu0 0
      %1953 = vmatpush1.bf16.msra.mxu0 0
      %1954 = vmatprep.subr.bf16.mxu0 0
      %1955 = vmatpush1.bf16.msra.mxu0 0
      %1956 = vmatprep.subr.bf16.mxu0 0
      %1957 = vmatpush1.bf16.msra.mxu0 0
      %1958 = vmatprep.subr.bf16.mxu0 %v1933
      %1959 = vmatpush1.bf16.msra.mxu0 %v1932
      %1960 = vmatprep.subr.bf16.mxu0 %v1930
      %1961 = vmatpush1.bf16.msra.mxu0 %v1929
      %1962 = vmatprep.subr.bf16.mxu0 0
      %1963 = vmatpush2.bf16.msra.mxu0 0
      %1964 = vmatprep.subr.bf16.mxu0 0
      %1965 = vmatpush2.bf16.msra.mxu0 0
      %1966 = vmatprep.subr.bf16.mxu0 0
      %1967 = vmatpush2.bf16.msra.mxu0 0
      %1968 = vmatprep.subr.bf16.mxu0 0
      %1969 = vmatpush2.bf16.msra.mxu0 0
      %1970 = vmatprep.subr.bf16.mxu0 0
      %1971 = vmatpush2.bf16.msra.mxu0 0
      %1972 = vmatprep.subr.bf16.mxu0 0
      %1973 = vmatpush2.bf16.msra.mxu0 0
      %1974 = vmatprep.subr.bf16.mxu0 0
      %1975 = vmatpush2.bf16.msra.mxu0 0
      %1976 = vmatprep.subr.bf16.mxu0 0
      %1977 = vmatpush2.bf16.msra.mxu0 0
      %1978 = vmatprep.mubr.bf16.mxu0 0
      %1979 = vmatmul.mubr.bf16.gmra.mxu0 %v1944
      %v1980 = vpop.f32.mrf.mxu0
      %v1981 = vadd.f32 0.0, %v1980
      %v1982 = vpop.f32.mrf.mxu0
      %v1983 = vadd.f32 0.0, %v1982
      %v1984 = vpop.f32.mrf.mxu0
      %v1985 = vpop.f32.mrf.mxu0
      %1986 = vdwg.mxu0
      %1987 = vmatprep.subr.bf16.mxu0 0
      %1988 = vmatpush1.bf16.msra.mxu0 0
      %1989 = vmatprep.subr.bf16.mxu0 0
      %1990 = vmatpush1.bf16.msra.mxu0 0
      %1991 = vmatprep.subr.bf16.mxu0 0
      %1992 = vmatpush1.bf16.msra.mxu0 0
      %1993 = vmatprep.subr.bf16.mxu0 0
      %1994 = vmatpush1.bf16.msra.mxu0 0
      %1995 = vmatprep.subr.bf16.mxu0 0
      %1996 = vmatpush1.bf16.msra.mxu0 0
      %1997 = vmatprep.subr.bf16.mxu0 0
      %1998 = vmatpush1.bf16.msra.mxu0 0
      %1999 = vmatprep.subr.bf16.mxu0 %v1927
      %2000 = vmatpush1.bf16.msra.mxu0 %v1934
      %2001 = vmatprep.subr.bf16.mxu0 %v1919
      %2002 = vmatpush1.bf16.msra.mxu0 %v1931
      %2003 = vmatprep.subr.bf16.mxu0 0
      %2004 = vmatpush2.bf16.msra.mxu0 0
      %2005 = vmatprep.subr.bf16.mxu0 0
      %2006 = vmatpush2.bf16.msra.mxu0 0
      %2007 = vmatprep.subr.bf16.mxu0 0
      %2008 = vmatpush2.bf16.msra.mxu0 0
      %2009 = vmatprep.subr.bf16.mxu0 0
      %2010 = vmatpush2.bf16.msra.mxu0 0
      %2011 = vmatprep.subr.bf16.mxu0 0
      %2012 = vmatpush2.bf16.msra.mxu0 0
      %2013 = vmatprep.subr.bf16.mxu0 0
      %2014 = vmatpush2.bf16.msra.mxu0 0
      %2015 = vmatprep.subr.bf16.mxu0 0
      %2016 = vmatpush2.bf16.msra.mxu0 0
      %2017 = vmatprep.subr.bf16.mxu0 0
      %2018 = vmatpush2.bf16.msra.mxu0 0
      %2019 = vmatprep.mubr.bf16.mxu0 0
      %2020 = vmatmul.mubr.bf16.gmra.mxu0 %v1944
      %v2021 = vpop.f32.mrf.mxu0
      %v2022 = vadd.f32 0.0, %v2021
      %v2023 = vpop.f32.mrf.mxu0
      %v2024 = vadd.f32 0.0, %v2023
      %v2025 = vpop.f32.mrf.mxu0
      %v2026 = vpop.f32.mrf.mxu0
      %2027 = vdwg.mxu0
      %v2028 = vadd.f32 %v1906, %v1981
      %v2029 = vadd.f32 %v1907, %v1983
      %v2030 = vadd.f32 %v1908, %v2022
      %v2031 = vadd.f32 %v1909, %v2024
      %v2032 = vadd.f32 %v2028, %v1297
      %v2033 = vadd.f32 %v2029, %v1297
      %v2034 = vadd.f32 %v2030, %v1297
      %v2035 = vadd.f32 %v2031, %v1297
      %2036 = vst [vmem:[%s170 + $0x20] sm:$0xff] %v2032
      %2037 = vst [vmem:[%s170 + $0x28] sm:$0xff] %v2033
      %2038 = vst [vmem:[%s170 + $0x30] sm:$0xff] %v2034
      %2039 = vst.msk [vmem:[%s170 + $0x38] sm:$0xff] %vm1306, %v2035
      %s2040 = scalar_lea.vmem %s1, 60
      %v2041 = vld [vmem:[%s2040] sm:$0xf]
      %s2042 = scalar_lea.vmem %s1, 64
      %v2043 = vld [vmem:[%s2042] sm:$0xf]
      %2044 = vrot.lane.b32.xlu0 %v585, 5
      %v2045 = vpop.permute.xlu0 %2044
      %2046 = vrot.lane.b32.xlu0 %v216, 5
      %v2047 = vpop.permute.xlu0 %2046
      %2048 = vrot.lane.b32.xlu0 %v217, 5
      %v2049 = vpop.permute.xlu0 %2048
      %2050 = vrot.lane.b32.xlu0 %v218, 5
      %v2051 = vpop.permute.xlu0 %2050
      %2052 = vrot.lane.b32.xlu0 %v219, 5
      %v2053 = vpop.permute.xlu0 %2052
      %2054 = vrot.lane.b32.xlu0 %v586, 5
      %v2055 = vpop.permute.xlu0 %2054
      %2056 = vrot.lane.b32.xlu0 %v220, 5
      %v2057 = vpop.permute.xlu0 %2056
      %2058 = vrot.lane.b32.xlu0 %v221, 5
      %v2059 = vpop.permute.xlu0 %2058
      %2060 = vrot.lane.b32.xlu0 %v222, 5
      %v2061 = vpop.permute.xlu0 %2060
      %2062 = vrot.lane.b32.xlu0 %v223, 5
      %v2063 = vpop.permute.xlu0 %2062
      %vm2064 = vcmask 39936
      %v2065 = vsel %vm2064, %v2045, %v2047
      %v2066 = vsel %vm2064, %v2047, %v2049
      %v2067 = vsel %vm2064, %v2049, %v2051
      %v2068 = vsel %vm2064, %v2051, %v2053
      %v2069 = vsel %vm2064, %v2055, %v2057
      %v2070 = vsel %vm2064, %v2057, %v2059
      %v2071 = vsel %vm2064, %v2059, %v2061
      %v2072 = vsel %vm2064, %v2061, %v2063
      %v2082 = vsel %vm255, %v2043, 0
      %2084 = vmatprep.subr.bf16.mxu0 0
      %2085 = vmatpush1.bf16.msra.mxu0 0
      %2086 = vmatprep.subr.bf16.mxu0 0
      %2087 = vmatpush1.bf16.msra.mxu0 0
      %2088 = vmatprep.subr.bf16.mxu0 0
      %2089 = vmatpush1.bf16.msra.mxu0 0
      %2090 = vmatprep.subr.bf16.mxu0 0
      %2091 = vmatpush1.bf16.msra.mxu0 0
      %2092 = vmatprep.subr.bf16.mxu0 0
      %2093 = vmatpush1.bf16.msra.mxu0 0
      %2094 = vmatprep.subr.bf16.mxu0 0
      %2095 = vmatpush1.bf16.msra.mxu0 0
      %2096 = vmatprep.subr.bf16.mxu0 %v2070
      %2097 = vmatpush1.bf16.msra.mxu0 %v2069
      %2098 = vmatprep.subr.bf16.mxu0 %v2066
      %2099 = vmatpush1.bf16.msra.mxu0 %v2065
      %2100 = vmatprep.subr.bf16.mxu0 0
      %2101 = vmatpush2.bf16.msra.mxu0 0
      %2102 = vmatprep.subr.bf16.mxu0 0
      %2103 = vmatpush2.bf16.msra.mxu0 0
      %2104 = vmatprep.subr.bf16.mxu0 0
      %2105 = vmatpush2.bf16.msra.mxu0 0
      %2106 = vmatprep.subr.bf16.mxu0 0
      %2107 = vmatpush2.bf16.msra.mxu0 0
      %2108 = vmatprep.subr.bf16.mxu0 0
      %2109 = vmatpush2.bf16.msra.mxu0 0
      %2110 = vmatprep.subr.bf16.mxu0 0
      %2111 = vmatpush2.bf16.msra.mxu0 0
      %2112 = vmatprep.subr.bf16.mxu0 0
      %2113 = vmatpush2.bf16.msra.mxu0 0
      %2114 = vmatprep.subr.bf16.mxu0 0
      %2115 = vmatpush2.bf16.msra.mxu0 0
      %2116 = vmatprep.mubr.bf16.mxu0 0
      %2117 = vmatmul.mubr.bf16.gmra.mxu0 %v2082
      %v2118 = vpop.f32.mrf.mxu0
      %v2119 = vadd.f32 0.0, %v2118
      %v2120 = vpop.f32.mrf.mxu0
      %v2121 = vadd.f32 0.0, %v2120
      %v2122 = vpop.f32.mrf.mxu0
      %v2123 = vpop.f32.mrf.mxu0
      %2124 = vdwg.mxu0
      %2125 = vmatprep.subr.bf16.mxu0 0
      %2126 = vmatpush1.bf16.msra.mxu0 0
      %2127 = vmatprep.subr.bf16.mxu0 0
      %2128 = vmatpush1.bf16.msra.mxu0 0
      %2129 = vmatprep.subr.bf16.mxu0 0
      %2130 = vmatpush1.bf16.msra.mxu0 0
      %2131 = vmatprep.subr.bf16.mxu0 0
      %2132 = vmatpush1.bf16.msra.mxu0 0
      %2133 = vmatprep.subr.bf16.mxu0 0
      %2134 = vmatpush1.bf16.msra.mxu0 0
      %2135 = vmatprep.subr.bf16.mxu0 0
      %2136 = vmatpush1.bf16.msra.mxu0 0
      %2137 = vmatprep.subr.bf16.mxu0 %v2072
      %2138 = vmatpush1.bf16.msra.mxu0 %v2071
      %2139 = vmatprep.subr.bf16.mxu0 %v2068
      %2140 = vmatpush1.bf16.msra.mxu0 %v2067
      %2141 = vmatprep.subr.bf16.mxu0 0
      %2142 = vmatpush2.bf16.msra.mxu0 0
      %2143 = vmatprep.subr.bf16.mxu0 0
      %2144 = vmatpush2.bf16.msra.mxu0 0
      %2145 = vmatprep.subr.bf16.mxu0 0
      %2146 = vmatpush2.bf16.msra.mxu0 0
      %2147 = vmatprep.subr.bf16.mxu0 0
      %2148 = vmatpush2.bf16.msra.mxu0 0
      %2149 = vmatprep.subr.bf16.mxu0 0
      %2150 = vmatpush2.bf16.msra.mxu0 0
      %2151 = vmatprep.subr.bf16.mxu0 0
      %2152 = vmatpush2.bf16.msra.mxu0 0
      %2153 = vmatprep.subr.bf16.mxu0 0
      %2154 = vmatpush2.bf16.msra.mxu0 0
      %2155 = vmatprep.subr.bf16.mxu0 0
      %2156 = vmatpush2.bf16.msra.mxu0 0
      %2157 = vmatprep.mubr.bf16.mxu0 0
      %2158 = vmatmul.mubr.bf16.gmra.mxu0 %v2082
      %v2159 = vpop.f32.mrf.mxu0
      %v2160 = vadd.f32 0.0, %v2159
      %v2161 = vpop.f32.mrf.mxu0
      %v2162 = vadd.f32 0.0, %v2161
      %v2163 = vpop.f32.mrf.mxu0
      %v2164 = vpop.f32.mrf.mxu0
      %2165 = vdwg.mxu0
      %2166 = vrot.lane.b32.xlu0 %v585, 2
      %v2167 = vpop.permute.xlu0 %2166
      %2168 = vrot.lane.b32.xlu0 %v216, 2
      %v2169 = vpop.permute.xlu0 %2168
      %2170 = vrot.lane.b32.xlu0 %v217, 2
      %v2171 = vpop.permute.xlu0 %2170
      %2172 = vrot.lane.b32.xlu0 %v218, 2
      %v2173 = vpop.permute.xlu0 %2172
      %2174 = vrot.lane.b32.xlu0 %v219, 2
      %v2175 = vpop.permute.xlu0 %2174
      %2176 = vrot.lane.b32.xlu0 %v586, 2
      %v2177 = vpop.permute.xlu0 %2176
      %2178 = vrot.lane.b32.xlu0 %v220, 2
      %v2179 = vpop.permute.xlu0 %2178
      %2180 = vrot.lane.b32.xlu0 %v221, 2
      %v2181 = vpop.permute.xlu0 %2180
      %2182 = vrot.lane.b32.xlu0 %v222, 2
      %v2183 = vpop.permute.xlu0 %2182
      %2184 = vrot.lane.b32.xlu0 %v223, 2
      %v2185 = vpop.permute.xlu0 %2184
      %vm2186 = vcmask 15360
      %v2187 = vsel %vm2186, %v2167, %v2169
      %v2188 = vsel %vm2186, %v2169, %v2171
      %v2189 = vsel %vm2186, %v2171, %v2173
      %v2190 = vsel %vm2186, %v2173, %v2175
      %v2191 = vsel %vm2186, %v2177, %v2179
      %v2192 = vsel %vm2186, %v2179, %v2181
      %v2193 = vsel %vm2186, %v2181, %v2183
      %v2194 = vsel %vm2186, %v2183, %v2185
      %v2204 = vsel %vm255, %v2041, 0
      %2206 = vmatprep.subr.bf16.mxu0 0
      %2207 = vmatpush1.bf16.msra.mxu0 0
      %2208 = vmatprep.subr.bf16.mxu0 0
      %2209 = vmatpush1.bf16.msra.mxu0 0
      %2210 = vmatprep.subr.bf16.mxu0 0
      %2211 = vmatpush1.bf16.msra.mxu0 0
      %2212 = vmatprep.subr.bf16.mxu0 0
      %2213 = vmatpush1.bf16.msra.mxu0 0
      %2214 = vmatprep.subr.bf16.mxu0 0
      %2215 = vmatpush1.bf16.msra.mxu0 0
      %2216 = vmatprep.subr.bf16.mxu0 0
      %2217 = vmatpush1.bf16.msra.mxu0 0
      %2218 = vmatprep.subr.bf16.mxu0 %v2192
      %2219 = vmatpush1.bf16.msra.mxu0 %v2191
      %2220 = vmatprep.subr.bf16.mxu0 %v2188
      %2221 = vmatpush1.bf16.msra.mxu0 %v2187
      %2222 = vmatprep.subr.bf16.mxu0 0
      %2223 = vmatpush2.bf16.msra.mxu0 0
      %2224 = vmatprep.subr.bf16.mxu0 0
      %2225 = vmatpush2.bf16.msra.mxu0 0
      %2226 = vmatprep.subr.bf16.mxu0 0
      %2227 = vmatpush2.bf16.msra.mxu0 0
      %2228 = vmatprep.subr.bf16.mxu0 0
      %2229 = vmatpush2.bf16.msra.mxu0 0
      %2230 = vmatprep.subr.bf16.mxu0 0
      %2231 = vmatpush2.bf16.msra.mxu0 0
      %2232 = vmatprep.subr.bf16.mxu0 0
      %2233 = vmatpush2.bf16.msra.mxu0 0
      %2234 = vmatprep.subr.bf16.mxu0 0
      %2235 = vmatpush2.bf16.msra.mxu0 0
      %2236 = vmatprep.subr.bf16.mxu0 0
      %2237 = vmatpush2.bf16.msra.mxu0 0
      %2238 = vmatprep.mubr.bf16.mxu0 0
      %2239 = vmatmul.mubr.bf16.gmra.mxu0 %v2204
      %v2240 = vpop.f32.mrf.mxu0
      %v2241 = vadd.f32 %v2119, %v2240
      %v2242 = vpop.f32.mrf.mxu0
      %v2243 = vadd.f32 %v2121, %v2242
      %v2244 = vpop.f32.mrf.mxu0
      %v2245 = vpop.f32.mrf.mxu0
      %2246 = vdwg.mxu0
      %2247 = vmatprep.subr.bf16.mxu0 0
      %2248 = vmatpush1.bf16.msra.mxu0 0
      %2249 = vmatprep.subr.bf16.mxu0 0
      %2250 = vmatpush1.bf16.msra.mxu0 0
      %2251 = vmatprep.subr.bf16.mxu0 0
      %2252 = vmatpush1.bf16.msra.mxu0 0
      %2253 = vmatprep.subr.bf16.mxu0 0
      %2254 = vmatpush1.bf16.msra.mxu0 0
      %2255 = vmatprep.subr.bf16.mxu0 0
      %2256 = vmatpush1.bf16.msra.mxu0 0
      %2257 = vmatprep.subr.bf16.mxu0 0
      %2258 = vmatpush1.bf16.msra.mxu0 0
      %2259 = vmatprep.subr.bf16.mxu0 %v2194
      %2260 = vmatpush1.bf16.msra.mxu0 %v2193
      %2261 = vmatprep.subr.bf16.mxu0 %v2190
      %2262 = vmatpush1.bf16.msra.mxu0 %v2189
      %2263 = vmatprep.subr.bf16.mxu0 0
      %2264 = vmatpush2.bf16.msra.mxu0 0
      %2265 = vmatprep.subr.bf16.mxu0 0
      %2266 = vmatpush2.bf16.msra.mxu0 0
      %2267 = vmatprep.subr.bf16.mxu0 0
      %2268 = vmatpush2.bf16.msra.mxu0 0
      %2269 = vmatprep.subr.bf16.mxu0 0
      %2270 = vmatpush2.bf16.msra.mxu0 0
      %2271 = vmatprep.subr.bf16.mxu0 0
      %2272 = vmatpush2.bf16.msra.mxu0 0
      %2273 = vmatprep.subr.bf16.mxu0 0
      %2274 = vmatpush2.bf16.msra.mxu0 0
      %2275 = vmatprep.subr.bf16.mxu0 0
      %2276 = vmatpush2.bf16.msra.mxu0 0
      %2277 = vmatprep.subr.bf16.mxu0 0
      %2278 = vmatpush2.bf16.msra.mxu0 0
      %2279 = vmatprep.mubr.bf16.mxu0 0
      %2280 = vmatmul.mubr.bf16.gmra.mxu0 %v2204
      %v2281 = vpop.f32.mrf.mxu0
      %v2282 = vadd.f32 %v2160, %v2281
      %v2283 = vpop.f32.mrf.mxu0
      %v2284 = vadd.f32 %v2162, %v2283
      %v2285 = vpop.f32.mrf.mxu0
      %v2286 = vpop.f32.mrf.mxu0
      %2287 = vdwg.mxu0
      %s2288 = scalar_lea.vmem %s1, 68
      %v2289 = vld [vmem:[%s2288] sm:$0xf]
      %2290 = vrot.lane.b32.xlu0 %v585, 8
      %v2291 = vpop.permute.xlu0 %2290
      %2292 = vrot.lane.b32.xlu0 %v216, 8
      %v2293 = vpop.permute.xlu0 %2292
      %2294 = vrot.lane.b32.xlu0 %v217, 8
      %v2295 = vpop.permute.xlu0 %2294
      %2296 = vrot.lane.b32.xlu0 %v218, 8
      %v2297 = vpop.permute.xlu0 %2296
      %2298 = vrot.lane.b32.xlu0 %v219, 8
      %v2299 = vpop.permute.xlu0 %2298
      %2300 = vrot.lane.b32.xlu0 %v586, 8
      %v2301 = vpop.permute.xlu0 %2300
      %2302 = vrot.lane.b32.xlu0 %v220, 8
      %v2303 = vpop.permute.xlu0 %2302
      %2304 = vrot.lane.b32.xlu0 %v221, 8
      %v2305 = vpop.permute.xlu0 %2304
      %2306 = vrot.lane.b32.xlu0 %v222, 8
      %v2307 = vpop.permute.xlu0 %2306
      %2308 = vrot.lane.b32.xlu0 %v223, 8
      %v2309 = vpop.permute.xlu0 %2308
      %vm2310 = vcmask 64512
      %v2311 = vsel %vm2310, %v2291, %v2293
      %v2312 = vsel %vm2310, %v2293, %v2295
      %v2313 = vsel %vm2310, %v2295, %v2297
      %v2314 = vsel %vm2310, %v2297, %v2299
      %v2315 = vsel %vm2310, %v2301, %v2303
      %v2316 = vsel %vm2310, %v2303, %v2305
      %v2317 = vsel %vm2310, %v2305, %v2307
      %v2318 = vsel %vm2310, %v2307, %v2309
      %v2328 = vsel %vm255, %v2289, 0
      %2330 = vmatprep.subr.bf16.mxu0 0
      %2331 = vmatpush1.bf16.msra.mxu0 0
      %2332 = vmatprep.subr.bf16.mxu0 0
      %2333 = vmatpush1.bf16.msra.mxu0 0
      %2334 = vmatprep.subr.bf16.mxu0 0
      %2335 = vmatpush1.bf16.msra.mxu0 0
      %2336 = vmatprep.subr.bf16.mxu0 0
      %2337 = vmatpush1.bf16.msra.mxu0 0
      %2338 = vmatprep.subr.bf16.mxu0 0
      %2339 = vmatpush1.bf16.msra.mxu0 0
      %2340 = vmatprep.subr.bf16.mxu0 0
      %2341 = vmatpush1.bf16.msra.mxu0 0
      %2342 = vmatprep.subr.bf16.mxu0 %v2316
      %2343 = vmatpush1.bf16.msra.mxu0 %v2315
      %2344 = vmatprep.subr.bf16.mxu0 %v2312
      %2345 = vmatpush1.bf16.msra.mxu0 %v2311
      %2346 = vmatprep.subr.bf16.mxu0 0
      %2347 = vmatpush2.bf16.msra.mxu0 0
      %2348 = vmatprep.subr.bf16.mxu0 0
      %2349 = vmatpush2.bf16.msra.mxu0 0
      %2350 = vmatprep.subr.bf16.mxu0 0
      %2351 = vmatpush2.bf16.msra.mxu0 0
      %2352 = vmatprep.subr.bf16.mxu0 0
      %2353 = vmatpush2.bf16.msra.mxu0 0
      %2354 = vmatprep.subr.bf16.mxu0 0
      %2355 = vmatpush2.bf16.msra.mxu0 0
      %2356 = vmatprep.subr.bf16.mxu0 0
      %2357 = vmatpush2.bf16.msra.mxu0 0
      %2358 = vmatprep.subr.bf16.mxu0 0
      %2359 = vmatpush2.bf16.msra.mxu0 0
      %2360 = vmatprep.subr.bf16.mxu0 0
      %2361 = vmatpush2.bf16.msra.mxu0 0
      %2362 = vmatprep.mubr.bf16.mxu0 0
      %2363 = vmatmul.mubr.bf16.gmra.mxu0 %v2328
      %v2364 = vpop.f32.mrf.mxu0
      %v2365 = vadd.f32 0.0, %v2364
      %v2366 = vpop.f32.mrf.mxu0
      %v2367 = vadd.f32 0.0, %v2366
      %v2368 = vpop.f32.mrf.mxu0
      %v2369 = vpop.f32.mrf.mxu0
      %2370 = vdwg.mxu0
      %2371 = vmatprep.subr.bf16.mxu0 0
      %2372 = vmatpush1.bf16.msra.mxu0 0
      %2373 = vmatprep.subr.bf16.mxu0 0
      %2374 = vmatpush1.bf16.msra.mxu0 0
      %2375 = vmatprep.subr.bf16.mxu0 0
      %2376 = vmatpush1.bf16.msra.mxu0 0
      %2377 = vmatprep.subr.bf16.mxu0 0
      %2378 = vmatpush1.bf16.msra.mxu0 0
      %2379 = vmatprep.subr.bf16.mxu0 0
      %2380 = vmatpush1.bf16.msra.mxu0 0
      %2381 = vmatprep.subr.bf16.mxu0 0
      %2382 = vmatpush1.bf16.msra.mxu0 0
      %2383 = vmatprep.subr.bf16.mxu0 %v2318
      %2384 = vmatpush1.bf16.msra.mxu0 %v2317
      %2385 = vmatprep.subr.bf16.mxu0 %v2314
      %2386 = vmatpush1.bf16.msra.mxu0 %v2313
      %2387 = vmatprep.subr.bf16.mxu0 0
      %2388 = vmatpush2.bf16.msra.mxu0 0
      %2389 = vmatprep.subr.bf16.mxu0 0
      %2390 = vmatpush2.bf16.msra.mxu0 0
      %2391 = vmatprep.subr.bf16.mxu0 0
      %2392 = vmatpush2.bf16.msra.mxu0 0
      %2393 = vmatprep.subr.bf16.mxu0 0
      %2394 = vmatpush2.bf16.msra.mxu0 0
      %2395 = vmatprep.subr.bf16.mxu0 0
      %2396 = vmatpush2.bf16.msra.mxu0 0
      %2397 = vmatprep.subr.bf16.mxu0 0
      %2398 = vmatpush2.bf16.msra.mxu0 0
      %2399 = vmatprep.subr.bf16.mxu0 0
      %2400 = vmatpush2.bf16.msra.mxu0 0
      %2401 = vmatprep.subr.bf16.mxu0 0
      %2402 = vmatpush2.bf16.msra.mxu0 0
      %2403 = vmatprep.mubr.bf16.mxu0 0
      %2404 = vmatmul.mubr.bf16.gmra.mxu0 %v2328
      %v2405 = vpop.f32.mrf.mxu0
      %v2406 = vadd.f32 0.0, %v2405
      %v2407 = vpop.f32.mrf.mxu0
      %v2408 = vadd.f32 0.0, %v2407
      %v2409 = vpop.f32.mrf.mxu0
      %v2410 = vpop.f32.mrf.mxu0
      %2411 = vdwg.mxu0
      %v2412 = vadd.f32 %v2241, %v2365
      %v2413 = vadd.f32 %v2243, %v2367
      %v2414 = vadd.f32 %v2282, %v2406
      %v2415 = vadd.f32 %v2284, %v2408
      %s2416 = scalar_lea.vmem %s1, 72
      %v2417 = vld [vmem:[%s2416] sm:$0xf]
      %2418 = vrot.lane.b32.xlu0 %v585, 74
      %v2419 = vpop.permute.xlu0 %2418
      %2420 = vrot.lane.b32.xlu0 %v216, 74
      %v2421 = vpop.permute.xlu0 %2420
      %2422 = vrot.lane.b32.xlu0 %v217, 74
      %v2423 = vpop.permute.xlu0 %2422
      %2424 = vrot.lane.b32.xlu0 %v218, 74
      %v2425 = vpop.permute.xlu0 %2424
      %2426 = vrot.lane.b32.xlu0 %v586, 74
      %v2427 = vpop.permute.xlu0 %2426
      %2428 = vrot.lane.b32.xlu0 %v220, 74
      %v2429 = vpop.permute.xlu0 %2428
      %2430 = vrot.lane.b32.xlu0 %v221, 74
      %v2431 = vpop.permute.xlu0 %2430
      %2432 = vrot.lane.b32.xlu0 %v222, 74
      %v2433 = vpop.permute.xlu0 %2432
      %vm2434 = vcmask 605184
      %v2435 = vsel %vm2434, %v2419, %v2421
      %v2436 = vsel %vm2434, %v2421, %v2423
      %v2437 = vsel %vm2434, %v2423, %v2425
      %v2438 = vsel %vm2434, %v2427, %v2429
      %v2439 = vsel %vm2434, %v2429, %v2431
      %v2440 = vsel %vm2434, %v2431, %v2433
      %v2450 = vsel %vm255, %v2417, 0
      %2452 = vmatprep.subr.bf16.mxu0 0
      %2453 = vmatpush1.bf16.msra.mxu0 0
      %2454 = vmatprep.subr.bf16.mxu0 0
      %2455 = vmatpush1.bf16.msra.mxu0 0
      %2456 = vmatprep.subr.bf16.mxu0 0
      %2457 = vmatpush1.bf16.msra.mxu0 0
      %2458 = vmatprep.subr.bf16.mxu0 0
      %2459 = vmatpush1.bf16.msra.mxu0 0
      %2460 = vmatprep.subr.bf16.mxu0 0
      %2461 = vmatpush1.bf16.msra.mxu0 0
      %2462 = vmatprep.subr.bf16.mxu0 0
      %2463 = vmatpush1.bf16.msra.mxu0 0
      %2464 = vmatprep.subr.bf16.mxu0 %v2439
      %2465 = vmatpush1.bf16.msra.mxu0 %v2438
      %2466 = vmatprep.subr.bf16.mxu0 %v2436
      %2467 = vmatpush1.bf16.msra.mxu0 %v2435
      %2468 = vmatprep.subr.bf16.mxu0 0
      %2469 = vmatpush2.bf16.msra.mxu0 0
      %2470 = vmatprep.subr.bf16.mxu0 0
      %2471 = vmatpush2.bf16.msra.mxu0 0
      %2472 = vmatprep.subr.bf16.mxu0 0
      %2473 = vmatpush2.bf16.msra.mxu0 0
      %2474 = vmatprep.subr.bf16.mxu0 0
      %2475 = vmatpush2.bf16.msra.mxu0 0
      %2476 = vmatprep.subr.bf16.mxu0 0
      %2477 = vmatpush2.bf16.msra.mxu0 0
      %2478 = vmatprep.subr.bf16.mxu0 0
      %2479 = vmatpush2.bf16.msra.mxu0 0
      %2480 = vmatprep.subr.bf16.mxu0 0
      %2481 = vmatpush2.bf16.msra.mxu0 0
      %2482 = vmatprep.subr.bf16.mxu0 0
      %2483 = vmatpush2.bf16.msra.mxu0 0
      %2484 = vmatprep.mubr.bf16.mxu0 0
      %2485 = vmatmul.mubr.bf16.gmra.mxu0 %v2450
      %v2486 = vpop.f32.mrf.mxu0
      %v2487 = vadd.f32 0.0, %v2486
      %v2488 = vpop.f32.mrf.mxu0
      %v2489 = vadd.f32 0.0, %v2488
      %v2490 = vpop.f32.mrf.mxu0
      %v2491 = vpop.f32.mrf.mxu0
      %2492 = vdwg.mxu0
      %2493 = vmatprep.subr.bf16.mxu0 0
      %2494 = vmatpush1.bf16.msra.mxu0 0
      %2495 = vmatprep.subr.bf16.mxu0 0
      %2496 = vmatpush1.bf16.msra.mxu0 0
      %2497 = vmatprep.subr.bf16.mxu0 0
      %2498 = vmatpush1.bf16.msra.mxu0 0
      %2499 = vmatprep.subr.bf16.mxu0 0
      %2500 = vmatpush1.bf16.msra.mxu0 0
      %2501 = vmatprep.subr.bf16.mxu0 0
      %2502 = vmatpush1.bf16.msra.mxu0 0
      %2503 = vmatprep.subr.bf16.mxu0 0
      %2504 = vmatpush1.bf16.msra.mxu0 0
      %2505 = vmatprep.subr.bf16.mxu0 %v2433
      %2506 = vmatpush1.bf16.msra.mxu0 %v2440
      %2507 = vmatprep.subr.bf16.mxu0 %v2425
      %2508 = vmatpush1.bf16.msra.mxu0 %v2437
      %2509 = vmatprep.subr.bf16.mxu0 0
      %2510 = vmatpush2.bf16.msra.mxu0 0
      %2511 = vmatprep.subr.bf16.mxu0 0
      %2512 = vmatpush2.bf16.msra.mxu0 0
      %2513 = vmatprep.subr.bf16.mxu0 0
      %2514 = vmatpush2.bf16.msra.mxu0 0
      %2515 = vmatprep.subr.bf16.mxu0 0
      %2516 = vmatpush2.bf16.msra.mxu0 0
      %2517 = vmatprep.subr.bf16.mxu0 0
      %2518 = vmatpush2.bf16.msra.mxu0 0
      %2519 = vmatprep.subr.bf16.mxu0 0
      %2520 = vmatpush2.bf16.msra.mxu0 0
      %2521 = vmatprep.subr.bf16.mxu0 0
      %2522 = vmatpush2.bf16.msra.mxu0 0
      %2523 = vmatprep.subr.bf16.mxu0 0
      %2524 = vmatpush2.bf16.msra.mxu0 0
      %2525 = vmatprep.mubr.bf16.mxu0 0
      %2526 = vmatmul.mubr.bf16.gmra.mxu0 %v2450
      %v2527 = vpop.f32.mrf.mxu0
      %v2528 = vadd.f32 0.0, %v2527
      %v2529 = vpop.f32.mrf.mxu0
      %v2530 = vadd.f32 0.0, %v2529
      %v2531 = vpop.f32.mrf.mxu0
      %v2532 = vpop.f32.mrf.mxu0
      %2533 = vdwg.mxu0
      %v2534 = vadd.f32 %v2412, %v2487
      %v2535 = vadd.f32 %v2413, %v2489
      %v2536 = vadd.f32 %v2414, %v2528
      %v2537 = vadd.f32 %v2415, %v2530
      %s2538 = scalar_lea.vmem %s1, 76
      %v2539 = vld [vmem:[%s2538] sm:$0xf]
      %2540 = vrot.lane.b32.xlu0 %v585, 77
      %v2541 = vpop.permute.xlu0 %2540
      %2542 = vrot.lane.b32.xlu0 %v216, 77
      %v2543 = vpop.permute.xlu0 %2542
      %2544 = vrot.lane.b32.xlu0 %v217, 77
      %v2545 = vpop.permute.xlu0 %2544
      %2546 = vrot.lane.b32.xlu0 %v218, 77
      %v2547 = vpop.permute.xlu0 %2546
      %2548 = vrot.lane.b32.xlu0 %v586, 77
      %v2549 = vpop.permute.xlu0 %2548
      %2550 = vrot.lane.b32.xlu0 %v220, 77
      %v2551 = vpop.permute.xlu0 %2550
      %2552 = vrot.lane.b32.xlu0 %v221, 77
      %v2553 = vpop.permute.xlu0 %2552
      %2554 = vrot.lane.b32.xlu0 %v222, 77
      %v2555 = vpop.permute.xlu0 %2554
      %vm2556 = vcmask 629760
      %v2557 = vsel %vm2556, %v2541, %v2543
      %v2558 = vsel %vm2556, %v2543, %v2545
      %v2559 = vsel %vm2556, %v2545, %v2547
      %v2560 = vsel %vm2556, %v2549, %v2551
      %v2561 = vsel %vm2556, %v2551, %v2553
      %v2562 = vsel %vm2556, %v2553, %v2555
      %v2572 = vsel %vm255, %v2539, 0
      %2574 = vmatprep.subr.bf16.mxu0 0
      %2575 = vmatpush1.bf16.msra.mxu0 0
      %2576 = vmatprep.subr.bf16.mxu0 0
      %2577 = vmatpush1.bf16.msra.mxu0 0
      %2578 = vmatprep.subr.bf16.mxu0 0
      %2579 = vmatpush1.bf16.msra.mxu0 0
      %2580 = vmatprep.subr.bf16.mxu0 0
      %2581 = vmatpush1.bf16.msra.mxu0 0
      %2582 = vmatprep.subr.bf16.mxu0 0
      %2583 = vmatpush1.bf16.msra.mxu0 0
      %2584 = vmatprep.subr.bf16.mxu0 0
      %2585 = vmatpush1.bf16.msra.mxu0 0
      %2586 = vmatprep.subr.bf16.mxu0 %v2561
      %2587 = vmatpush1.bf16.msra.mxu0 %v2560
      %2588 = vmatprep.subr.bf16.mxu0 %v2558
      %2589 = vmatpush1.bf16.msra.mxu0 %v2557
      %2590 = vmatprep.subr.bf16.mxu0 0
      %2591 = vmatpush2.bf16.msra.mxu0 0
      %2592 = vmatprep.subr.bf16.mxu0 0
      %2593 = vmatpush2.bf16.msra.mxu0 0
      %2594 = vmatprep.subr.bf16.mxu0 0
      %2595 = vmatpush2.bf16.msra.mxu0 0
      %2596 = vmatprep.subr.bf16.mxu0 0
      %2597 = vmatpush2.bf16.msra.mxu0 0
      %2598 = vmatprep.subr.bf16.mxu0 0
      %2599 = vmatpush2.bf16.msra.mxu0 0
      %2600 = vmatprep.subr.bf16.mxu0 0
      %2601 = vmatpush2.bf16.msra.mxu0 0
      %2602 = vmatprep.subr.bf16.mxu0 0
      %2603 = vmatpush2.bf16.msra.mxu0 0
      %2604 = vmatprep.subr.bf16.mxu0 0
      %2605 = vmatpush2.bf16.msra.mxu0 0
      %2606 = vmatprep.mubr.bf16.mxu0 0
      %2607 = vmatmul.mubr.bf16.gmra.mxu0 %v2572
      %v2608 = vpop.f32.mrf.mxu0
      %v2609 = vadd.f32 0.0, %v2608
      %v2610 = vpop.f32.mrf.mxu0
      %v2611 = vadd.f32 0.0, %v2610
      %v2612 = vpop.f32.mrf.mxu0
      %v2613 = vpop.f32.mrf.mxu0
      %2614 = vdwg.mxu0
      %2615 = vmatprep.subr.bf16.mxu0 0
      %2616 = vmatpush1.bf16.msra.mxu0 0
      %2617 = vmatprep.subr.bf16.mxu0 0
      %2618 = vmatpush1.bf16.msra.mxu0 0
      %2619 = vmatprep.subr.bf16.mxu0 0
      %2620 = vmatpush1.bf16.msra.mxu0 0
      %2621 = vmatprep.subr.bf16.mxu0 0
      %2622 = vmatpush1.bf16.msra.mxu0 0
      %2623 = vmatprep.subr.bf16.mxu0 0
      %2624 = vmatpush1.bf16.msra.mxu0 0
      %2625 = vmatprep.subr.bf16.mxu0 0
      %2626 = vmatpush1.bf16.msra.mxu0 0
      %2627 = vmatprep.subr.bf16.mxu0 %v2555
      %2628 = vmatpush1.bf16.msra.mxu0 %v2562
      %2629 = vmatprep.subr.bf16.mxu0 %v2547
      %2630 = vmatpush1.bf16.msra.mxu0 %v2559
      %2631 = vmatprep.subr.bf16.mxu0 0
      %2632 = vmatpush2.bf16.msra.mxu0 0
      %2633 = vmatprep.subr.bf16.mxu0 0
      %2634 = vmatpush2.bf16.msra.mxu0 0
      %2635 = vmatprep.subr.bf16.mxu0 0
      %2636 = vmatpush2.bf16.msra.mxu0 0
      %2637 = vmatprep.subr.bf16.mxu0 0
      %2638 = vmatpush2.bf16.msra.mxu0 0
      %2639 = vmatprep.subr.bf16.mxu0 0
      %2640 = vmatpush2.bf16.msra.mxu0 0
      %2641 = vmatprep.subr.bf16.mxu0 0
      %2642 = vmatpush2.bf16.msra.mxu0 0
      %2643 = vmatprep.subr.bf16.mxu0 0
      %2644 = vmatpush2.bf16.msra.mxu0 0
      %2645 = vmatprep.subr.bf16.mxu0 0
      %2646 = vmatpush2.bf16.msra.mxu0 0
      %2647 = vmatprep.mubr.bf16.mxu0 0
      %2648 = vmatmul.mubr.bf16.gmra.mxu0 %v2572
      %v2649 = vpop.f32.mrf.mxu0
      %v2650 = vadd.f32 0.0, %v2649
      %v2651 = vpop.f32.mrf.mxu0
      %v2652 = vadd.f32 0.0, %v2651
      %v2653 = vpop.f32.mrf.mxu0
      %v2654 = vpop.f32.mrf.mxu0
      %2655 = vdwg.mxu0
      %v2656 = vadd.f32 %v2534, %v2609
      %v2657 = vadd.f32 %v2535, %v2611
      %v2658 = vadd.f32 %v2536, %v2650
      %v2659 = vadd.f32 %v2537, %v2652
      %s2660 = scalar_lea.vmem %s1, 80
      %v2661 = vld [vmem:[%s2660] sm:$0xf]
      %2662 = vrot.lane.b32.xlu0 %v585, 80
      %v2663 = vpop.permute.xlu0 %2662
      %2664 = vrot.lane.b32.xlu0 %v216, 80
      %v2665 = vpop.permute.xlu0 %2664
      %2666 = vrot.lane.b32.xlu0 %v217, 80
      %v2667 = vpop.permute.xlu0 %2666
      %2668 = vrot.lane.b32.xlu0 %v218, 80
      %v2669 = vpop.permute.xlu0 %2668
      %2670 = vrot.lane.b32.xlu0 %v586, 80
      %v2671 = vpop.permute.xlu0 %2670
      %2672 = vrot.lane.b32.xlu0 %v220, 80
      %v2673 = vpop.permute.xlu0 %2672
      %2674 = vrot.lane.b32.xlu0 %v221, 80
      %v2675 = vpop.permute.xlu0 %2674
      %2676 = vrot.lane.b32.xlu0 %v222, 80
      %v2677 = vpop.permute.xlu0 %2676
      %vm2678 = vcmask 654336
      %v2679 = vsel %vm2678, %v2663, %v2665
      %v2680 = vsel %vm2678, %v2665, %v2667
      %v2681 = vsel %vm2678, %v2667, %v2669
      %v2682 = vsel %vm2678, %v2671, %v2673
      %v2683 = vsel %vm2678, %v2673, %v2675
      %v2684 = vsel %vm2678, %v2675, %v2677
      %v2694 = vsel %vm255, %v2661, 0
      %2696 = vmatprep.subr.bf16.mxu0 0
      %2697 = vmatpush1.bf16.msra.mxu0 0
      %2698 = vmatprep.subr.bf16.mxu0 0
      %2699 = vmatpush1.bf16.msra.mxu0 0
      %2700 = vmatprep.subr.bf16.mxu0 0
      %2701 = vmatpush1.bf16.msra.mxu0 0
      %2702 = vmatprep.subr.bf16.mxu0 0
      %2703 = vmatpush1.bf16.msra.mxu0 0
      %2704 = vmatprep.subr.bf16.mxu0 0
      %2705 = vmatpush1.bf16.msra.mxu0 0
      %2706 = vmatprep.subr.bf16.mxu0 0
      %2707 = vmatpush1.bf16.msra.mxu0 0
      %2708 = vmatprep.subr.bf16.mxu0 %v2683
      %2709 = vmatpush1.bf16.msra.mxu0 %v2682
      %2710 = vmatprep.subr.bf16.mxu0 %v2680
      %2711 = vmatpush1.bf16.msra.mxu0 %v2679
      %2712 = vmatprep.subr.bf16.mxu0 0
      %2713 = vmatpush2.bf16.msra.mxu0 0
      %2714 = vmatprep.subr.bf16.mxu0 0
      %2715 = vmatpush2.bf16.msra.mxu0 0
      %2716 = vmatprep.subr.bf16.mxu0 0
      %2717 = vmatpush2.bf16.msra.mxu0 0
      %2718 = vmatprep.subr.bf16.mxu0 0
      %2719 = vmatpush2.bf16.msra.mxu0 0
      %2720 = vmatprep.subr.bf16.mxu0 0
      %2721 = vmatpush2.bf16.msra.mxu0 0
      %2722 = vmatprep.subr.bf16.mxu0 0
      %2723 = vmatpush2.bf16.msra.mxu0 0
      %2724 = vmatprep.subr.bf16.mxu0 0
      %2725 = vmatpush2.bf16.msra.mxu0 0
      %2726 = vmatprep.subr.bf16.mxu0 0
      %2727 = vmatpush2.bf16.msra.mxu0 0
      %2728 = vmatprep.mubr.bf16.mxu0 0
      %2729 = vmatmul.mubr.bf16.gmra.mxu0 %v2694
      %v2730 = vpop.f32.mrf.mxu0
      %v2731 = vadd.f32 0.0, %v2730
      %v2732 = vpop.f32.mrf.mxu0
      %v2733 = vadd.f32 0.0, %v2732
      %v2734 = vpop.f32.mrf.mxu0
      %v2735 = vpop.f32.mrf.mxu0
      %2736 = vdwg.mxu0
      %2737 = vmatprep.subr.bf16.mxu0 0
      %2738 = vmatpush1.bf16.msra.mxu0 0
      %2739 = vmatprep.subr.bf16.mxu0 0
      %2740 = vmatpush1.bf16.msra.mxu0 0
      %2741 = vmatprep.subr.bf16.mxu0 0
      %2742 = vmatpush1.bf16.msra.mxu0 0
      %2743 = vmatprep.subr.bf16.mxu0 0
      %2744 = vmatpush1.bf16.msra.mxu0 0
      %2745 = vmatprep.subr.bf16.mxu0 0
      %2746 = vmatpush1.bf16.msra.mxu0 0
      %2747 = vmatprep.subr.bf16.mxu0 0
      %2748 = vmatpush1.bf16.msra.mxu0 0
      %2749 = vmatprep.subr.bf16.mxu0 %v2677
      %2750 = vmatpush1.bf16.msra.mxu0 %v2684
      %2751 = vmatprep.subr.bf16.mxu0 %v2669
      %2752 = vmatpush1.bf16.msra.mxu0 %v2681
      %2753 = vmatprep.subr.bf16.mxu0 0
      %2754 = vmatpush2.bf16.msra.mxu0 0
      %2755 = vmatprep.subr.bf16.mxu0 0
      %2756 = vmatpush2.bf16.msra.mxu0 0
      %2757 = vmatprep.subr.bf16.mxu0 0
      %2758 = vmatpush2.bf16.msra.mxu0 0
      %2759 = vmatprep.subr.bf16.mxu0 0
      %2760 = vmatpush2.bf16.msra.mxu0 0
      %2761 = vmatprep.subr.bf16.mxu0 0
      %2762 = vmatpush2.bf16.msra.mxu0 0
      %2763 = vmatprep.subr.bf16.mxu0 0
      %2764 = vmatpush2.bf16.msra.mxu0 0
      %2765 = vmatprep.subr.bf16.mxu0 0
      %2766 = vmatpush2.bf16.msra.mxu0 0
      %2767 = vmatprep.subr.bf16.mxu0 0
      %2768 = vmatpush2.bf16.msra.mxu0 0
      %2769 = vmatprep.mubr.bf16.mxu0 0
      %2770 = vmatmul.mubr.bf16.gmra.mxu0 %v2694
      %v2771 = vpop.f32.mrf.mxu0
      %v2772 = vadd.f32 0.0, %v2771
      %v2773 = vpop.f32.mrf.mxu0
      %v2774 = vadd.f32 0.0, %v2773
      %v2775 = vpop.f32.mrf.mxu0
      %v2776 = vpop.f32.mrf.mxu0
      %2777 = vdwg.mxu0
      %v2778 = vadd.f32 %v2656, %v2731
      %v2779 = vadd.f32 %v2657, %v2733
      %v2780 = vadd.f32 %v2658, %v2772
      %v2781 = vadd.f32 %v2659, %v2774
      %v2782 = vadd.f32 %v2778, %v1297
      %v2783 = vadd.f32 %v2779, %v1297
      %v2784 = vadd.f32 %v2780, %v1297
      %v2785 = vadd.f32 %v2781, %v1297
      %2786 = vst [vmem:[%s170 + $0x40] sm:$0xff] %v2782
      %2787 = vst [vmem:[%s170 + $0x48] sm:$0xff] %v2783
      %2788 = vst [vmem:[%s170 + $0x50] sm:$0xff] %v2784
      %2789 = vst.msk [vmem:[%s170 + $0x58] sm:$0xff] %vm1306, %v2785
      %s2790 = scalar_lea.vmem %s1, 84
      %v2791 = vld [vmem:[%s2790] sm:$0xf]
      %s2792 = scalar_lea.vmem %s1, 88
      %v2793 = vld [vmem:[%s2792] sm:$0xf]
      %2794 = vrot.lane.b32.xlu0 %v585, 6
      %v2795 = vpop.permute.xlu0 %2794
      %2796 = vrot.lane.b32.xlu0 %v216, 6
      %v2797 = vpop.permute.xlu0 %2796
      %2798 = vrot.lane.b32.xlu0 %v217, 6
      %v2799 = vpop.permute.xlu0 %2798
      %2800 = vrot.lane.b32.xlu0 %v218, 6
      %v2801 = vpop.permute.xlu0 %2800
      %2802 = vrot.lane.b32.xlu0 %v219, 6
      %v2803 = vpop.permute.xlu0 %2802
      %2804 = vrot.lane.b32.xlu0 %v586, 6
      %v2805 = vpop.permute.xlu0 %2804
      %2806 = vrot.lane.b32.xlu0 %v220, 6
      %v2807 = vpop.permute.xlu0 %2806
      %2808 = vrot.lane.b32.xlu0 %v221, 6
      %v2809 = vpop.permute.xlu0 %2808
      %2810 = vrot.lane.b32.xlu0 %v222, 6
      %v2811 = vpop.permute.xlu0 %2810
      %2812 = vrot.lane.b32.xlu0 %v223, 6
      %v2813 = vpop.permute.xlu0 %2812
      %vm2814 = vcmask 48128
      %v2815 = vsel %vm2814, %v2795, %v2797
      %v2816 = vsel %vm2814, %v2797, %v2799
      %v2817 = vsel %vm2814, %v2799, %v2801
      %v2818 = vsel %vm2814, %v2801, %v2803
      %v2819 = vsel %vm2814, %v2805, %v2807
      %v2820 = vsel %vm2814, %v2807, %v2809
      %v2821 = vsel %vm2814, %v2809, %v2811
      %v2822 = vsel %vm2814, %v2811, %v2813
      %v2832 = vsel %vm255, %v2793, 0
      %2834 = vmatprep.subr.bf16.mxu0 0
      %2835 = vmatpush1.bf16.msra.mxu0 0
      %2836 = vmatprep.subr.bf16.mxu0 0
      %2837 = vmatpush1.bf16.msra.mxu0 0
      %2838 = vmatprep.subr.bf16.mxu0 0
      %2839 = vmatpush1.bf16.msra.mxu0 0
      %2840 = vmatprep.subr.bf16.mxu0 0
      %2841 = vmatpush1.bf16.msra.mxu0 0
      %2842 = vmatprep.subr.bf16.mxu0 0
      %2843 = vmatpush1.bf16.msra.mxu0 0
      %2844 = vmatprep.subr.bf16.mxu0 0
      %2845 = vmatpush1.bf16.msra.mxu0 0
      %2846 = vmatprep.subr.bf16.mxu0 %v2820
      %2847 = vmatpush1.bf16.msra.mxu0 %v2819
      %2848 = vmatprep.subr.bf16.mxu0 %v2816
      %2849 = vmatpush1.bf16.msra.mxu0 %v2815
      %2850 = vmatprep.subr.bf16.mxu0 0
      %2851 = vmatpush2.bf16.msra.mxu0 0
      %2852 = vmatprep.subr.bf16.mxu0 0
      %2853 = vmatpush2.bf16.msra.mxu0 0
      %2854 = vmatprep.subr.bf16.mxu0 0
      %2855 = vmatpush2.bf16.msra.mxu0 0
      %2856 = vmatprep.subr.bf16.mxu0 0
      %2857 = vmatpush2.bf16.msra.mxu0 0
      %2858 = vmatprep.subr.bf16.mxu0 0
      %2859 = vmatpush2.bf16.msra.mxu0 0
      %2860 = vmatprep.subr.bf16.mxu0 0
      %2861 = vmatpush2.bf16.msra.mxu0 0
      %2862 = vmatprep.subr.bf16.mxu0 0
      %2863 = vmatpush2.bf16.msra.mxu0 0
      %2864 = vmatprep.subr.bf16.mxu0 0
      %2865 = vmatpush2.bf16.msra.mxu0 0
      %2866 = vmatprep.mubr.bf16.mxu0 0
      %2867 = vmatmul.mubr.bf16.gmra.mxu0 %v2832
      %v2868 = vpop.f32.mrf.mxu0
      %v2869 = vadd.f32 0.0, %v2868
      %v2870 = vpop.f32.mrf.mxu0
      %v2871 = vadd.f32 0.0, %v2870
      %v2872 = vpop.f32.mrf.mxu0
      %v2873 = vpop.f32.mrf.mxu0
      %2874 = vdwg.mxu0
      %2875 = vmatprep.subr.bf16.mxu0 0
      %2876 = vmatpush1.bf16.msra.mxu0 0
      %2877 = vmatprep.subr.bf16.mxu0 0
      %2878 = vmatpush1.bf16.msra.mxu0 0
      %2879 = vmatprep.subr.bf16.mxu0 0
      %2880 = vmatpush1.bf16.msra.mxu0 0
      %2881 = vmatprep.subr.bf16.mxu0 0
      %2882 = vmatpush1.bf16.msra.mxu0 0
      %2883 = vmatprep.subr.bf16.mxu0 0
      %2884 = vmatpush1.bf16.msra.mxu0 0
      %2885 = vmatprep.subr.bf16.mxu0 0
      %2886 = vmatpush1.bf16.msra.mxu0 0
      %2887 = vmatprep.subr.bf16.mxu0 %v2822
      %2888 = vmatpush1.bf16.msra.mxu0 %v2821
      %2889 = vmatprep.subr.bf16.mxu0 %v2818
      %2890 = vmatpush1.bf16.msra.mxu0 %v2817
      %2891 = vmatprep.subr.bf16.mxu0 0
      %2892 = vmatpush2.bf16.msra.mxu0 0
      %2893 = vmatprep.subr.bf16.mxu0 0
      %2894 = vmatpush2.bf16.msra.mxu0 0
      %2895 = vmatprep.subr.bf16.mxu0 0
      %2896 = vmatpush2.bf16.msra.mxu0 0
      %2897 = vmatprep.subr.bf16.mxu0 0
      %2898 = vmatpush2.bf16.msra.mxu0 0
      %2899 = vmatprep.subr.bf16.mxu0 0
      %2900 = vmatpush2.bf16.msra.mxu0 0
      %2901 = vmatprep.subr.bf16.mxu0 0
      %2902 = vmatpush2.bf16.msra.mxu0 0
      %2903 = vmatprep.subr.bf16.mxu0 0
      %2904 = vmatpush2.bf16.msra.mxu0 0
      %2905 = vmatprep.subr.bf16.mxu0 0
      %2906 = vmatpush2.bf16.msra.mxu0 0
      %2907 = vmatprep.mubr.bf16.mxu0 0
      %2908 = vmatmul.mubr.bf16.gmra.mxu0 %v2832
      %v2909 = vpop.f32.mrf.mxu0
      %v2910 = vadd.f32 0.0, %v2909
      %v2911 = vpop.f32.mrf.mxu0
      %v2912 = vadd.f32 0.0, %v2911
      %v2913 = vpop.f32.mrf.mxu0
      %v2914 = vpop.f32.mrf.mxu0
      %2915 = vdwg.mxu0
      %2916 = vrot.lane.b32.xlu0 %v585, 3
      %v2917 = vpop.permute.xlu0 %2916
      %2918 = vrot.lane.b32.xlu0 %v216, 3
      %v2919 = vpop.permute.xlu0 %2918
      %2920 = vrot.lane.b32.xlu0 %v217, 3
      %v2921 = vpop.permute.xlu0 %2920
      %2922 = vrot.lane.b32.xlu0 %v218, 3
      %v2923 = vpop.permute.xlu0 %2922
      %2924 = vrot.lane.b32.xlu0 %v219, 3
      %v2925 = vpop.permute.xlu0 %2924
      %2926 = vrot.lane.b32.xlu0 %v586, 3
      %v2927 = vpop.permute.xlu0 %2926
      %2928 = vrot.lane.b32.xlu0 %v220, 3
      %v2929 = vpop.permute.xlu0 %2928
      %2930 = vrot.lane.b32.xlu0 %v221, 3
      %v2931 = vpop.permute.xlu0 %2930
      %2932 = vrot.lane.b32.xlu0 %v222, 3
      %v2933 = vpop.permute.xlu0 %2932
      %2934 = vrot.lane.b32.xlu0 %v223, 3
      %v2935 = vpop.permute.xlu0 %2934
      %vm2936 = vcmask 23552
      %v2937 = vsel %vm2936, %v2917, %v2919
      %v2938 = vsel %vm2936, %v2919, %v2921
      %v2939 = vsel %vm2936, %v2921, %v2923
      %v2940 = vsel %vm2936, %v2923, %v2925
      %v2941 = vsel %vm2936, %v2927, %v2929
      %v2942 = vsel %vm2936, %v2929, %v2931
      %v2943 = vsel %vm2936, %v2931, %v2933
      %v2944 = vsel %vm2936, %v2933, %v2935
      %v2954 = vsel %vm255, %v2791, 0
      %2956 = vmatprep.subr.bf16.mxu0 0
      %2957 = vmatpush1.bf16.msra.mxu0 0
      %2958 = vmatprep.subr.bf16.mxu0 0
      %2959 = vmatpush1.bf16.msra.mxu0 0
      %2960 = vmatprep.subr.bf16.mxu0 0
      %2961 = vmatpush1.bf16.msra.mxu0 0
      %2962 = vmatprep.subr.bf16.mxu0 0
      %2963 = vmatpush1.bf16.msra.mxu0 0
      %2964 = vmatprep.subr.bf16.mxu0 0
      %2965 = vmatpush1.bf16.msra.mxu0 0
      %2966 = vmatprep.subr.bf16.mxu0 0
      %2967 = vmatpush1.bf16.msra.mxu0 0
      %2968 = vmatprep.subr.bf16.mxu0 %v2942
      %2969 = vmatpush1.bf16.msra.mxu0 %v2941
      %2970 = vmatprep.subr.bf16.mxu0 %v2938
      %2971 = vmatpush1.bf16.msra.mxu0 %v2937
      %2972 = vmatprep.subr.bf16.mxu0 0
      %2973 = vmatpush2.bf16.msra.mxu0 0
      %2974 = vmatprep.subr.bf16.mxu0 0
      %2975 = vmatpush2.bf16.msra.mxu0 0
      %2976 = vmatprep.subr.bf16.mxu0 0
      %2977 = vmatpush2.bf16.msra.mxu0 0
      %2978 = vmatprep.subr.bf16.mxu0 0
      %2979 = vmatpush2.bf16.msra.mxu0 0
      %2980 = vmatprep.subr.bf16.mxu0 0
      %2981 = vmatpush2.bf16.msra.mxu0 0
      %2982 = vmatprep.subr.bf16.mxu0 0
      %2983 = vmatpush2.bf16.msra.mxu0 0
      %2984 = vmatprep.subr.bf16.mxu0 0
      %2985 = vmatpush2.bf16.msra.mxu0 0
      %2986 = vmatprep.subr.bf16.mxu0 0
      %2987 = vmatpush2.bf16.msra.mxu0 0
      %2988 = vmatprep.mubr.bf16.mxu0 0
      %2989 = vmatmul.mubr.bf16.gmra.mxu0 %v2954
      %v2990 = vpop.f32.mrf.mxu0
      %v2991 = vadd.f32 %v2869, %v2990
      %v2992 = vpop.f32.mrf.mxu0
      %v2993 = vadd.f32 %v2871, %v2992
      %v2994 = vpop.f32.mrf.mxu0
      %v2995 = vpop.f32.mrf.mxu0
      %2996 = vdwg.mxu0
      %2997 = vmatprep.subr.bf16.mxu0 0
      %2998 = vmatpush1.bf16.msra.mxu0 0
      %2999 = vmatprep.subr.bf16.mxu0 0
      %3000 = vmatpush1.bf16.msra.mxu0 0
      %3001 = vmatprep.subr.bf16.mxu0 0
      %3002 = vmatpush1.bf16.msra.mxu0 0
      %3003 = vmatprep.subr.bf16.mxu0 0
      %3004 = vmatpush1.bf16.msra.mxu0 0
      %3005 = vmatprep.subr.bf16.mxu0 0
      %3006 = vmatpush1.bf16.msra.mxu0 0
      %3007 = vmatprep.subr.bf16.mxu0 0
      %3008 = vmatpush1.bf16.msra.mxu0 0
      %3009 = vmatprep.subr.bf16.mxu0 %v2944
      %3010 = vmatpush1.bf16.msra.mxu0 %v2943
      %3011 = vmatprep.subr.bf16.mxu0 %v2940
      %3012 = vmatpush1.bf16.msra.mxu0 %v2939
      %3013 = vmatprep.subr.bf16.mxu0 0
      %3014 = vmatpush2.bf16.msra.mxu0 0
      %3015 = vmatprep.subr.bf16.mxu0 0
      %3016 = vmatpush2.bf16.msra.mxu0 0
      %3017 = vmatprep.subr.bf16.mxu0 0
      %3018 = vmatpush2.bf16.msra.mxu0 0
      %3019 = vmatprep.subr.bf16.mxu0 0
      %3020 = vmatpush2.bf16.msra.mxu0 0
      %3021 = vmatprep.subr.bf16.mxu0 0
      %3022 = vmatpush2.bf16.msra.mxu0 0
      %3023 = vmatprep.subr.bf16.mxu0 0
      %3024 = vmatpush2.bf16.msra.mxu0 0
      %3025 = vmatprep.subr.bf16.mxu0 0
      %3026 = vmatpush2.bf16.msra.mxu0 0
      %3027 = vmatprep.subr.bf16.mxu0 0
      %3028 = vmatpush2.bf16.msra.mxu0 0
      %3029 = vmatprep.mubr.bf16.mxu0 0
      %3030 = vmatmul.mubr.bf16.gmra.mxu0 %v2954
      %v3031 = vpop.f32.mrf.mxu0
      %v3032 = vadd.f32 %v2910, %v3031
      %v3033 = vpop.f32.mrf.mxu0
      %v3034 = vadd.f32 %v2912, %v3033
      %v3035 = vpop.f32.mrf.mxu0
      %v3036 = vpop.f32.mrf.mxu0
      %3037 = vdwg.mxu0
      %s3038 = scalar_lea.vmem %s1, 92
      %v3039 = vld [vmem:[%s3038] sm:$0xf]
      %3040 = vrot.lane.b32.xlu0 %v585, 75
      %v3041 = vpop.permute.xlu0 %3040
      %3042 = vrot.lane.b32.xlu0 %v216, 75
      %v3043 = vpop.permute.xlu0 %3042
      %3044 = vrot.lane.b32.xlu0 %v217, 75
      %v3045 = vpop.permute.xlu0 %3044
      %3046 = vrot.lane.b32.xlu0 %v218, 75
      %v3047 = vpop.permute.xlu0 %3046
      %3048 = vrot.lane.b32.xlu0 %v586, 75
      %v3049 = vpop.permute.xlu0 %3048
      %3050 = vrot.lane.b32.xlu0 %v220, 75
      %v3051 = vpop.permute.xlu0 %3050
      %3052 = vrot.lane.b32.xlu0 %v221, 75
      %v3053 = vpop.permute.xlu0 %3052
      %3054 = vrot.lane.b32.xlu0 %v222, 75
      %v3055 = vpop.permute.xlu0 %3054
      %vm3056 = vcmask 613376
      %v3057 = vsel %vm3056, %v3041, %v3043
      %v3058 = vsel %vm3056, %v3043, %v3045
      %v3059 = vsel %vm3056, %v3045, %v3047
      %v3060 = vsel %vm3056, %v3049, %v3051
      %v3061 = vsel %vm3056, %v3051, %v3053
      %v3062 = vsel %vm3056, %v3053, %v3055
      %v3072 = vsel %vm255, %v3039, 0
      %3074 = vmatprep.subr.bf16.mxu0 0
      %3075 = vmatpush1.bf16.msra.mxu0 0
      %3076 = vmatprep.subr.bf16.mxu0 0
      %3077 = vmatpush1.bf16.msra.mxu0 0
      %3078 = vmatprep.subr.bf16.mxu0 0
      %3079 = vmatpush1.bf16.msra.mxu0 0
      %3080 = vmatprep.subr.bf16.mxu0 0
      %3081 = vmatpush1.bf16.msra.mxu0 0
      %3082 = vmatprep.subr.bf16.mxu0 0
      %3083 = vmatpush1.bf16.msra.mxu0 0
      %3084 = vmatprep.subr.bf16.mxu0 0
      %3085 = vmatpush1.bf16.msra.mxu0 0
      %3086 = vmatprep.subr.bf16.mxu0 %v3061
      %3087 = vmatpush1.bf16.msra.mxu0 %v3060
      %3088 = vmatprep.subr.bf16.mxu0 %v3058
      %3089 = vmatpush1.bf16.msra.mxu0 %v3057
      %3090 = vmatprep.subr.bf16.mxu0 0
      %3091 = vmatpush2.bf16.msra.mxu0 0
      %3092 = vmatprep.subr.bf16.mxu0 0
      %3093 = vmatpush2.bf16.msra.mxu0 0
      %3094 = vmatprep.subr.bf16.mxu0 0
      %3095 = vmatpush2.bf16.msra.mxu0 0
      %3096 = vmatprep.subr.bf16.mxu0 0
      %3097 = vmatpush2.bf16.msra.mxu0 0
      %3098 = vmatprep.subr.bf16.mxu0 0
      %3099 = vmatpush2.bf16.msra.mxu0 0
      %3100 = vmatprep.subr.bf16.mxu0 0
      %3101 = vmatpush2.bf16.msra.mxu0 0
      %3102 = vmatprep.subr.bf16.mxu0 0
      %3103 = vmatpush2.bf16.msra.mxu0 0
      %3104 = vmatprep.subr.bf16.mxu0 0
      %3105 = vmatpush2.bf16.msra.mxu0 0
      %3106 = vmatprep.mubr.bf16.mxu0 0
      %3107 = vmatmul.mubr.bf16.gmra.mxu0 %v3072
      %v3108 = vpop.f32.mrf.mxu0
      %v3109 = vadd.f32 0.0, %v3108
      %v3110 = vpop.f32.mrf.mxu0
      %v3111 = vadd.f32 0.0, %v3110
      %v3112 = vpop.f32.mrf.mxu0
      %v3113 = vpop.f32.mrf.mxu0
      %3114 = vdwg.mxu0
      %3115 = vmatprep.subr.bf16.mxu0 0
      %3116 = vmatpush1.bf16.msra.mxu0 0
      %3117 = vmatprep.subr.bf16.mxu0 0
      %3118 = vmatpush1.bf16.msra.mxu0 0
      %3119 = vmatprep.subr.bf16.mxu0 0
      %3120 = vmatpush1.bf16.msra.mxu0 0
      %3121 = vmatprep.subr.bf16.mxu0 0
      %3122 = vmatpush1.bf16.msra.mxu0 0
      %3123 = vmatprep.subr.bf16.mxu0 0
      %3124 = vmatpush1.bf16.msra.mxu0 0
      %3125 = vmatprep.subr.bf16.mxu0 0
      %3126 = vmatpush1.bf16.msra.mxu0 0
      %3127 = vmatprep.subr.bf16.mxu0 %v3055
      %3128 = vmatpush1.bf16.msra.mxu0 %v3062
      %3129 = vmatprep.subr.bf16.mxu0 %v3047
      %3130 = vmatpush1.bf16.msra.mxu0 %v3059
      %3131 = vmatprep.subr.bf16.mxu0 0
      %3132 = vmatpush2.bf16.msra.mxu0 0
      %3133 = vmatprep.subr.bf16.mxu0 0
      %3134 = vmatpush2.bf16.msra.mxu0 0
      %3135 = vmatprep.subr.bf16.mxu0 0
      %3136 = vmatpush2.bf16.msra.mxu0 0
      %3137 = vmatprep.subr.bf16.mxu0 0
      %3138 = vmatpush2.bf16.msra.mxu0 0
      %3139 = vmatprep.subr.bf16.mxu0 0
      %3140 = vmatpush2.bf16.msra.mxu0 0
      %3141 = vmatprep.subr.bf16.mxu0 0
      %3142 = vmatpush2.bf16.msra.mxu0 0
      %3143 = vmatprep.subr.bf16.mxu0 0
      %3144 = vmatpush2.bf16.msra.mxu0 0
      %3145 = vmatprep.subr.bf16.mxu0 0
      %3146 = vmatpush2.bf16.msra.mxu0 0
      %3147 = vmatprep.mubr.bf16.mxu0 0
      %3148 = vmatmul.mubr.bf16.gmra.mxu0 %v3072
      %v3149 = vpop.f32.mrf.mxu0
      %v3150 = vadd.f32 0.0, %v3149
      %v3151 = vpop.f32.mrf.mxu0
      %v3152 = vadd.f32 0.0, %v3151
      %v3153 = vpop.f32.mrf.mxu0
      %v3154 = vpop.f32.mrf.mxu0
      %3155 = vdwg.mxu0
      %v3156 = vadd.f32 %v2991, %v3109
      %v3157 = vadd.f32 %v2993, %v3111
      %v3158 = vadd.f32 %v3032, %v3150
      %v3159 = vadd.f32 %v3034, %v3152
      %s3160 = scalar_lea.vmem %s1, 96
      %v3161 = vld [vmem:[%s3160] sm:$0xf]
      %3162 = vrot.lane.b32.xlu0 %v585, 78
      %v3163 = vpop.permute.xlu0 %3162
      %3164 = vrot.lane.b32.xlu0 %v216, 78
      %v3165 = vpop.permute.xlu0 %3164
      %3166 = vrot.lane.b32.xlu0 %v217, 78
      %v3167 = vpop.permute.xlu0 %3166
      %3168 = vrot.lane.b32.xlu0 %v218, 78
      %v3169 = vpop.permute.xlu0 %3168
      %3170 = vrot.lane.b32.xlu0 %v586, 78
      %v3171 = vpop.permute.xlu0 %3170
      %3172 = vrot.lane.b32.xlu0 %v220, 78
      %v3173 = vpop.permute.xlu0 %3172
      %3174 = vrot.lane.b32.xlu0 %v221, 78
      %v3175 = vpop.permute.xlu0 %3174
      %3176 = vrot.lane.b32.xlu0 %v222, 78
      %v3177 = vpop.permute.xlu0 %3176
      %vm3178 = vcmask 637952
      %v3179 = vsel %vm3178, %v3163, %v3165
      %v3180 = vsel %vm3178, %v3165, %v3167
      %v3181 = vsel %vm3178, %v3167, %v3169
      %v3182 = vsel %vm3178, %v3171, %v3173
      %v3183 = vsel %vm3178, %v3173, %v3175
      %v3184 = vsel %vm3178, %v3175, %v3177
      %v3194 = vsel %vm255, %v3161, 0
      %3196 = vmatprep.subr.bf16.mxu0 0
      %3197 = vmatpush1.bf16.msra.mxu0 0
      %3198 = vmatprep.subr.bf16.mxu0 0
      %3199 = vmatpush1.bf16.msra.mxu0 0
      %3200 = vmatprep.subr.bf16.mxu0 0
      %3201 = vmatpush1.bf16.msra.mxu0 0
      %3202 = vmatprep.subr.bf16.mxu0 0
      %3203 = vmatpush1.bf16.msra.mxu0 0
      %3204 = vmatprep.subr.bf16.mxu0 0
      %3205 = vmatpush1.bf16.msra.mxu0 0
      %3206 = vmatprep.subr.bf16.mxu0 0
      %3207 = vmatpush1.bf16.msra.mxu0 0
      %3208 = vmatprep.subr.bf16.mxu0 %v3183
      %3209 = vmatpush1.bf16.msra.mxu0 %v3182
      %3210 = vmatprep.subr.bf16.mxu0 %v3180
      %3211 = vmatpush1.bf16.msra.mxu0 %v3179
      %3212 = vmatprep.subr.bf16.mxu0 0
      %3213 = vmatpush2.bf16.msra.mxu0 0
      %3214 = vmatprep.subr.bf16.mxu0 0
      %3215 = vmatpush2.bf16.msra.mxu0 0
      %3216 = vmatprep.subr.bf16.mxu0 0
      %3217 = vmatpush2.bf16.msra.mxu0 0
      %3218 = vmatprep.subr.bf16.mxu0 0
      %3219 = vmatpush2.bf16.msra.mxu0 0
      %3220 = vmatprep.subr.bf16.mxu0 0
      %3221 = vmatpush2.bf16.msra.mxu0 0
      %3222 = vmatprep.subr.bf16.mxu0 0
      %3223 = vmatpush2.bf16.msra.mxu0 0
      %3224 = vmatprep.subr.bf16.mxu0 0
      %3225 = vmatpush2.bf16.msra.mxu0 0
      %3226 = vmatprep.subr.bf16.mxu0 0
      %3227 = vmatpush2.bf16.msra.mxu0 0
      %3228 = vmatprep.mubr.bf16.mxu0 0
      %3229 = vmatmul.mubr.bf16.gmra.mxu0 %v3194
      %v3230 = vpop.f32.mrf.mxu0
      %v3231 = vadd.f32 0.0, %v3230
      %v3232 = vpop.f32.mrf.mxu0
      %v3233 = vadd.f32 0.0, %v3232
      %v3234 = vpop.f32.mrf.mxu0
      %v3235 = vpop.f32.mrf.mxu0
      %3236 = vdwg.mxu0
      %3237 = vmatprep.subr.bf16.mxu0 0
      %3238 = vmatpush1.bf16.msra.mxu0 0
      %3239 = vmatprep.subr.bf16.mxu0 0
      %3240 = vmatpush1.bf16.msra.mxu0 0
      %3241 = vmatprep.subr.bf16.mxu0 0
      %3242 = vmatpush1.bf16.msra.mxu0 0
      %3243 = vmatprep.subr.bf16.mxu0 0
      %3244 = vmatpush1.bf16.msra.mxu0 0
      %3245 = vmatprep.subr.bf16.mxu0 0
      %3246 = vmatpush1.bf16.msra.mxu0 0
      %3247 = vmatprep.subr.bf16.mxu0 0
      %3248 = vmatpush1.bf16.msra.mxu0 0
      %3249 = vmatprep.subr.bf16.mxu0 %v3177
      %3250 = vmatpush1.bf16.msra.mxu0 %v3184
      %3251 = vmatprep.subr.bf16.mxu0 %v3169
      %3252 = vmatpush1.bf16.msra.mxu0 %v3181
      %3253 = vmatprep.subr.bf16.mxu0 0
      %3254 = vmatpush2.bf16.msra.mxu0 0
      %3255 = vmatprep.subr.bf16.mxu0 0
      %3256 = vmatpush2.bf16.msra.mxu0 0
      %3257 = vmatprep.subr.bf16.mxu0 0
      %3258 = vmatpush2.bf16.msra.mxu0 0
      %3259 = vmatprep.subr.bf16.mxu0 0
      %3260 = vmatpush2.bf16.msra.mxu0 0
      %3261 = vmatprep.subr.bf16.mxu0 0
      %3262 = vmatpush2.bf16.msra.mxu0 0
      %3263 = vmatprep.subr.bf16.mxu0 0
      %3264 = vmatpush2.bf16.msra.mxu0 0
      %3265 = vmatprep.subr.bf16.mxu0 0
      %3266 = vmatpush2.bf16.msra.mxu0 0
      %3267 = vmatprep.subr.bf16.mxu0 0
      %3268 = vmatpush2.bf16.msra.mxu0 0
      %3269 = vmatprep.mubr.bf16.mxu0 0
      %3270 = vmatmul.mubr.bf16.gmra.mxu0 %v3194
      %v3271 = vpop.f32.mrf.mxu0
      %v3272 = vadd.f32 0.0, %v3271
      %v3273 = vpop.f32.mrf.mxu0
      %v3274 = vadd.f32 0.0, %v3273
      %v3275 = vpop.f32.mrf.mxu0
      %v3276 = vpop.f32.mrf.mxu0
      %3277 = vdwg.mxu0
      %v3278 = vadd.f32 %v3156, %v3231
      %v3279 = vadd.f32 %v3157, %v3233
      %v3280 = vadd.f32 %v3158, %v3272
      %v3281 = vadd.f32 %v3159, %v3274
      %v3282 = vadd.f32 %v3278, %v1297
      %v3283 = vadd.f32 %v3279, %v1297
      %v3284 = vadd.f32 %v3280, %v1297
      %v3285 = vadd.f32 %v3281, %v1297
      %3286 = vst [vmem:[%s170 + $0x60] sm:$0xff] %v3282
      %3287 = vst [vmem:[%s170 + $0x68] sm:$0xff] %v3283
      %3288 = vst [vmem:[%s170 + $0x70] sm:$0xff] %v3284
      %3289 = vst.msk [vmem:[%s170 + $0x78] sm:$0xff] %vm1306, %v3285
      %p3290 = scmp.lt.s32.totalorder %s14, 1
      %s3291 = scalar_select %p3290, %s14, 1
      %s3292 = smul.addr %s3291, 16
      %s3293 = smul.addr %s3292, 8
      %s3294 = scalar_lea.vmem %s3, %s3293
      // Predicated region
      $region33: #{decoder_block_forward.5} parent=31 // pred_check
        %p3295 = pneg %p100
      $region34: #{decoder_block_forward.5} parent=31 // pred_check_branch
        %3297 = sbr.rel (%p3295) target = $region36
      $region35: #{decoder_block_forward.5} parent=31 // pred_region
        _
      $region36: #{decoder_block_forward.5} parent=31 // pred_fallthru
        _
    $region32: #{decoder_block_forward.5} parent=5 // pred_fallthru
      _
    %p3298 = scmp.le.s32.totalorder 2, %s9
    // Predicated region
    $region37: #{decoder_block_forward.5} parent=5 // pred_check
      %p3299 = pneg %p3298
    $region38: #{decoder_block_forward.5} parent=5 // pred_check_branch
      %3301 = sbr.rel (%p3299) target = $region40
    $region39: #{decoder_block_forward.5} parent=5 // pred_region
      %s3302 = ssub.s32 %s9, 2
      // Predicated region
      $region41: #{decoder_block_forward.5} parent=39 // pred_check
        %p3303 = pneg %p106
      $region42: #{decoder_block_forward.5} parent=39 // pred_check_branch
        %3305 = sbr.rel (%p3303) target = $region44
      $region43: #{decoder_block_forward.5} parent=39 // pred_region
        %p3306 = scmp.lt.s32.totalorder %s15, 1
        %s3307 = scalar_select %p3306, %s15, 1
        %s3308 = smul.addr %s3307, 16
        %s3309 = smul.addr %s3308, 8
        %s3310 = scalar_lea.vmem %s3, %s3309
      $region44: #{decoder_block_forward.5} parent=39 // pred_fallthru
        _
    $region40: #{decoder_block_forward.5} parent=5 // pred_fallthru
      _
  $region6: #{decoder_block_forward.5} parent=0 // loop_footer
    %s13 = sadd.s32 1, %s9
  $region7: #{decoder_block_forward.5} parent=0 // loop_footer_branch
    %8 = sbr.rel target = $region3
  $region8: #{decoder_block_forward.5} parent=0 // loop_exit
    _

</llo_original>
